<compile_context>
chip_gen: v6e
topology: v6e:2x2x1
jax: 0.10.0
libtpu: 0.0.40
codegen_flags: <defaults>
</compile_context>

<pallas_src>
import functools

import jax
import jax.numpy as jnp
from jax.experimental import pallas as pl
from jax.experimental.pallas import tpu as pltpu

KS = 7                 # SpatialGate kernel size
PAD = (KS - 1) // 2    # = 3


def _pick_block_n(n, c, hw, itemsize):
    """Pick the batch block (divisor of N).

    Per-buffer budget ~4 MiB keeps x/out double-buffers + the f32 xg scratch
    comfortably inside every generation's default scoped VMEM.  We keep >= 2
    grid steps when N allows so dimension_semantics=("parallel",) can split
    the batch across TensorCores (v7x megacore); on single-TC v5e/v6e this
    costs only ~0.35us/step and production runs can pass block_n explicitly.
    """
    budget = 4 * 1024 * 1024
    per_elem = max(1, c * hw * max(int(itemsize), 4))
    bn = max(1, min(n, budget // per_elem))
    while bn > 1 and n % bn != 0:
        bn -= 1
    while bn > 1 and n // bn < 2:           # prefer >= 2 grid steps (megacore)
        bn -= 1
        while bn > 1 and n % bn != 0:
            bn -= 1
    return bn


def _cbam_kernel(bn_ref, w1t_ref, b1_ref, w2t_ref, b2_ref, wmask_ref,
                 x_ref, o_ref, xg_ref, *, shifts):
    # bn_ref    : (2,)            f32 SMEM  -- folded BatchNorm2d(1) [scale, shift]
    # w1t_ref   : (C, CH)         f32 VMEM  -- MLP W1^T
    # b1_ref    : (1, CH)         f32 VMEM  -- MLP layer-1 bias row
    # w2t_ref   : (CH, C)         f32 VMEM  -- MLP W2^T
    # b2_ref    : (1, C)          f32 VMEM  -- MLP layer-2 bias row
    # wmask_ref : (2, 49, HW)     f32 VMEM  -- masked 7x7 conv weights per flat pos
    # x_ref     : (nb, C, HW)     caller dtype VMEM (lane-dense batch block)
    # o_ref     : (nb, C, HW)     caller dtype VMEM
    # xg_ref    : (nb, C, HW)     f32 VMEM scratch (staged channel-refined feats)
    nb, C, HW = x_ref.shape

    def sigmoid(v):
        # exp runs on the EUP; the divide is exact (the approx reciprocal was
        # the source of the previous ~5e-3 mismatch).
        return 1.0 / (1.0 + jnp.exp(-v))

    xb = x_ref[...].astype(jnp.float32)                       # (nb, C, HW)

    # ---------------- ChannelGate: batched pools + MXU MLP ----------------
    avg = jnp.mean(xb, axis=2)                                # (nb, C) global avg pool
    mx = jnp.max(xb, axis=2)                                  # (nb, C) global max pool
    pooled = jnp.concatenate([avg, mx], axis=0)               # (2*nb, C)
    h = jnp.dot(pooled, w1t_ref[...],
                preferred_element_type=jnp.float32,
                precision=jax.lax.Precision.HIGHEST)          # (2*nb, CH)
    h = jnp.maximum(h + b1_ref[...], 0.0)                     # ReLU(Linear1)
    att = jnp.dot(h, w2t_ref[...],
                  preferred_element_type=jnp.float32,
                  precision=jax.lax.Precision.HIGHEST) + b2_ref[...]   # (2*nb, C)
    att = att[:nb] + att[nb:]                                 # avg path + max path
    xg_ref[...] = xb * sigmoid(att)[:, :, None]               # stage channel-refined feats

    # ---------------- SpatialGate: dense rolls + masked-weight table ------
    xg = xg_ref[...]                                          # (nb, C, HW) f32
    cmax = jnp.max(xg, axis=1)                                # (nb, HW) channel max
    cmean = jnp.mean(xg, axis=1)                              # (nb, HW) channel mean

    acc = jnp.zeros((nb, HW), jnp.float32)
    for t, shift in enumerate(shifts):                        # 49 static taps
        rm = pltpu.roll(cmax, shift, axis=1) if shift else cmax
        ra = pltpu.roll(cmean, shift, axis=1) if shift else cmean
        acc = acc + rm * wmask_ref[0, t:t + 1, :] + ra * wmask_ref[1, t:t + 1, :]

    gate = sigmoid(acc * bn_ref[0] + bn_ref[1])               # folded inference BN + sigmoid
    o_ref[...] = (xg_ref[...] * gate[:, None, :]).astype(o_ref.dtype)


def cbam(x, w1, b1, w2, b2, conv_w, bn_gamma, bn_beta, bn_mean, bn_var,
         eps=1e-5, block_n=None):
    """CBAM forward.  x: (N, C, H, W), any float dtype (I/O stays in x.dtype).
    ChannelGate MLP: w1 (C//r, C), b1 (C//r,), w2 (C, C//r), b2 (C,).
    SpatialGate: conv_w (1, 2, 7, 7), BatchNorm2d(1) params (1,) each."""
    N, C, H, W = x.shape
    HW = H * W
    CH = w1.shape[0]

    x_flat = x.reshape(N, C, HW)                              # lane-dense view, caller dtype
    w1t = jnp.asarray(w1, jnp.float32).T                      # (C, CH)
    w2t = jnp.asarray(w2, jnp.float32).T                      # (CH, C)
    b1r = jnp.asarray(b1, jnp.float32).reshape(1, CH)
    b2r = jnp.asarray(b2, jnp.float32).reshape(1, C)

    scale = bn_gamma / jnp.sqrt(bn_var + eps)                 # fold inference BN
    shift = bn_beta - bn_mean * scale
    bn2 = jnp.concatenate([scale, shift]).astype(jnp.float32)     # (2,) -> SMEM

    # Host-precomputed masked-weight table:
    #   wmask[ch, t, p] = conv_w[0, ch, dr, dc] if tap (dr, dc) applied at flat
    #   position p stays inside the HxW image, else 0.  Tap order matches `shifts`.
    pos = jnp.arange(HW)
    rr = pos // W
    cc = pos % W
    masks, shifts = [], []
    for dr in range(-PAD, PAD + 1):
        for dc in range(-PAD, PAD + 1):
            ok = (rr + dr >= 0) & (rr + dr < H) & (cc + dc >= 0) & (cc + dc < W)
            masks.append(ok.astype(jnp.float32))
            shifts.append((-(dr * W + dc)) % HW)
    mask = jnp.stack(masks, axis=0)                           # (49, HW)
    taps = jnp.asarray(conv_w, jnp.float32).reshape(2, KS * KS)   # (2, 49)
    wmask = taps[:, :, None] * mask[None, :, :]               # (2, 49, HW)

    if block_n is None:
        block_n = _pick_block_n(N, C, HW, jnp.dtype(x.dtype).itemsize)
    assert N % block_n == 0
    grid = (N // block_n,)

    kernel = functools.partial(_cbam_kernel, shifts=tuple(shifts))

    out = pl.pallas_call(
        kernel,
        out_shape=jax.ShapeDtypeStruct((N, C, HW), x.dtype),
        grid=grid,
        in_specs=[
            pl.BlockSpec(memory_space=pltpu.MemorySpace.SMEM),       # folded BN [scale, shift]
            pl.BlockSpec((C, CH), lambda n: (0, 0)),                 # W1^T
            pl.BlockSpec((1, CH), lambda n: (0, 0)),                 # b1 row
            pl.BlockSpec((CH, C), lambda n: (0, 0)),                 # W2^T
            pl.BlockSpec((1, C), lambda n: (0, 0)),                  # b2 row
            pl.BlockSpec((2, KS * KS, HW), lambda n: (0, 0, 0)),     # masked conv weights
            pl.BlockSpec((block_n, C, HW), lambda n: (n, 0, 0)),     # x (lane-dense)
        ],
        out_specs=pl.BlockSpec((block_n, C, HW), lambda n: (n, 0, 0)),
        scratch_shapes=[pltpu.VMEM((block_n, C, HW), jnp.float32)],  # staged xg
        compiler_params=pltpu.CompilerParams(
            dimension_semantics=("parallel",)),                      # batch splits across TCs
        # For production shapes (large C*HW) also tile C and raise
        # vmem_limit_bytes; not needed at these block sizes.
    )(bn2, w1t, b1r, w2t, b2r, wmask, x_flat)

    return out.reshape(N, C, H, W)


def cbam_ref(x, w1, b1, w2, b2, conv_w, bn_gamma, bn_beta, bn_mean, bn_var, eps=1e-5):
    """Pure-JAX reference of the PyTorch CBAM forward (inference-mode BN)."""
    avg = jnp.mean(x, axis=(2, 3))                            # (N, C)
    mx = jnp.max(x, axis=(2, 3))                              # (N, C)

    def mlp(v):
        h = jnp.maximum(v @ w1.T + b1, 0.0)
        return h @ w2.T + b2

    att = mlp(avg) + mlp(mx)                                  # (N, C)
    xg = x * jax.nn.sigmoid(att)[:, :, None, None]            # ChannelGate

    cm = jnp.max(xg, axis=1, keepdims=True)
    ca = jnp.mean(xg, axis=1, keepdims=True)
    comp = jnp.concatenate([cm, ca], axis=1)                  # (N, 2, H, W)
    conv = jax.lax.conv_general_dilated(
        comp, conv_w, window_strides=(1, 1), padding=[(PAD, PAD), (PAD, PAD)],
        dimension_numbers=("NCHW", "OIHW", "NCHW"))           # (N, 1, H, W)
    g = bn_gamma.reshape(1, 1, 1, 1)
    b = bn_beta.reshape(1, 1, 1, 1)
    m = bn_mean.reshape(1, 1, 1, 1)
    v = bn_var.reshape(1, 1, 1, 1)
    y = (conv - m) / jnp.sqrt(v + eps) * g + b
    return xg * jax.nn.sigmoid(y)                             # SpatialGate


if __name__ == "__main__":
    key = jax.random.PRNGKey(0)
    kx, k1, k2, k3, k4, k5 = jax.random.split(key, 6)

    # gate_channels=32, reduction_ratio=16 -> MLP hidden = 2
    N, C, H, W = 2, 32, 16, 16
    R = 16
    CH = C // R

    x = jax.random.normal(kx, (N, C, H, W), dtype=jnp.float32)
    w1 = jax.random.normal(k1, (CH, C), dtype=jnp.float32) * 0.2     # Linear(C, C//R)
    b1 = jax.random.normal(k2, (CH,), dtype=jnp.float32) * 0.1
    w2 = jax.random.normal(k3, (C, CH), dtype=jnp.float32) * 0.2     # Linear(C//R, C)
    b2 = jax.random.normal(k4, (C,), dtype=jnp.float32) * 0.1
    conv_w = jax.random.normal(k5, (1, 2, KS, KS), dtype=jnp.float32) * 0.1
    bn_gamma = jnp.array([1.3], jnp.float32)
    bn_beta = jnp.array([-0.2], jnp.float32)
    bn_mean = jnp.array([0.1], jnp.float32)
    bn_var = jnp.array([0.8], jnp.float32)

    out = cbam(x, w1, b1, w2, b2, conv_w, bn_gamma, bn_beta, bn_mean, bn_var)
    out = jax.block_until_ready(out)

    ref = cbam_ref(x, w1, b1, w2, b2, conv_w, bn_gamma, bn_beta, bn_mean, bn_var)
    assert out.shape == (N, C, H, W)
    err = float(jnp.max(jnp.abs(out - ref)))
    assert jnp.allclose(out, ref, atol=1e-3, rtol=1e-3), \
        f"mismatch vs reference (max abs err {err})"

    print("KERNEL_OK")
</pallas_src>

<mosaic_0001>
module attributes {stable_mosaic.version = 11 : i64} {
  func.func @_cbam_kernel(%arg0: i32, %arg1: memref<2xf32, #tpu.memory_space<smem>>, %arg2: memref<32x2xf32, #tpu.memory_space<vmem>>, %arg3: memref<1x2xf32, #tpu.memory_space<vmem>>, %arg4: memref<2x32xf32, #tpu.memory_space<vmem>>, %arg5: memref<1x32xf32, #tpu.memory_space<vmem>>, %arg6: memref<2x49x256xf32, #tpu.memory_space<vmem>>, %arg7: memref<1x32x256xf32, #tpu.memory_space<vmem>>, %arg8: memref<1x32x256xf32, #tpu.memory_space<vmem>>, %arg9: memref<1x32x256xf32, #tpu.memory_space<vmem>>) attributes {dimension_semantics = [#tpu.dimension_semantics<parallel>], iteration_bounds = array<i64: 2>, scalar_prefetch = 0 : i64, scratch_operands = 1 : i64, tpu.core_type = #tpu.core_type<tc>, window_params = [{transform_indices = @transform_0, window_bounds = array<i64: 2>}, {pipeline_mode = #tpu.pipeline_mode<synchronous>, transform_indices = @transform_1, window_bounds = array<i64: 32, 2>}, {pipeline_mode = #tpu.pipeline_mode<synchronous>, transform_indices = @transform_2, window_bounds = array<i64: 1, 2>}, {pipeline_mode = #tpu.pipeline_mode<synchronous>, transform_indices = @transform_3, window_bounds = array<i64: 2, 32>}, {pipeline_mode = #tpu.pipeline_mode<synchronous>, transform_indices = @transform_4, window_bounds = array<i64: 1, 32>}, {pipeline_mode = #tpu.pipeline_mode<synchronous>, transform_indices = @transform_5, window_bounds = array<i64: 2, 49, 256>}, {transform_indices = @transform_6, window_bounds = array<i64: 1, 32, 256>}, {transform_indices = @transform_7, window_bounds = array<i64: 1, 32, 256>}]} {
    %c0 = arith.constant 0 : index
    %c0_0 = arith.constant 0 : index
    %c0_1 = arith.constant 0 : index
    %0 = vector.load %arg7[%c0, %c0_0, %c0_1] : memref<1x32x256xf32, #tpu.memory_space<vmem>>, vector<1x32x256xf32>
    %cst = arith.constant dense<0.000000e+00> : vector<1x32xf32>
    %1 = vector.multi_reduction <add>, %0, %cst [2] : vector<1x32x256xf32> to vector<1x32xf32>
    %cst_2 = arith.constant 2.560000e+02 : f32
    %2 = vector.broadcast %cst_2 : f32 to vector<1x32xf32>
    %3 = arith.divf %1, %2 : vector<1x32xf32>
    %cst_3 = arith.constant dense<0xFF800000> : vector<1x32xf32>
    %4 = vector.multi_reduction <maximumf>, %0, %cst_3 [2] : vector<1x32x256xf32> to vector<1x32xf32>
    %5 = tpu.concatenate %3, %4 in 0 : vector<1x32xf32>, vector<1x32xf32> -> vector<2x32xf32>
    %c0_4 = arith.constant 0 : index
    %c0_5 = arith.constant 0 : index
    %6 = vector.load %arg2[%c0_4, %c0_5] : memref<32x2xf32, #tpu.memory_space<vmem>>, vector<32x2xf32>
    %cst_6 = arith.constant dense<0.000000e+00> : vector<2x2xf32>
    %7 = tpu.matmul %5, %6, %cst_6 {dimension_numbers = #tpu.dot_dimension_numbers<[1], [0], [0], [1], [0, 0, 1, 1], [], []>, precision = #tpu.contract_precision<fp32>} : vector<2x32xf32>, vector<32x2xf32>, vector<2x2xf32> -> vector<2x2xf32>
    %c0_7 = arith.constant 0 : index
    %c0_8 = arith.constant 0 : index
    %8 = vector.load %arg3[%c0_7, %c0_8] : memref<1x2xf32, #tpu.memory_space<vmem>>, vector<1x2xf32>
    %9 = vector.broadcast %8 : vector<1x2xf32> to vector<2x2xf32>
    %10 = arith.addf %7, %9 : vector<2x2xf32>
    %cst_9 = arith.constant 0.000000e+00 : f32
    %11 = vector.broadcast %cst_9 : f32 to vector<2x2xf32>
    %12 = arith.maximumf %10, %11 : vector<2x2xf32>
    %c0_10 = arith.constant 0 : index
    %c0_11 = arith.constant 0 : index
    %13 = vector.load %arg4[%c0_10, %c0_11] : memref<2x32xf32, #tpu.memory_space<vmem>>, vector<2x32xf32>
    %cst_12 = arith.constant dense<0.000000e+00> : vector<2x32xf32>
    %14 = tpu.matmul %12, %13, %cst_12 {dimension_numbers = #tpu.dot_dimension_numbers<[1], [0], [0], [1], [0, 0, 1, 1], [], []>, precision = #tpu.contract_precision<fp32>} : vector<2x2xf32>, vector<2x32xf32>, vector<2x32xf32> -> vector<2x32xf32>
    %c0_13 = arith.constant 0 : index
    %c0_14 = arith.constant 0 : index
    %15 = vector.load %arg5[%c0_13, %c0_14] : memref<1x32xf32, #tpu.memory_space<vmem>>, vector<1x32xf32>
    %16 = vector.broadcast %15 : vector<1x32xf32> to vector<2x32xf32>
    %17 = arith.addf %14, %16 : vector<2x32xf32>
    %18 = vector.extract_strided_slice %17 {offsets = [0, 0], sizes = [1, 32], strides = [1, 1]} : vector<2x32xf32> to vector<1x32xf32>
    %19 = vector.extract_strided_slice %17 {offsets = [1, 0], sizes = [1, 32], strides = [1, 1]} : vector<2x32xf32> to vector<1x32xf32>
    %20 = arith.addf %18, %19 : vector<1x32xf32>
    %cst_15 = arith.constant 0.000000e+00 : f32
    %21 = vector.broadcast %cst_15 : f32 to vector<1x32xf32>
    %22 = arith.subf %21, %20 : vector<1x32xf32>
    %23 = math.exp %22 : vector<1x32xf32>
    %cst_16 = arith.constant 1.000000e+00 : f32
    %24 = vector.broadcast %cst_16 : f32 to vector<1x32xf32>
    %25 = arith.addf %24, %23 : vector<1x32xf32>
    %cst_17 = arith.constant 1.000000e+00 : f32
    %26 = vector.broadcast %cst_17 : f32 to vector<1x32xf32>
    %27 = arith.divf %26, %25 : vector<1x32xf32>
    %28 = vector.shape_cast %27 : vector<1x32xf32> to vector<1x32x1xf32>
    %29 = vector.broadcast %28 : vector<1x32x1xf32> to vector<1x32x256xf32>
    %30 = arith.mulf %0, %29 : vector<1x32x256xf32>
    %c0_18 = arith.constant 0 : index
    %c0_19 = arith.constant 0 : index
    %c0_20 = arith.constant 0 : index
    %31 = vector.load %arg9[%c0_18, %c0_19, %c0_20] : memref<1x32x256xf32, #tpu.memory_space<vmem>>, vector<1x32x256xf32>
    tpu.vector_store %arg9[%c0_18, %c0_19, %c0_20], %30 {strides = array<i32>} : memref<1x32x256xf32, #tpu.memory_space<vmem>>, vector<1x32x256xf32>,
    %c0_21 = arith.constant 0 : index
    %c0_22 = arith.constant 0 : index
    %c0_23 = arith.constant 0 : index
    %32 = vector.load %arg9[%c0_21, %c0_22, %c0_23] : memref<1x32x256xf32, #tpu.memory_space<vmem>>, vector<1x32x256xf32>
    %cst_24 = arith.constant dense<0xFF800000> : vector<1x256xf32>
    %33 = vector.multi_reduction <maximumf>, %32, %cst_24 [1] : vector<1x32x256xf32> to vector<1x256xf32>
    %cst_25 = arith.constant dense<0.000000e+00> : vector<1x256xf32>
    %34 = vector.multi_reduction <add>, %32, %cst_25 [1] : vector<1x32x256xf32> to vector<1x256xf32>
    %cst_26 = arith.constant 3.200000e+01 : f32
    %35 = vector.broadcast %cst_26 : f32 to vector<1x256xf32>
    %36 = arith.divf %34, %35 : vector<1x256xf32>
    %cst_27 = arith.constant 0.000000e+00 : f32
    %37 = vector.broadcast %cst_27 : f32 to vector<1x256xf32>
    %c51_i32 = arith.constant 51 : i32
    %38 = tpu.dynamic_rotate %33 by %c51_i32 dim 1 : vector<1x256xf32>, i32 -> vector<1x256xf32>
    %c51_i32_28 = arith.constant 51 : i32
    %39 = tpu.dynamic_rotate %36 by %c51_i32_28 dim 1 : vector<1x256xf32>, i32 -> vector<1x256xf32>
    %c0_29 = arith.constant 0 : index
    %c0_30 = arith.constant 0 : index
    %c0_31 = arith.constant 0 : index
    %40 = vector.load %arg6[%c0_29, %c0_30, %c0_31] : memref<2x49x256xf32, #tpu.memory_space<vmem>>, vector<1x1x256xf32>
    %41 = vector.shape_cast %40 : vector<1x1x256xf32> to vector<1x256xf32>
    %42 = arith.mulf %38, %41 : vector<1x256xf32>
    %43 = arith.addf %37, %42 : vector<1x256xf32>
    %c1 = arith.constant 1 : index
    %c0_32 = arith.constant 0 : index
    %c0_33 = arith.constant 0 : index
    %44 = vector.load %arg6[%c1, %c0_32, %c0_33] : memref<2x49x256xf32, #tpu.memory_space<vmem>>, vector<1x1x256xf32>
    %45 = vector.shape_cast %44 : vector<1x1x256xf32> to vector<1x256xf32>
    %46 = arith.mulf %39, %45 : vector<1x256xf32>
    %47 = arith.addf %43, %46 : vector<1x256xf32>
    %c50_i32 = arith.constant 50 : i32
    %48 = tpu.dynamic_rotate %33 by %c50_i32 dim 1 : vector<1x256xf32>, i32 -> vector<1x256xf32>
    %c50_i32_34 = arith.constant 50 : i32
    %49 = tpu.dynamic_rotate %36 by %c50_i32_34 dim 1 : vector<1x256xf32>, i32 -> vector<1x256xf32>
    %c0_35 = arith.constant 0 : index
    %c1_36 = arith.constant 1 : index
    %c0_37 = arith.constant 0 : index
    %50 = vector.load %arg6[%c0_35, %c1_36, %c0_37] : memref<2x49x256xf32, #tpu.memory_space<vmem>>, vector<1x1x256xf32>
    %51 = vector.shape_cast %50 : vector<1x1x256xf32> to vector<1x256xf32>
    %52 = arith.mulf %48, %51 : vector<1x256xf32>
    %53 = arith.addf %47, %52 : vector<1x256xf32>
    %c1_38 = arith.constant 1 : index
    %c1_39 = arith.constant 1 : index
    %c0_40 = arith.constant 0 : index
    %54 = vector.load %arg6[%c1_38, %c1_39, %c0_40] : memref<2x49x256xf32, #tpu.memory_space<vmem>>, vector<1x1x256xf32>
    %55 = vector.shape_cast %54 : vector<1x1x256xf32> to vector<1x256xf32>
    %56 = arith.mulf %49, %55 : vector<1x256xf32>
    %57 = arith.addf %53, %56 : vector<1x256xf32>
    %c49_i32 = arith.constant 49 : i32
    %58 = tpu.dynamic_rotate %33 by %c49_i32 dim 1 : vector<1x256xf32>, i32 -> vector<1x256xf32>
    %c49_i32_41 = arith.constant 49 : i32
    %59 = tpu.dynamic_rotate %36 by %c49_i32_41 dim 1 : vector<1x256xf32>, i32 -> vector<1x256xf32>
    %c0_42 = arith.constant 0 : index
    %c2 = arith.constant 2 : index
    %c0_43 = arith.constant 0 : index
    %60 = vector.load %arg6[%c0_42, %c2, %c0_43] : memref<2x49x256xf32, #tpu.memory_space<vmem>>, vector<1x1x256xf32>
    %61 = vector.shape_cast %60 : vector<1x1x256xf32> to vector<1x256xf32>
    %62 = arith.mulf %58, %61 : vector<1x256xf32>
    %63 = arith.addf %57, %62 : vector<1x256xf32>
    %c1_44 = arith.constant 1 : index
    %c2_45 = arith.constant 2 : index
    %c0_46 = arith.constant 0 : index
    %64 = vector.load %arg6[%c1_44, %c2_45, %c0_46] : memref<2x49x256xf32, #tpu.memory_space<vmem>>, vector<1x1x256xf32>
    %65 = vector.shape_cast %64 : vector<1x1x256xf32> to vector<1x256xf32>
    %66 = arith.mulf %59, %65 : vector<1x256xf32>
    %67 = arith.addf %63, %66 : vector<1x256xf32>
    %c48_i32 = arith.constant 48 : i32
    %68 = tpu.dynamic_rotate %33 by %c48_i32 dim 1 : vector<1x256xf32>, i32 -> vector<1x256xf32>
    %c48_i32_47 = arith.constant 48 : i32
    %69 = tpu.dynamic_rotate %36 by %c48_i32_47 dim 1 : vector<1x256xf32>, i32 -> vector<1x256xf32>
    %c0_48 = arith.constant 0 : index
    %c3 = arith.constant 3 : index
    %c0_49 = arith.constant 0 : index
    %70 = vector.load %arg6[%c0_48, %c3, %c0_49] : memref<2x49x256xf32, #tpu.memory_space<vmem>>, vector<1x1x256xf32>
    %71 = vector.shape_cast %70 : vector<1x1x256xf32> to vector<1x256xf32>
    %72 = arith.mulf %68, %71 : vector<1x256xf32>
    %73 = arith.addf %67, %72 : vector<1x256xf32>
    %c1_50 = arith.constant 1 : index
    %c3_51 = arith.constant 3 : index
    %c0_52 = arith.constant 0 : index
    %74 = vector.load %arg6[%c1_50, %c3_51, %c0_52] : memref<2x49x256xf32, #tpu.memory_space<vmem>>, vector<1x1x256xf32>
    %75 = vector.shape_cast %74 : vector<1x1x256xf32> to vector<1x256xf32>
    %76 = arith.mulf %69, %75 : vector<1x256xf32>
    %77 = arith.addf %73, %76 : vector<1x256xf32>
    %c47_i32 = arith.constant 47 : i32
    %78 = tpu.dynamic_rotate %33 by %c47_i32 dim 1 : vector<1x256xf32>, i32 -> vector<1x256xf32>
    %c47_i32_53 = arith.constant 47 : i32
    %79 = tpu.dynamic_rotate %36 by %c47_i32_53 dim 1 : vector<1x256xf32>, i32 -> vector<1x256xf32>
    %c0_54 = arith.constant 0 : index
    %c4 = arith.constant 4 : index
    %c0_55 = arith.constant 0 : index
    %80 = vector.load %arg6[%c0_54, %c4, %c0_55] : memref<2x49x256xf32, #tpu.memory_space<vmem>>, vector<1x1x256xf32>
    %81 = vector.shape_cast %80 : vector<1x1x256xf32> to vector<1x256xf32>
    %82 = arith.mulf %78, %81 : vector<1x256xf32>
    %83 = arith.addf %77, %82 : vector<1x256xf32>
    %c1_56 = arith.constant 1 : index
    %c4_57 = arith.constant 4 : index
    %c0_58 = arith.constant 0 : index
    %84 = vector.load %arg6[%c1_56, %c4_57, %c0_58] : memref<2x49x256xf32, #tpu.memory_space<vmem>>, vector<1x1x256xf32>
    %85 = vector.shape_cast %84 : vector<1x1x256xf32> to vector<1x256xf32>
    %86 = arith.mulf %79, %85 : vector<1x256xf32>
    %87 = arith.addf %83, %86 : vector<1x256xf32>
    %c46_i32 = arith.constant 46 : i32
    %88 = tpu.dynamic_rotate %33 by %c46_i32 dim 1 : vector<1x256xf32>, i32 -> vector<1x256xf32>
    %c46_i32_59 = arith.constant 46 : i32
    %89 = tpu.dynamic_rotate %36 by %c46_i32_59 dim 1 : vector<1x256xf32>, i32 -> vector<1x256xf32>
    %c0_60 = arith.constant 0 : index
    %c5 = arith.constant 5 : index
    %c0_61 = arith.constant 0 : index
    %90 = vector.load %arg6[%c0_60, %c5, %c0_61] : memref<2x49x256xf32, #tpu.memory_space<vmem>>, vector<1x1x256xf32>
    %91 = vector.shape_cast %90 : vector<1x1x256xf32> to vector<1x256xf32>
    %92 = arith.mulf %88, %91 : vector<1x256xf32>
    %93 = arith.addf %87, %92 : vector<1x256xf32>
    %c1_62 = arith.constant 1 : index
    %c5_63 = arith.constant 5 : index
    %c0_64 = arith.constant 0 : index
    %94 = vector.load %arg6[%c1_62, %c5_63, %c0_64] : memref<2x49x256xf32, #tpu.memory_space<vmem>>, vector<1x1x256xf32>
    %95 = vector.shape_cast %94 : vector<1x1x256xf32> to vector<1x256xf32>
    %96 = arith.mulf %89, %95 : vector<1x256xf32>
    %97 = arith.addf %93, %96 : vector<1x256xf32>
    %c45_i32 = arith.constant 45 : i32
    %98 = tpu.dynamic_rotate %33 by %c45_i32 dim 1 : vector<1x256xf32>, i32 -> vector<1x256xf32>
    %c45_i32_65 = arith.constant 45 : i32
    %99 = tpu.dynamic_rotate %36 by %c45_i32_65 dim 1 : vector<1x256xf32>, i32 -> vector<1x256xf32>
    %c0_66 = arith.constant 0 : index
    %c6 = arith.constant 6 : index
    %c0_67 = arith.constant 0 : index
    %100 = vector.load %arg6[%c0_66, %c6, %c0_67] : memref<2x49x256xf32, #tpu.memory_space<vmem>>, vector<1x1x256xf32>
    %101 = vector.shape_cast %100 : vector<1x1x256xf32> to vector<1x256xf32>
    %102 = arith.mulf %98, %101 : vector<1x256xf32>
    %103 = arith.addf %97, %102 : vector<1x256xf32>
    %c1_68 = arith.constant 1 : index
    %c6_69 = arith.constant 6 : index
    %c0_70 = arith.constant 0 : index
    %104 = vector.load %arg6[%c1_68, %c6_69, %c0_70] : memref<2x49x256xf32, #tpu.memory_space<vmem>>, vector<1x1x256xf32>
    %105 = vector.shape_cast %104 : vector<1x1x256xf32> to vector<1x256xf32>
    %106 = arith.mulf %99, %105 : vector<1x256xf32>
    %107 = arith.addf %103, %106 : vector<1x256xf32>
    %c35_i32 = arith.constant 35 : i32
    %108 = tpu.dynamic_rotate %33 by %c35_i32 dim 1 : vector<1x256xf32>, i32 -> vector<1x256xf32>
    %c35_i32_71 = arith.constant 35 : i32
    %109 = tpu.dynamic_rotate %36 by %c35_i32_71 dim 1 : vector<1x256xf32>, i32 -> vector<1x256xf32>
    %c0_72 = arith.constant 0 : index
    %c7 = arith.constant 7 : index
    %c0_73 = arith.constant 0 : index
    %110 = vector.load %arg6[%c0_72, %c7, %c0_73] : memref<2x49x256xf32, #tpu.memory_space<vmem>>, vector<1x1x256xf32>
    %111 = vector.shape_cast %110 : vector<1x1x256xf32> to vector<1x256xf32>
    %112 = arith.mulf %108, %111 : vector<1x256xf32>
    %113 = arith.addf %107, %112 : vector<1x256xf32>
    %c1_74 = arith.constant 1 : index
    %c7_75 = arith.constant 7 : index
    %c0_76 = arith.constant 0 : index
    %114 = vector.load %arg6[%c1_74, %c7_75, %c0_76] : memref<2x49x256xf32, #tpu.memory_space<vmem>>, vector<1x1x256xf32>
    %115 = vector.shape_cast %114 : vector<1x1x256xf32> to vector<1x256xf32>
    %116 = arith.mulf %109, %115 : vector<1x256xf32>
    %117 = arith.addf %113, %116 : vector<1x256xf32>
    %c34_i32 = arith.constant 34 : i32
    %118 = tpu.dynamic_rotate %33 by %c34_i32 dim 1 : vector<1x256xf32>, i32 -> vector<1x256xf32>
    %c34_i32_77 = arith.constant 34 : i32
    %119 = tpu.dynamic_rotate %36 by %c34_i32_77 dim 1 : vector<1x256xf32>, i32 -> vector<1x256xf32>
    %c0_78 = arith.constant 0 : index
    %c8 = arith.constant 8 : index
    %c0_79 = arith.constant 0 : index
    %120 = vector.load %arg6[%c0_78, %c8, %c0_79] : memref<2x49x256xf32, #tpu.memory_space<vmem>>, vector<1x1x256xf32>
    %121 = vector.shape_cast %120 : vector<1x1x256xf32> to vector<1x256xf32>
    %122 = arith.mulf %118, %121 : vector<1x256xf32>
    %123 = arith.addf %117, %122 : vector<1x256xf32>
    %c1_80 = arith.constant 1 : index
    %c8_81 = arith.constant 8 : index
    %c0_82 = arith.constant 0 : index
    %124 = vector.load %arg6[%c1_80, %c8_81, %c0_82] : memref<2x49x256xf32, #tpu.memory_space<vmem>>, vector<1x1x256xf32>
    %125 = vector.shape_cast %124 : vector<1x1x256xf32> to vector<1x256xf32>
    %126 = arith.mulf %119, %125 : vector<1x256xf32>
    %127 = arith.addf %123, %126 : vector<1x256xf32>
    %c33_i32 = arith.constant 33 : i32
    %128 = tpu.dynamic_rotate %33 by %c33_i32 dim 1 : vector<1x256xf32>, i32 -> vector<1x256xf32>
    %c33_i32_83 = arith.constant 33 : i32
    %129 = tpu.dynamic_rotate %36 by %c33_i32_83 dim 1 : vector<1x256xf32>, i32 -> vector<1x256xf32>
    %c0_84 = arith.constant 0 : index
    %c9 = arith.constant 9 : index
    %c0_85 = arith.constant 0 : index
    %130 = vector.load %arg6[%c0_84, %c9, %c0_85] : memref<2x49x256xf32, #tpu.memory_space<vmem>>, vector<1x1x256xf32>
    %131 = vector.shape_cast %130 : vector<1x1x256xf32> to vector<1x256xf32>
    %132 = arith.mulf %128, %131 : vector<1x256xf32>
    %133 = arith.addf %127, %132 : vector<1x256xf32>
    %c1_86 = arith.constant 1 : index
    %c9_87 = arith.constant 9 : index
    %c0_88 = arith.constant 0 : index
    %134 = vector.load %arg6[%c1_86, %c9_87, %c0_88] : memref<2x49x256xf32, #tpu.memory_space<vmem>>, vector<1x1x256xf32>
    %135 = vector.shape_cast %134 : vector<1x1x256xf32> to vector<1x256xf32>
    %136 = arith.mulf %129, %135 : vector<1x256xf32>
    %137 = arith.addf %133, %136 : vector<1x256xf32>
    %c32_i32 = arith.constant 32 : i32
    %138 = tpu.dynamic_rotate %33 by %c32_i32 dim 1 : vector<1x256xf32>, i32 -> vector<1x256xf32>
    %c32_i32_89 = arith.constant 32 : i32
    %139 = tpu.dynamic_rotate %36 by %c32_i32_89 dim 1 : vector<1x256xf32>, i32 -> vector<1x256xf32>
    %c0_90 = arith.constant 0 : index
    %c10 = arith.constant 10 : index
    %c0_91 = arith.constant 0 : index
    %140 = vector.load %arg6[%c0_90, %c10, %c0_91] : memref<2x49x256xf32, #tpu.memory_space<vmem>>, vector<1x1x256xf32>
    %141 = vector.shape_cast %140 : vector<1x1x256xf32> to vector<1x256xf32>
    %142 = arith.mulf %138, %141 : vector<1x256xf32>
    %143 = arith.addf %137, %142 : vector<1x256xf32>
    %c1_92 = arith.constant 1 : index
    %c10_93 = arith.constant 10 : index
    %c0_94 = arith.constant 0 : index
    %144 = vector.load %arg6[%c1_92, %c10_93, %c0_94] : memref<2x49x256xf32, #tpu.memory_space<vmem>>, vector<1x1x256xf32>
    %145 = vector.shape_cast %144 : vector<1x1x256xf32> to vector<1x256xf32>
    %146 = arith.mulf %139, %145 : vector<1x256xf32>
    %147 = arith.addf %143, %146 : vector<1x256xf32>
    %c31_i32 = arith.constant 31 : i32
    %148 = tpu.dynamic_rotate %33 by %c31_i32 dim 1 : vector<1x256xf32>, i32 -> vector<1x256xf32>
    %c31_i32_95 = arith.constant 31 : i32
    %149 = tpu.dynamic_rotate %36 by %c31_i32_95 dim 1 : vector<1x256xf32>, i32 -> vector<1x256xf32>
    %c0_96 = arith.constant 0 : index
    %c11 = arith.constant 11 : index
    %c0_97 = arith.constant 0 : index
    %150 = vector.load %arg6[%c0_96, %c11, %c0_97] : memref<2x49x256xf32, #tpu.memory_space<vmem>>, vector<1x1x256xf32>
    %151 = vector.shape_cast %150 : vector<1x1x256xf32> to vector<1x256xf32>
    %152 = arith.mulf %148, %151 : vector<1x256xf32>
    %153 = arith.addf %147, %152 : vector<1x256xf32>
    %c1_98 = arith.constant 1 : index
    %c11_99 = arith.constant 11 : index
    %c0_100 = arith.constant 0 : index
    %154 = vector.load %arg6[%c1_98, %c11_99, %c0_100] : memref<2x49x256xf32, #tpu.memory_space<vmem>>, vector<1x1x256xf32>
    %155 = vector.shape_cast %154 : vector<1x1x256xf32> to vector<1x256xf32>
    %156 = arith.mulf %149, %155 : vector<1x256xf32>
    %157 = arith.addf %153, %156 : vector<1x256xf32>
    %c30_i32 = arith.constant 30 : i32
    %158 = tpu.dynamic_rotate %33 by %c30_i32 dim 1 : vector<1x256xf32>, i32 -> vector<1x256xf32>
    %c30_i32_101 = arith.constant 30 : i32
    %159 = tpu.dynamic_rotate %36 by %c30_i32_101 dim 1 : vector<1x256xf32>, i32 -> vector<1x256xf32>
    %c0_102 = arith.constant 0 : index
    %c12 = arith.constant 12 : index
    %c0_103 = arith.constant 0 : index
    %160 = vector.load %arg6[%c0_102, %c12, %c0_103] : memref<2x49x256xf32, #tpu.memory_space<vmem>>, vector<1x1x256xf32>
    %161 = vector.shape_cast %160 : vector<1x1x256xf32> to vector<1x256xf32>
    %162 = arith.mulf %158, %161 : vector<1x256xf32>
    %163 = arith.addf %157, %162 : vector<1x256xf32>
    %c1_104 = arith.constant 1 : index
    %c12_105 = arith.constant 12 : index
    %c0_106 = arith.constant 0 : index
    %164 = vector.load %arg6[%c1_104, %c12_105, %c0_106] : memref<2x49x256xf32, #tpu.memory_space<vmem>>, vector<1x1x256xf32>
    %165 = vector.shape_cast %164 : vector<1x1x256xf32> to vector<1x256xf32>
    %166 = arith.mulf %159, %165 : vector<1x256xf32>
    %167 = arith.addf %163, %166 : vector<1x256xf32>
    %c29_i32 = arith.constant 29 : i32
    %168 = tpu.dynamic_rotate %33 by %c29_i32 dim 1 : vector<1x256xf32>, i32 -> vector<1x256xf32>
    %c29_i32_107 = arith.constant 29 : i32
    %169 = tpu.dynamic_rotate %36 by %c29_i32_107 dim 1 : vector<1x256xf32>, i32 -> vector<1x256xf32>
    %c0_108 = arith.constant 0 : index
    %c13 = arith.constant 13 : index
    %c0_109 = arith.constant 0 : index
    %170 = vector.load %arg6[%c0_108, %c13, %c0_109] : memref<2x49x256xf32, #tpu.memory_space<vmem>>, vector<1x1x256xf32>
    %171 = vector.shape_cast %170 : vector<1x1x256xf32> to vector<1x256xf32>
    %172 = arith.mulf %168, %171 : vector<1x256xf32>
    %173 = arith.addf %167, %172 : vector<1x256xf32>
    %c1_110 = arith.constant 1 : index
    %c13_111 = arith.constant 13 : index
    %c0_112 = arith.constant 0 : index
    %174 = vector.load %arg6[%c1_110, %c13_111, %c0_112] : memref<2x49x256xf32, #tpu.memory_space<vmem>>, vector<1x1x256xf32>
    %175 = vector.shape_cast %174 : vector<1x1x256xf32> to vector<1x256xf32>
    %176 = arith.mulf %169, %175 : vector<1x256xf32>
    %177 = arith.addf %173, %176 : vector<1x256xf32>
    %c19_i32 = arith.constant 19 : i32
    %178 = tpu.dynamic_rotate %33 by %c19_i32 dim 1 : vector<1x256xf32>, i32 -> vector<1x256xf32>
    %c19_i32_113 = arith.constant 19 : i32
    %179 = tpu.dynamic_rotate %36 by %c19_i32_113 dim 1 : vector<1x256xf32>, i32 -> vector<1x256xf32>
    %c0_114 = arith.constant 0 : index
    %c14 = arith.constant 14 : index
    %c0_115 = arith.constant 0 : index
    %180 = vector.load %arg6[%c0_114, %c14, %c0_115] : memref<2x49x256xf32, #tpu.memory_space<vmem>>, vector<1x1x256xf32>
    %181 = vector.shape_cast %180 : vector<1x1x256xf32> to vector<1x256xf32>
    %182 = arith.mulf %178, %181 : vector<1x256xf32>
    %183 = arith.addf %177, %182 : vector<1x256xf32>
    %c1_116 = arith.constant 1 : index
    %c14_117 = arith.constant 14 : index
    %c0_118 = arith.constant 0 : index
    %184 = vector.load %arg6[%c1_116, %c14_117, %c0_118] : memref<2x49x256xf32, #tpu.memory_space<vmem>>, vector<1x1x256xf32>
    %185 = vector.shape_cast %184 : vector<1x1x256xf32> to vector<1x256xf32>
    %186 = arith.mulf %179, %185 : vector<1x256xf32>
    %187 = arith.addf %183, %186 : vector<1x256xf32>
    %c18_i32 = arith.constant 18 : i32
    %188 = tpu.dynamic_rotate %33 by %c18_i32 dim 1 : vector<1x256xf32>, i32 -> vector<1x256xf32>
    %c18_i32_119 = arith.constant 18 : i32
    %189 = tpu.dynamic_rotate %36 by %c18_i32_119 dim 1 : vector<1x256xf32>, i32 -> vector<1x256xf32>
    %c0_120 = arith.constant 0 : index
    %c15 = arith.constant 15 : index
    %c0_121 = arith.constant 0 : index
    %190 = vector.load %arg6[%c0_120, %c15, %c0_121] : memref<2x49x256xf32, #tpu.memory_space<vmem>>, vector<1x1x256xf32>
    %191 = vector.shape_cast %190 : vector<1x1x256xf32> to vector<1x256xf32>
    %192 = arith.mulf %188, %191 : vector<1x256xf32>
    %193 = arith.addf %187, %192 : vector<1x256xf32>
    %c1_122 = arith.constant 1 : index
    %c15_123 = arith.constant 15 : index
    %c0_124 = arith.constant 0 : index
    %194 = vector.load %arg6[%c1_122, %c15_123, %c0_124] : memref<2x49x256xf32, #tpu.memory_space<vmem>>, vector<1x1x256xf32>
    %195 = vector.shape_cast %194 : vector<1x1x256xf32> to vector<1x256xf32>
    %196 = arith.mulf %189, %195 : vector<1x256xf32>
    %197 = arith.addf %193, %196 : vector<1x256xf32>
    %c17_i32 = arith.constant 17 : i32
    %198 = tpu.dynamic_rotate %33 by %c17_i32 dim 1 : vector<1x256xf32>, i32 -> vector<1x256xf32>
    %c17_i32_125 = arith.constant 17 : i32
    %199 = tpu.dynamic_rotate %36 by %c17_i32_125 dim 1 : vector<1x256xf32>, i32 -> vector<1x256xf32>
    %c0_126 = arith.constant 0 : index
    %c16 = arith.constant 16 : index
    %c0_127 = arith.constant 0 : index
    %200 = vector.load %arg6[%c0_126, %c16, %c0_127] : memref<2x49x256xf32, #tpu.memory_space<vmem>>, vector<1x1x256xf32>
    %201 = vector.shape_cast %200 : vector<1x1x256xf32> to vector<1x256xf32>
    %202 = arith.mulf %198, %201 : vector<1x256xf32>
    %203 = arith.addf %197, %202 : vector<1x256xf32>
    %c1_128 = arith.constant 1 : index
    %c16_129 = arith.constant 16 : index
    %c0_130 = arith.constant 0 : index
    %204 = vector.load %arg6[%c1_128, %c16_129, %c0_130] : memref<2x49x256xf32, #tpu.memory_space<vmem>>, vector<1x1x256xf32>
    %205 = vector.shape_cast %204 : vector<1x1x256xf32> to vector<1x256xf32>
    %206 = arith.mulf %199, %205 : vector<1x256xf32>
    %207 = arith.addf %203, %206 : vector<1x256xf32>
    %c16_i32 = arith.constant 16 : i32
    %208 = tpu.dynamic_rotate %33 by %c16_i32 dim 1 : vector<1x256xf32>, i32 -> vector<1x256xf32>
    %c16_i32_131 = arith.constant 16 : i32
    %209 = tpu.dynamic_rotate %36 by %c16_i32_131 dim 1 : vector<1x256xf32>, i32 -> vector<1x256xf32>
    %c0_132 = arith.constant 0 : index
    %c17 = arith.constant 17 : index
    %c0_133 = arith.constant 0 : index
    %210 = vector.load %arg6[%c0_132, %c17, %c0_133] : memref<2x49x256xf32, #tpu.memory_space<vmem>>, vector<1x1x256xf32>
    %211 = vector.shape_cast %210 : vector<1x1x256xf32> to vector<1x256xf32>
    %212 = arith.mulf %208, %211 : vector<1x256xf32>
    %213 = arith.addf %207, %212 : vector<1x256xf32>
    %c1_134 = arith.constant 1 : index
    %c17_135 = arith.constant 17 : index
    %c0_136 = arith.constant 0 : index
    %214 = vector.load %arg6[%c1_134, %c17_135, %c0_136] : memref<2x49x256xf32, #tpu.memory_space<vmem>>, vector<1x1x256xf32>
    %215 = vector.shape_cast %214 : vector<1x1x256xf32> to vector<1x256xf32>
    %216 = arith.mulf %209, %215 : vector<1x256xf32>
    %217 = arith.addf %213, %216 : vector<1x256xf32>
    %c15_i32 = arith.constant 15 : i32
    %218 = tpu.dynamic_rotate %33 by %c15_i32 dim 1 : vector<1x256xf32>, i32 -> vector<1x256xf32>
    %c15_i32_137 = arith.constant 15 : i32
    %219 = tpu.dynamic_rotate %36 by %c15_i32_137 dim 1 : vector<1x256xf32>, i32 -> vector<1x256xf32>
    %c0_138 = arith.constant 0 : index
    %c18 = arith.constant 18 : index
    %c0_139 = arith.constant 0 : index
    %220 = vector.load %arg6[%c0_138, %c18, %c0_139] : memref<2x49x256xf32, #tpu.memory_space<vmem>>, vector<1x1x256xf32>
    %221 = vector.shape_cast %220 : vector<1x1x256xf32> to vector<1x256xf32>
    %222 = arith.mulf %218, %221 : vector<1x256xf32>
    %223 = arith.addf %217, %222 : vector<1x256xf32>
    %c1_140 = arith.constant 1 : index
    %c18_141 = arith.constant 18 : index
    %c0_142 = arith.constant 0 : index
    %224 = vector.load %arg6[%c1_140, %c18_141, %c0_142] : memref<2x49x256xf32, #tpu.memory_space<vmem>>, vector<1x1x256xf32>
    %225 = vector.shape_cast %224 : vector<1x1x256xf32> to vector<1x256xf32>
    %226 = arith.mulf %219, %225 : vector<1x256xf32>
    %227 = arith.addf %223, %226 : vector<1x256xf32>
    %c14_i32 = arith.constant 14 : i32
    %228 = tpu.dynamic_rotate %33 by %c14_i32 dim 1 : vector<1x256xf32>, i32 -> vector<1x256xf32>
    %c14_i32_143 = arith.constant 14 : i32
    %229 = tpu.dynamic_rotate %36 by %c14_i32_143 dim 1 : vector<1x256xf32>, i32 -> vector<1x256xf32>
    %c0_144 = arith.constant 0 : index
    %c19 = arith.constant 19 : index
    %c0_145 = arith.constant 0 : index
    %230 = vector.load %arg6[%c0_144, %c19, %c0_145] : memref<2x49x256xf32, #tpu.memory_space<vmem>>, vector<1x1x256xf32>
    %231 = vector.shape_cast %230 : vector<1x1x256xf32> to vector<1x256xf32>
    %232 = arith.mulf %228, %231 : vector<1x256xf32>
    %233 = arith.addf %227, %232 : vector<1x256xf32>
    %c1_146 = arith.constant 1 : index
    %c19_147 = arith.constant 19 : index
    %c0_148 = arith.constant 0 : index
    %234 = vector.load %arg6[%c1_146, %c19_147, %c0_148] : memref<2x49x256xf32, #tpu.memory_space<vmem>>, vector<1x1x256xf32>
    %235 = vector.shape_cast %234 : vector<1x1x256xf32> to vector<1x256xf32>
    %236 = arith.mulf %229, %235 : vector<1x256xf32>
    %237 = arith.addf %233, %236 : vector<1x256xf32>
    %c13_i32 = arith.constant 13 : i32
    %238 = tpu.dynamic_rotate %33 by %c13_i32 dim 1 : vector<1x256xf32>, i32 -> vector<1x256xf32>
    %c13_i32_149 = arith.constant 13 : i32
    %239 = tpu.dynamic_rotate %36 by %c13_i32_149 dim 1 : vector<1x256xf32>, i32 -> vector<1x256xf32>
    %c0_150 = arith.constant 0 : index
    %c20 = arith.constant 20 : index
    %c0_151 = arith.constant 0 : index
    %240 = vector.load %arg6[%c0_150, %c20, %c0_151] : memref<2x49x256xf32, #tpu.memory_space<vmem>>, vector<1x1x256xf32>
    %241 = vector.shape_cast %240 : vector<1x1x256xf32> to vector<1x256xf32>
    %242 = arith.mulf %238, %241 : vector<1x256xf32>
    %243 = arith.addf %237, %242 : vector<1x256xf32>
    %c1_152 = arith.constant 1 : index
    %c20_153 = arith.constant 20 : index
    %c0_154 = arith.constant 0 : index
    %244 = vector.load %arg6[%c1_152, %c20_153, %c0_154] : memref<2x49x256xf32, #tpu.memory_space<vmem>>, vector<1x1x256xf32>
    %245 = vector.shape_cast %244 : vector<1x1x256xf32> to vector<1x256xf32>
    %246 = arith.mulf %239, %245 : vector<1x256xf32>
    %247 = arith.addf %243, %246 : vector<1x256xf32>
    %c3_i32 = arith.constant 3 : i32
    %248 = tpu.dynamic_rotate %33 by %c3_i32 dim 1 : vector<1x256xf32>, i32 -> vector<1x256xf32>
    %c3_i32_155 = arith.constant 3 : i32
    %249 = tpu.dynamic_rotate %36 by %c3_i32_155 dim 1 : vector<1x256xf32>, i32 -> vector<1x256xf32>
    %c0_156 = arith.constant 0 : index
    %c21 = arith.constant 21 : index
    %c0_157 = arith.constant 0 : index
    %250 = vector.load %arg6[%c0_156, %c21, %c0_157] : memref<2x49x256xf32, #tpu.memory_space<vmem>>, vector<1x1x256xf32>
    %251 = vector.shape_cast %250 : vector<1x1x256xf32> to vector<1x256xf32>
    %252 = arith.mulf %248, %251 : vector<1x256xf32>
    %253 = arith.addf %247, %252 : vector<1x256xf32>
    %c1_158 = arith.constant 1 : index
    %c21_159 = arith.constant 21 : index
    %c0_160 = arith.constant 0 : index
    %254 = vector.load %arg6[%c1_158, %c21_159, %c0_160] : memref<2x49x256xf32, #tpu.memory_space<vmem>>, vector<1x1x256xf32>
    %255 = vector.shape_cast %254 : vector<1x1x256xf32> to vector<1x256xf32>
    %256 = arith.mulf %249, %255 : vector<1x256xf32>
    %257 = arith.addf %253, %256 : vector<1x256xf32>
    %c2_i32 = arith.constant 2 : i32
    %258 = tpu.dynamic_rotate %33 by %c2_i32 dim 1 : vector<1x256xf32>, i32 -> vector<1x256xf32>
    %c2_i32_161 = arith.constant 2 : i32
    %259 = tpu.dynamic_rotate %36 by %c2_i32_161 dim 1 : vector<1x256xf32>, i32 -> vector<1x256xf32>
    %c0_162 = arith.constant 0 : index
    %c22 = arith.constant 22 : index
    %c0_163 = arith.constant 0 : index
    %260 = vector.load %arg6[%c0_162, %c22, %c0_163] : memref<2x49x256xf32, #tpu.memory_space<vmem>>, vector<1x1x256xf32>
    %261 = vector.shape_cast %260 : vector<1x1x256xf32> to vector<1x256xf32>
    %262 = arith.mulf %258, %261 : vector<1x256xf32>
    %263 = arith.addf %257, %262 : vector<1x256xf32>
    %c1_164 = arith.constant 1 : index
    %c22_165 = arith.constant 22 : index
    %c0_166 = arith.constant 0 : index
    %264 = vector.load %arg6[%c1_164, %c22_165, %c0_166] : memref<2x49x256xf32, #tpu.memory_space<vmem>>, vector<1x1x256xf32>
    %265 = vector.shape_cast %264 : vector<1x1x256xf32> to vector<1x256xf32>
    %266 = arith.mulf %259, %265 : vector<1x256xf32>
    %267 = arith.addf %263, %266 : vector<1x256xf32>
    %c1_i32 = arith.constant 1 : i32
    %268 = tpu.dynamic_rotate %33 by %c1_i32 dim 1 : vector<1x256xf32>, i32 -> vector<1x256xf32>
    %c1_i32_167 = arith.constant 1 : i32
    %269 = tpu.dynamic_rotate %36 by %c1_i32_167 dim 1 : vector<1x256xf32>, i32 -> vector<1x256xf32>
    %c0_168 = arith.constant 0 : index
    %c23 = arith.constant 23 : index
    %c0_169 = arith.constant 0 : index
    %270 = vector.load %arg6[%c0_168, %c23, %c0_169] : memref<2x49x256xf32, #tpu.memory_space<vmem>>, vector<1x1x256xf32>
    %271 = vector.shape_cast %270 : vector<1x1x256xf32> to vector<1x256xf32>
    %272 = arith.mulf %268, %271 : vector<1x256xf32>
    %273 = arith.addf %267, %272 : vector<1x256xf32>
    %c1_170 = arith.constant 1 : index
    %c23_171 = arith.constant 23 : index
    %c0_172 = arith.constant 0 : index
    %274 = vector.load %arg6[%c1_170, %c23_171, %c0_172] : memref<2x49x256xf32, #tpu.memory_space<vmem>>, vector<1x1x256xf32>
    %275 = vector.shape_cast %274 : vector<1x1x256xf32> to vector<1x256xf32>
    %276 = arith.mulf %269, %275 : vector<1x256xf32>
    %277 = arith.addf %273, %276 : vector<1x256xf32>
    %c0_173 = arith.constant 0 : index
    %c24 = arith.constant 24 : index
    %c0_174 = arith.constant 0 : index
    %278 = vector.load %arg6[%c0_173, %c24, %c0_174] : memref<2x49x256xf32, #tpu.memory_space<vmem>>, vector<1x1x256xf32>
    %279 = vector.shape_cast %278 : vector<1x1x256xf32> to vector<1x256xf32>
    %280 = arith.mulf %33, %279 : vector<1x256xf32>
    %281 = arith.addf %277, %280 : vector<1x256xf32>
    %c1_175 = arith.constant 1 : index
    %c24_176 = arith.constant 24 : index
    %c0_177 = arith.constant 0 : index
    %282 = vector.load %arg6[%c1_175, %c24_176, %c0_177] : memref<2x49x256xf32, #tpu.memory_space<vmem>>, vector<1x1x256xf32>
    %283 = vector.shape_cast %282 : vector<1x1x256xf32> to vector<1x256xf32>
    %284 = arith.mulf %36, %283 : vector<1x256xf32>
    %285 = arith.addf %281, %284 : vector<1x256xf32>
    %c255_i32 = arith.constant 255 : i32
    %286 = tpu.dynamic_rotate %33 by %c255_i32 dim 1 : vector<1x256xf32>, i32 -> vector<1x256xf32>
    %c255_i32_178 = arith.constant 255 : i32
    %287 = tpu.dynamic_rotate %36 by %c255_i32_178 dim 1 : vector<1x256xf32>, i32 -> vector<1x256xf32>
    %c0_179 = arith.constant 0 : index
    %c25 = arith.constant 25 : index
    %c0_180 = arith.constant 0 : index
    %288 = vector.load %arg6[%c0_179, %c25, %c0_180] : memref<2x49x256xf32, #tpu.memory_space<vmem>>, vector<1x1x256xf32>
    %289 = vector.shape_cast %288 : vector<1x1x256xf32> to vector<1x256xf32>
    %290 = arith.mulf %286, %289 : vector<1x256xf32>
    %291 = arith.addf %285, %290 : vector<1x256xf32>
    %c1_181 = arith.constant 1 : index
    %c25_182 = arith.constant 25 : index
    %c0_183 = arith.constant 0 : index
    %292 = vector.load %arg6[%c1_181, %c25_182, %c0_183] : memref<2x49x256xf32, #tpu.memory_space<vmem>>, vector<1x1x256xf32>
    %293 = vector.shape_cast %292 : vector<1x1x256xf32> to vector<1x256xf32>
    %294 = arith.mulf %287, %293 : vector<1x256xf32>
    %295 = arith.addf %291, %294 : vector<1x256xf32>
    %c254_i32 = arith.constant 254 : i32
    %296 = tpu.dynamic_rotate %33 by %c254_i32 dim 1 : vector<1x256xf32>, i32 -> vector<1x256xf32>
    %c254_i32_184 = arith.constant 254 : i32
    %297 = tpu.dynamic_rotate %36 by %c254_i32_184 dim 1 : vector<1x256xf32>, i32 -> vector<1x256xf32>
    %c0_185 = arith.constant 0 : index
    %c26 = arith.constant 26 : index
    %c0_186 = arith.constant 0 : index
    %298 = vector.load %arg6[%c0_185, %c26, %c0_186] : memref<2x49x256xf32, #tpu.memory_space<vmem>>, vector<1x1x256xf32>
    %299 = vector.shape_cast %298 : vector<1x1x256xf32> to vector<1x256xf32>
    %300 = arith.mulf %296, %299 : vector<1x256xf32>
    %301 = arith.addf %295, %300 : vector<1x256xf32>
    %c1_187 = arith.constant 1 : index
    %c26_188 = arith.constant 26 : index
    %c0_189 = arith.constant 0 : index
    %302 = vector.load %arg6[%c1_187, %c26_188, %c0_189] : memref<2x49x256xf32, #tpu.memory_space<vmem>>, vector<1x1x256xf32>
    %303 = vector.shape_cast %302 : vector<1x1x256xf32> to vector<1x256xf32>
    %304 = arith.mulf %297, %303 : vector<1x256xf32>
    %305 = arith.addf %301, %304 : vector<1x256xf32>
    %c253_i32 = arith.constant 253 : i32
    %306 = tpu.dynamic_rotate %33 by %c253_i32 dim 1 : vector<1x256xf32>, i32 -> vector<1x256xf32>
    %c253_i32_190 = arith.constant 253 : i32
    %307 = tpu.dynamic_rotate %36 by %c253_i32_190 dim 1 : vector<1x256xf32>, i32 -> vector<1x256xf32>
    %c0_191 = arith.constant 0 : index
    %c27 = arith.constant 27 : index
    %c0_192 = arith.constant 0 : index
    %308 = vector.load %arg6[%c0_191, %c27, %c0_192] : memref<2x49x256xf32, #tpu.memory_space<vmem>>, vector<1x1x256xf32>
    %309 = vector.shape_cast %308 : vector<1x1x256xf32> to vector<1x256xf32>
    %310 = arith.mulf %306, %309 : vector<1x256xf32>
    %311 = arith.addf %305, %310 : vector<1x256xf32>
    %c1_193 = arith.constant 1 : index
    %c27_194 = arith.constant 27 : index
    %c0_195 = arith.constant 0 : index
    %312 = vector.load %arg6[%c1_193, %c27_194, %c0_195] : memref<2x49x256xf32, #tpu.memory_space<vmem>>, vector<1x1x256xf32>
    %313 = vector.shape_cast %312 : vector<1x1x256xf32> to vector<1x256xf32>
    %314 = arith.mulf %307, %313 : vector<1x256xf32>
    %315 = arith.addf %311, %314 : vector<1x256xf32>
    %c243_i32 = arith.constant 243 : i32
    %316 = tpu.dynamic_rotate %33 by %c243_i32 dim 1 : vector<1x256xf32>, i32 -> vector<1x256xf32>
    %c243_i32_196 = arith.constant 243 : i32
    %317 = tpu.dynamic_rotate %36 by %c243_i32_196 dim 1 : vector<1x256xf32>, i32 -> vector<1x256xf32>
    %c0_197 = arith.constant 0 : index
    %c28 = arith.constant 28 : index
    %c0_198 = arith.constant 0 : index
    %318 = vector.load %arg6[%c0_197, %c28, %c0_198] : memref<2x49x256xf32, #tpu.memory_space<vmem>>, vector<1x1x256xf32>
    %319 = vector.shape_cast %318 : vector<1x1x256xf32> to vector<1x256xf32>
    %320 = arith.mulf %316, %319 : vector<1x256xf32>
    %321 = arith.addf %315, %320 : vector<1x256xf32>
    %c1_199 = arith.constant 1 : index
    %c28_200 = arith.constant 28 : index
    %c0_201 = arith.constant 0 : index
    %322 = vector.load %arg6[%c1_199, %c28_200, %c0_201] : memref<2x49x256xf32, #tpu.memory_space<vmem>>, vector<1x1x256xf32>
    %323 = vector.shape_cast %322 : vector<1x1x256xf32> to vector<1x256xf32>
    %324 = arith.mulf %317, %323 : vector<1x256xf32>
    %325 = arith.addf %321, %324 : vector<1x256xf32>
    %c242_i32 = arith.constant 242 : i32
    %326 = tpu.dynamic_rotate %33 by %c242_i32 dim 1 : vector<1x256xf32>, i32 -> vector<1x256xf32>
    %c242_i32_202 = arith.constant 242 : i32
    %327 = tpu.dynamic_rotate %36 by %c242_i32_202 dim 1 : vector<1x256xf32>, i32 -> vector<1x256xf32>
    %c0_203 = arith.constant 0 : index
    %c29 = arith.constant 29 : index
    %c0_204 = arith.constant 0 : index
    %328 = vector.load %arg6[%c0_203, %c29, %c0_204] : memref<2x49x256xf32, #tpu.memory_space<vmem>>, vector<1x1x256xf32>
    %329 = vector.shape_cast %328 : vector<1x1x256xf32> to vector<1x256xf32>
    %330 = arith.mulf %326, %329 : vector<1x256xf32>
    %331 = arith.addf %325, %330 : vector<1x256xf32>
    %c1_205 = arith.constant 1 : index
    %c29_206 = arith.constant 29 : index
    %c0_207 = arith.constant 0 : index
    %332 = vector.load %arg6[%c1_205, %c29_206, %c0_207] : memref<2x49x256xf32, #tpu.memory_space<vmem>>, vector<1x1x256xf32>
    %333 = vector.shape_cast %332 : vector<1x1x256xf32> to vector<1x256xf32>
    %334 = arith.mulf %327, %333 : vector<1x256xf32>
    %335 = arith.addf %331, %334 : vector<1x256xf32>
    %c241_i32 = arith.constant 241 : i32
    %336 = tpu.dynamic_rotate %33 by %c241_i32 dim 1 : vector<1x256xf32>, i32 -> vector<1x256xf32>
    %c241_i32_208 = arith.constant 241 : i32
    %337 = tpu.dynamic_rotate %36 by %c241_i32_208 dim 1 : vector<1x256xf32>, i32 -> vector<1x256xf32>
    %c0_209 = arith.constant 0 : index
    %c30 = arith.constant 30 : index
    %c0_210 = arith.constant 0 : index
    %338 = vector.load %arg6[%c0_209, %c30, %c0_210] : memref<2x49x256xf32, #tpu.memory_space<vmem>>, vector<1x1x256xf32>
    %339 = vector.shape_cast %338 : vector<1x1x256xf32> to vector<1x256xf32>
    %340 = arith.mulf %336, %339 : vector<1x256xf32>
    %341 = arith.addf %335, %340 : vector<1x256xf32>
    %c1_211 = arith.constant 1 : index
    %c30_212 = arith.constant 30 : index
    %c0_213 = arith.constant 0 : index
    %342 = vector.load %arg6[%c1_211, %c30_212, %c0_213] : memref<2x49x256xf32, #tpu.memory_space<vmem>>, vector<1x1x256xf32>
    %343 = vector.shape_cast %342 : vector<1x1x256xf32> to vector<1x256xf32>
    %344 = arith.mulf %337, %343 : vector<1x256xf32>
    %345 = arith.addf %341, %344 : vector<1x256xf32>
    %c240_i32 = arith.constant 240 : i32
    %346 = tpu.dynamic_rotate %33 by %c240_i32 dim 1 : vector<1x256xf32>, i32 -> vector<1x256xf32>
    %c240_i32_214 = arith.constant 240 : i32
    %347 = tpu.dynamic_rotate %36 by %c240_i32_214 dim 1 : vector<1x256xf32>, i32 -> vector<1x256xf32>
    %c0_215 = arith.constant 0 : index
    %c31 = arith.constant 31 : index
    %c0_216 = arith.constant 0 : index
    %348 = vector.load %arg6[%c0_215, %c31, %c0_216] : memref<2x49x256xf32, #tpu.memory_space<vmem>>, vector<1x1x256xf32>
    %349 = vector.shape_cast %348 : vector<1x1x256xf32> to vector<1x256xf32>
    %350 = arith.mulf %346, %349 : vector<1x256xf32>
    %351 = arith.addf %345, %350 : vector<1x256xf32>
    %c1_217 = arith.constant 1 : index
    %c31_218 = arith.constant 31 : index
    %c0_219 = arith.constant 0 : index
    %352 = vector.load %arg6[%c1_217, %c31_218, %c0_219] : memref<2x49x256xf32, #tpu.memory_space<vmem>>, vector<1x1x256xf32>
    %353 = vector.shape_cast %352 : vector<1x1x256xf32> to vector<1x256xf32>
    %354 = arith.mulf %347, %353 : vector<1x256xf32>
    %355 = arith.addf %351, %354 : vector<1x256xf32>
    %c239_i32 = arith.constant 239 : i32
    %356 = tpu.dynamic_rotate %33 by %c239_i32 dim 1 : vector<1x256xf32>, i32 -> vector<1x256xf32>
    %c239_i32_220 = arith.constant 239 : i32
    %357 = tpu.dynamic_rotate %36 by %c239_i32_220 dim 1 : vector<1x256xf32>, i32 -> vector<1x256xf32>
    %c0_221 = arith.constant 0 : index
    %c32 = arith.constant 32 : index
    %c0_222 = arith.constant 0 : index
    %358 = vector.load %arg6[%c0_221, %c32, %c0_222] : memref<2x49x256xf32, #tpu.memory_space<vmem>>, vector<1x1x256xf32>
    %359 = vector.shape_cast %358 : vector<1x1x256xf32> to vector<1x256xf32>
    %360 = arith.mulf %356, %359 : vector<1x256xf32>
    %361 = arith.addf %355, %360 : vector<1x256xf32>
    %c1_223 = arith.constant 1 : index
    %c32_224 = arith.constant 32 : index
    %c0_225 = arith.constant 0 : index
    %362 = vector.load %arg6[%c1_223, %c32_224, %c0_225] : memref<2x49x256xf32, #tpu.memory_space<vmem>>, vector<1x1x256xf32>
    %363 = vector.shape_cast %362 : vector<1x1x256xf32> to vector<1x256xf32>
    %364 = arith.mulf %357, %363 : vector<1x256xf32>
    %365 = arith.addf %361, %364 : vector<1x256xf32>
    %c238_i32 = arith.constant 238 : i32
    %366 = tpu.dynamic_rotate %33 by %c238_i32 dim 1 : vector<1x256xf32>, i32 -> vector<1x256xf32>
    %c238_i32_226 = arith.constant 238 : i32
    %367 = tpu.dynamic_rotate %36 by %c238_i32_226 dim 1 : vector<1x256xf32>, i32 -> vector<1x256xf32>
    %c0_227 = arith.constant 0 : index
    %c33 = arith.constant 33 : index
    %c0_228 = arith.constant 0 : index
    %368 = vector.load %arg6[%c0_227, %c33, %c0_228] : memref<2x49x256xf32, #tpu.memory_space<vmem>>, vector<1x1x256xf32>
    %369 = vector.shape_cast %368 : vector<1x1x256xf32> to vector<1x256xf32>
    %370 = arith.mulf %366, %369 : vector<1x256xf32>
    %371 = arith.addf %365, %370 : vector<1x256xf32>
    %c1_229 = arith.constant 1 : index
    %c33_230 = arith.constant 33 : index
    %c0_231 = arith.constant 0 : index
    %372 = vector.load %arg6[%c1_229, %c33_230, %c0_231] : memref<2x49x256xf32, #tpu.memory_space<vmem>>, vector<1x1x256xf32>
    %373 = vector.shape_cast %372 : vector<1x1x256xf32> to vector<1x256xf32>
    %374 = arith.mulf %367, %373 : vector<1x256xf32>
    %375 = arith.addf %371, %374 : vector<1x256xf32>
    %c237_i32 = arith.constant 237 : i32
    %376 = tpu.dynamic_rotate %33 by %c237_i32 dim 1 : vector<1x256xf32>, i32 -> vector<1x256xf32>
    %c237_i32_232 = arith.constant 237 : i32
    %377 = tpu.dynamic_rotate %36 by %c237_i32_232 dim 1 : vector<1x256xf32>, i32 -> vector<1x256xf32>
    %c0_233 = arith.constant 0 : index
    %c34 = arith.constant 34 : index
    %c0_234 = arith.constant 0 : index
    %378 = vector.load %arg6[%c0_233, %c34, %c0_234] : memref<2x49x256xf32, #tpu.memory_space<vmem>>, vector<1x1x256xf32>
    %379 = vector.shape_cast %378 : vector<1x1x256xf32> to vector<1x256xf32>
    %380 = arith.mulf %376, %379 : vector<1x256xf32>
    %381 = arith.addf %375, %380 : vector<1x256xf32>
    %c1_235 = arith.constant 1 : index
    %c34_236 = arith.constant 34 : index
    %c0_237 = arith.constant 0 : index
    %382 = vector.load %arg6[%c1_235, %c34_236, %c0_237] : memref<2x49x256xf32, #tpu.memory_space<vmem>>, vector<1x1x256xf32>
    %383 = vector.shape_cast %382 : vector<1x1x256xf32> to vector<1x256xf32>
    %384 = arith.mulf %377, %383 : vector<1x256xf32>
    %385 = arith.addf %381, %384 : vector<1x256xf32>
    %c227_i32 = arith.constant 227 : i32
    %386 = tpu.dynamic_rotate %33 by %c227_i32 dim 1 : vector<1x256xf32>, i32 -> vector<1x256xf32>
    %c227_i32_238 = arith.constant 227 : i32
    %387 = tpu.dynamic_rotate %36 by %c227_i32_238 dim 1 : vector<1x256xf32>, i32 -> vector<1x256xf32>
    %c0_239 = arith.constant 0 : index
    %c35 = arith.constant 35 : index
    %c0_240 = arith.constant 0 : index
    %388 = vector.load %arg6[%c0_239, %c35, %c0_240] : memref<2x49x256xf32, #tpu.memory_space<vmem>>, vector<1x1x256xf32>
    %389 = vector.shape_cast %388 : vector<1x1x256xf32> to vector<1x256xf32>
    %390 = arith.mulf %386, %389 : vector<1x256xf32>
    %391 = arith.addf %385, %390 : vector<1x256xf32>
    %c1_241 = arith.constant 1 : index
    %c35_242 = arith.constant 35 : index
    %c0_243 = arith.constant 0 : index
    %392 = vector.load %arg6[%c1_241, %c35_242, %c0_243] : memref<2x49x256xf32, #tpu.memory_space<vmem>>, vector<1x1x256xf32>
    %393 = vector.shape_cast %392 : vector<1x1x256xf32> to vector<1x256xf32>
    %394 = arith.mulf %387, %393 : vector<1x256xf32>
    %395 = arith.addf %391, %394 : vector<1x256xf32>
    %c226_i32 = arith.constant 226 : i32
    %396 = tpu.dynamic_rotate %33 by %c226_i32 dim 1 : vector<1x256xf32>, i32 -> vector<1x256xf32>
    %c226_i32_244 = arith.constant 226 : i32
    %397 = tpu.dynamic_rotate %36 by %c226_i32_244 dim 1 : vector<1x256xf32>, i32 -> vector<1x256xf32>
    %c0_245 = arith.constant 0 : index
    %c36 = arith.constant 36 : index
    %c0_246 = arith.constant 0 : index
    %398 = vector.load %arg6[%c0_245, %c36, %c0_246] : memref<2x49x256xf32, #tpu.memory_space<vmem>>, vector<1x1x256xf32>
    %399 = vector.shape_cast %398 : vector<1x1x256xf32> to vector<1x256xf32>
    %400 = arith.mulf %396, %399 : vector<1x256xf32>
    %401 = arith.addf %395, %400 : vector<1x256xf32>
    %c1_247 = arith.constant 1 : index
    %c36_248 = arith.constant 36 : index
    %c0_249 = arith.constant 0 : index
    %402 = vector.load %arg6[%c1_247, %c36_248, %c0_249] : memref<2x49x256xf32, #tpu.memory_space<vmem>>, vector<1x1x256xf32>
    %403 = vector.shape_cast %402 : vector<1x1x256xf32> to vector<1x256xf32>
    %404 = arith.mulf %397, %403 : vector<1x256xf32>
    %405 = arith.addf %401, %404 : vector<1x256xf32>
    %c225_i32 = arith.constant 225 : i32
    %406 = tpu.dynamic_rotate %33 by %c225_i32 dim 1 : vector<1x256xf32>, i32 -> vector<1x256xf32>
    %c225_i32_250 = arith.constant 225 : i32
    %407 = tpu.dynamic_rotate %36 by %c225_i32_250 dim 1 : vector<1x256xf32>, i32 -> vector<1x256xf32>
    %c0_251 = arith.constant 0 : index
    %c37 = arith.constant 37 : index
    %c0_252 = arith.constant 0 : index
    %408 = vector.load %arg6[%c0_251, %c37, %c0_252] : memref<2x49x256xf32, #tpu.memory_space<vmem>>, vector<1x1x256xf32>
    %409 = vector.shape_cast %408 : vector<1x1x256xf32> to vector<1x256xf32>
    %410 = arith.mulf %406, %409 : vector<1x256xf32>
    %411 = arith.addf %405, %410 : vector<1x256xf32>
    %c1_253 = arith.constant 1 : index
    %c37_254 = arith.constant 37 : index
    %c0_255 = arith.constant 0 : index
    %412 = vector.load %arg6[%c1_253, %c37_254, %c0_255] : memref<2x49x256xf32, #tpu.memory_space<vmem>>, vector<1x1x256xf32>
    %413 = vector.shape_cast %412 : vector<1x1x256xf32> to vector<1x256xf32>
    %414 = arith.mulf %407, %413 : vector<1x256xf32>
    %415 = arith.addf %411, %414 : vector<1x256xf32>
    %c224_i32 = arith.constant 224 : i32
    %416 = tpu.dynamic_rotate %33 by %c224_i32 dim 1 : vector<1x256xf32>, i32 -> vector<1x256xf32>
    %c224_i32_256 = arith.constant 224 : i32
    %417 = tpu.dynamic_rotate %36 by %c224_i32_256 dim 1 : vector<1x256xf32>, i32 -> vector<1x256xf32>
    %c0_257 = arith.constant 0 : index
    %c38 = arith.constant 38 : index
    %c0_258 = arith.constant 0 : index
    %418 = vector.load %arg6[%c0_257, %c38, %c0_258] : memref<2x49x256xf32, #tpu.memory_space<vmem>>, vector<1x1x256xf32>
    %419 = vector.shape_cast %418 : vector<1x1x256xf32> to vector<1x256xf32>
    %420 = arith.mulf %416, %419 : vector<1x256xf32>
    %421 = arith.addf %415, %420 : vector<1x256xf32>
    %c1_259 = arith.constant 1 : index
    %c38_260 = arith.constant 38 : index
    %c0_261 = arith.constant 0 : index
    %422 = vector.load %arg6[%c1_259, %c38_260, %c0_261] : memref<2x49x256xf32, #tpu.memory_space<vmem>>, vector<1x1x256xf32>
    %423 = vector.shape_cast %422 : vector<1x1x256xf32> to vector<1x256xf32>
    %424 = arith.mulf %417, %423 : vector<1x256xf32>
    %425 = arith.addf %421, %424 : vector<1x256xf32>
    %c223_i32 = arith.constant 223 : i32
    %426 = tpu.dynamic_rotate %33 by %c223_i32 dim 1 : vector<1x256xf32>, i32 -> vector<1x256xf32>
    %c223_i32_262 = arith.constant 223 : i32
    %427 = tpu.dynamic_rotate %36 by %c223_i32_262 dim 1 : vector<1x256xf32>, i32 -> vector<1x256xf32>
    %c0_263 = arith.constant 0 : index
    %c39 = arith.constant 39 : index
    %c0_264 = arith.constant 0 : index
    %428 = vector.load %arg6[%c0_263, %c39, %c0_264] : memref<2x49x256xf32, #tpu.memory_space<vmem>>, vector<1x1x256xf32>
    %429 = vector.shape_cast %428 : vector<1x1x256xf32> to vector<1x256xf32>
    %430 = arith.mulf %426, %429 : vector<1x256xf32>
    %431 = arith.addf %425, %430 : vector<1x256xf32>
    %c1_265 = arith.constant 1 : index
    %c39_266 = arith.constant 39 : index
    %c0_267 = arith.constant 0 : index
    %432 = vector.load %arg6[%c1_265, %c39_266, %c0_267] : memref<2x49x256xf32, #tpu.memory_space<vmem>>, vector<1x1x256xf32>
    %433 = vector.shape_cast %432 : vector<1x1x256xf32> to vector<1x256xf32>
    %434 = arith.mulf %427, %433 : vector<1x256xf32>
    %435 = arith.addf %431, %434 : vector<1x256xf32>
    %c222_i32 = arith.constant 222 : i32
    %436 = tpu.dynamic_rotate %33 by %c222_i32 dim 1 : vector<1x256xf32>, i32 -> vector<1x256xf32>
    %c222_i32_268 = arith.constant 222 : i32
    %437 = tpu.dynamic_rotate %36 by %c222_i32_268 dim 1 : vector<1x256xf32>, i32 -> vector<1x256xf32>
    %c0_269 = arith.constant 0 : index
    %c40 = arith.constant 40 : index
    %c0_270 = arith.constant 0 : index
    %438 = vector.load %arg6[%c0_269, %c40, %c0_270] : memref<2x49x256xf32, #tpu.memory_space<vmem>>, vector<1x1x256xf32>
    %439 = vector.shape_cast %438 : vector<1x1x256xf32> to vector<1x256xf32>
    %440 = arith.mulf %436, %439 : vector<1x256xf32>
    %441 = arith.addf %435, %440 : vector<1x256xf32>
    %c1_271 = arith.constant 1 : index
    %c40_272 = arith.constant 40 : index
    %c0_273 = arith.constant 0 : index
    %442 = vector.load %arg6[%c1_271, %c40_272, %c0_273] : memref<2x49x256xf32, #tpu.memory_space<vmem>>, vector<1x1x256xf32>
    %443 = vector.shape_cast %442 : vector<1x1x256xf32> to vector<1x256xf32>
    %444 = arith.mulf %437, %443 : vector<1x256xf32>
    %445 = arith.addf %441, %444 : vector<1x256xf32>
    %c221_i32 = arith.constant 221 : i32
    %446 = tpu.dynamic_rotate %33 by %c221_i32 dim 1 : vector<1x256xf32>, i32 -> vector<1x256xf32>
    %c221_i32_274 = arith.constant 221 : i32
    %447 = tpu.dynamic_rotate %36 by %c221_i32_274 dim 1 : vector<1x256xf32>, i32 -> vector<1x256xf32>
    %c0_275 = arith.constant 0 : index
    %c41 = arith.constant 41 : index
    %c0_276 = arith.constant 0 : index
    %448 = vector.load %arg6[%c0_275, %c41, %c0_276] : memref<2x49x256xf32, #tpu.memory_space<vmem>>, vector<1x1x256xf32>
    %449 = vector.shape_cast %448 : vector<1x1x256xf32> to vector<1x256xf32>
    %450 = arith.mulf %446, %449 : vector<1x256xf32>
    %451 = arith.addf %445, %450 : vector<1x256xf32>
    %c1_277 = arith.constant 1 : index
    %c41_278 = arith.constant 41 : index
    %c0_279 = arith.constant 0 : index
    %452 = vector.load %arg6[%c1_277, %c41_278, %c0_279] : memref<2x49x256xf32, #tpu.memory_space<vmem>>, vector<1x1x256xf32>
    %453 = vector.shape_cast %452 : vector<1x1x256xf32> to vector<1x256xf32>
    %454 = arith.mulf %447, %453 : vector<1x256xf32>
    %455 = arith.addf %451, %454 : vector<1x256xf32>
    %c211_i32 = arith.constant 211 : i32
    %456 = tpu.dynamic_rotate %33 by %c211_i32 dim 1 : vector<1x256xf32>, i32 -> vector<1x256xf32>
    %c211_i32_280 = arith.constant 211 : i32
    %457 = tpu.dynamic_rotate %36 by %c211_i32_280 dim 1 : vector<1x256xf32>, i32 -> vector<1x256xf32>
    %c0_281 = arith.constant 0 : index
    %c42 = arith.constant 42 : index
    %c0_282 = arith.constant 0 : index
    %458 = vector.load %arg6[%c0_281, %c42, %c0_282] : memref<2x49x256xf32, #tpu.memory_space<vmem>>, vector<1x1x256xf32>
    %459 = vector.shape_cast %458 : vector<1x1x256xf32> to vector<1x256xf32>
    %460 = arith.mulf %456, %459 : vector<1x256xf32>
    %461 = arith.addf %455, %460 : vector<1x256xf32>
    %c1_283 = arith.constant 1 : index
    %c42_284 = arith.constant 42 : index
    %c0_285 = arith.constant 0 : index
    %462 = vector.load %arg6[%c1_283, %c42_284, %c0_285] : memref<2x49x256xf32, #tpu.memory_space<vmem>>, vector<1x1x256xf32>
    %463 = vector.shape_cast %462 : vector<1x1x256xf32> to vector<1x256xf32>
    %464 = arith.mulf %457, %463 : vector<1x256xf32>
    %465 = arith.addf %461, %464 : vector<1x256xf32>
    %c210_i32 = arith.constant 210 : i32
    %466 = tpu.dynamic_rotate %33 by %c210_i32 dim 1 : vector<1x256xf32>, i32 -> vector<1x256xf32>
    %c210_i32_286 = arith.constant 210 : i32
    %467 = tpu.dynamic_rotate %36 by %c210_i32_286 dim 1 : vector<1x256xf32>, i32 -> vector<1x256xf32>
    %c0_287 = arith.constant 0 : index
    %c43 = arith.constant 43 : index
    %c0_288 = arith.constant 0 : index
    %468 = vector.load %arg6[%c0_287, %c43, %c0_288] : memref<2x49x256xf32, #tpu.memory_space<vmem>>, vector<1x1x256xf32>
    %469 = vector.shape_cast %468 : vector<1x1x256xf32> to vector<1x256xf32>
    %470 = arith.mulf %466, %469 : vector<1x256xf32>
    %471 = arith.addf %465, %470 : vector<1x256xf32>
    %c1_289 = arith.constant 1 : index
    %c43_290 = arith.constant 43 : index
    %c0_291 = arith.constant 0 : index
    %472 = vector.load %arg6[%c1_289, %c43_290, %c0_291] : memref<2x49x256xf32, #tpu.memory_space<vmem>>, vector<1x1x256xf32>
    %473 = vector.shape_cast %472 : vector<1x1x256xf32> to vector<1x256xf32>
    %474 = arith.mulf %467, %473 : vector<1x256xf32>
    %475 = arith.addf %471, %474 : vector<1x256xf32>
    %c209_i32 = arith.constant 209 : i32
    %476 = tpu.dynamic_rotate %33 by %c209_i32 dim 1 : vector<1x256xf32>, i32 -> vector<1x256xf32>
    %c209_i32_292 = arith.constant 209 : i32
    %477 = tpu.dynamic_rotate %36 by %c209_i32_292 dim 1 : vector<1x256xf32>, i32 -> vector<1x256xf32>
    %c0_293 = arith.constant 0 : index
    %c44 = arith.constant 44 : index
    %c0_294 = arith.constant 0 : index
    %478 = vector.load %arg6[%c0_293, %c44, %c0_294] : memref<2x49x256xf32, #tpu.memory_space<vmem>>, vector<1x1x256xf32>
    %479 = vector.shape_cast %478 : vector<1x1x256xf32> to vector<1x256xf32>
    %480 = arith.mulf %476, %479 : vector<1x256xf32>
    %481 = arith.addf %475, %480 : vector<1x256xf32>
    %c1_295 = arith.constant 1 : index
    %c44_296 = arith.constant 44 : index
    %c0_297 = arith.constant 0 : index
    %482 = vector.load %arg6[%c1_295, %c44_296, %c0_297] : memref<2x49x256xf32, #tpu.memory_space<vmem>>, vector<1x1x256xf32>
    %483 = vector.shape_cast %482 : vector<1x1x256xf32> to vector<1x256xf32>
    %484 = arith.mulf %477, %483 : vector<1x256xf32>
    %485 = arith.addf %481, %484 : vector<1x256xf32>
    %c208_i32 = arith.constant 208 : i32
    %486 = tpu.dynamic_rotate %33 by %c208_i32 dim 1 : vector<1x256xf32>, i32 -> vector<1x256xf32>
    %c208_i32_298 = arith.constant 208 : i32
    %487 = tpu.dynamic_rotate %36 by %c208_i32_298 dim 1 : vector<1x256xf32>, i32 -> vector<1x256xf32>
    %c0_299 = arith.constant 0 : index
    %c45 = arith.constant 45 : index
    %c0_300 = arith.constant 0 : index
    %488 = vector.load %arg6[%c0_299, %c45, %c0_300] : memref<2x49x256xf32, #tpu.memory_space<vmem>>, vector<1x1x256xf32>
    %489 = vector.shape_cast %488 : vector<1x1x256xf32> to vector<1x256xf32>
    %490 = arith.mulf %486, %489 : vector<1x256xf32>
    %491 = arith.addf %485, %490 : vector<1x256xf32>
    %c1_301 = arith.constant 1 : index
    %c45_302 = arith.constant 45 : index
    %c0_303 = arith.constant 0 : index
    %492 = vector.load %arg6[%c1_301, %c45_302, %c0_303] : memref<2x49x256xf32, #tpu.memory_space<vmem>>, vector<1x1x256xf32>
    %493 = vector.shape_cast %492 : vector<1x1x256xf32> to vector<1x256xf32>
    %494 = arith.mulf %487, %493 : vector<1x256xf32>
    %495 = arith.addf %491, %494 : vector<1x256xf32>
    %c207_i32 = arith.constant 207 : i32
    %496 = tpu.dynamic_rotate %33 by %c207_i32 dim 1 : vector<1x256xf32>, i32 -> vector<1x256xf32>
    %c207_i32_304 = arith.constant 207 : i32
    %497 = tpu.dynamic_rotate %36 by %c207_i32_304 dim 1 : vector<1x256xf32>, i32 -> vector<1x256xf32>
    %c0_305 = arith.constant 0 : index
    %c46 = arith.constant 46 : index
    %c0_306 = arith.constant 0 : index
    %498 = vector.load %arg6[%c0_305, %c46, %c0_306] : memref<2x49x256xf32, #tpu.memory_space<vmem>>, vector<1x1x256xf32>
    %499 = vector.shape_cast %498 : vector<1x1x256xf32> to vector<1x256xf32>
    %500 = arith.mulf %496, %499 : vector<1x256xf32>
    %501 = arith.addf %495, %500 : vector<1x256xf32>
    %c1_307 = arith.constant 1 : index
    %c46_308 = arith.constant 46 : index
    %c0_309 = arith.constant 0 : index
    %502 = vector.load %arg6[%c1_307, %c46_308, %c0_309] : memref<2x49x256xf32, #tpu.memory_space<vmem>>, vector<1x1x256xf32>
    %503 = vector.shape_cast %502 : vector<1x1x256xf32> to vector<1x256xf32>
    %504 = arith.mulf %497, %503 : vector<1x256xf32>
    %505 = arith.addf %501, %504 : vector<1x256xf32>
    %c206_i32 = arith.constant 206 : i32
    %506 = tpu.dynamic_rotate %33 by %c206_i32 dim 1 : vector<1x256xf32>, i32 -> vector<1x256xf32>
    %c206_i32_310 = arith.constant 206 : i32
    %507 = tpu.dynamic_rotate %36 by %c206_i32_310 dim 1 : vector<1x256xf32>, i32 -> vector<1x256xf32>
    %c0_311 = arith.constant 0 : index
    %c47 = arith.constant 47 : index
    %c0_312 = arith.constant 0 : index
    %508 = vector.load %arg6[%c0_311, %c47, %c0_312] : memref<2x49x256xf32, #tpu.memory_space<vmem>>, vector<1x1x256xf32>
    %509 = vector.shape_cast %508 : vector<1x1x256xf32> to vector<1x256xf32>
    %510 = arith.mulf %506, %509 : vector<1x256xf32>
    %511 = arith.addf %505, %510 : vector<1x256xf32>
    %c1_313 = arith.constant 1 : index
    %c47_314 = arith.constant 47 : index
    %c0_315 = arith.constant 0 : index
    %512 = vector.load %arg6[%c1_313, %c47_314, %c0_315] : memref<2x49x256xf32, #tpu.memory_space<vmem>>, vector<1x1x256xf32>
    %513 = vector.shape_cast %512 : vector<1x1x256xf32> to vector<1x256xf32>
    %514 = arith.mulf %507, %513 : vector<1x256xf32>
    %515 = arith.addf %511, %514 : vector<1x256xf32>
    %c205_i32 = arith.constant 205 : i32
    %516 = tpu.dynamic_rotate %33 by %c205_i32 dim 1 : vector<1x256xf32>, i32 -> vector<1x256xf32>
    %c205_i32_316 = arith.constant 205 : i32
    %517 = tpu.dynamic_rotate %36 by %c205_i32_316 dim 1 : vector<1x256xf32>, i32 -> vector<1x256xf32>
    %c0_317 = arith.constant 0 : index
    %c48 = arith.constant 48 : index
    %c0_318 = arith.constant 0 : index
    %518 = vector.load %arg6[%c0_317, %c48, %c0_318] : memref<2x49x256xf32, #tpu.memory_space<vmem>>, vector<1x1x256xf32>
    %519 = vector.shape_cast %518 : vector<1x1x256xf32> to vector<1x256xf32>
    %520 = arith.mulf %516, %519 : vector<1x256xf32>
    %521 = arith.addf %515, %520 : vector<1x256xf32>
    %c1_319 = arith.constant 1 : index
    %c48_320 = arith.constant 48 : index
    %c0_321 = arith.constant 0 : index
    %522 = vector.load %arg6[%c1_319, %c48_320, %c0_321] : memref<2x49x256xf32, #tpu.memory_space<vmem>>, vector<1x1x256xf32>
    %523 = vector.shape_cast %522 : vector<1x1x256xf32> to vector<1x256xf32>
    %524 = arith.mulf %517, %523 : vector<1x256xf32>
    %525 = arith.addf %521, %524 : vector<1x256xf32>
    %c0_322 = arith.constant 0 : index
    %526 = memref.load %arg1[%c0_322] : memref<2xf32, #tpu.memory_space<smem>>
    %527 = vector.broadcast %526 : f32 to vector<1x256xf32>
    %528 = arith.mulf %525, %527 : vector<1x256xf32>
    %c1_323 = arith.constant 1 : index
    %529 = memref.load %arg1[%c1_323] : memref<2xf32, #tpu.memory_space<smem>>
    %530 = vector.broadcast %529 : f32 to vector<1x256xf32>
    %531 = arith.addf %528, %530 : vector<1x256xf32>
    %cst_324 = arith.constant 0.000000e+00 : f32
    %532 = vector.broadcast %cst_324 : f32 to vector<1x256xf32>
    %533 = arith.subf %532, %531 : vector<1x256xf32>
    %534 = math.exp %533 : vector<1x256xf32>
    %cst_325 = arith.constant 1.000000e+00 : f32
    %535 = vector.broadcast %cst_325 : f32 to vector<1x256xf32>
    %536 = arith.addf %535, %534 : vector<1x256xf32>
    %cst_326 = arith.constant 1.000000e+00 : f32
    %537 = vector.broadcast %cst_326 : f32 to vector<1x256xf32>
    %538 = arith.divf %537, %536 : vector<1x256xf32>
    %c0_327 = arith.constant 0 : index
    %c0_328 = arith.constant 0 : index
    %c0_329 = arith.constant 0 : index
    %539 = vector.load %arg9[%c0_327, %c0_328, %c0_329] : memref<1x32x256xf32, #tpu.memory_space<vmem>>, vector<1x32x256xf32>
    %540 = vector.shape_cast %538 : vector<1x256xf32> to vector<1x1x256xf32>
    %541 = vector.broadcast %540 : vector<1x1x256xf32> to vector<1x32x256xf32>
    %542 = arith.mulf %539, %541 : vector<1x32x256xf32>
    %c0_330 = arith.constant 0 : index
    %c0_331 = arith.constant 0 : index
    %c0_332 = arith.constant 0 : index
    %543 = vector.load %arg8[%c0_330, %c0_331, %c0_332] : memref<1x32x256xf32, #tpu.memory_space<vmem>>, vector<1x32x256xf32>
    tpu.vector_store %arg8[%c0_330, %c0_331, %c0_332], %542 {strides = array<i32>} : memref<1x32x256xf32, #tpu.memory_space<vmem>>, vector<1x32x256xf32>,
    return
  }
  func.func @transform_0(%arg0: i32) -> i32 {
    %c0_i32 = arith.constant 0 : i32
    %c0_i32_0 = arith.constant 0 : i32
    return %c0_i32 : i32
  }
  func.func @transform_1(%arg0: i32) -> (i32, i32) {
    %c0_i32 = arith.constant 0 : i32
    %c0_i32_0 = arith.constant 0 : i32
    %c0_i32_1 = arith.constant 0 : i32
    return %c0_i32, %c0_i32_0 : i32, i32
  }
  func.func @transform_2(%arg0: i32) -> (i32, i32) {
    %c0_i32 = arith.constant 0 : i32
    %c0_i32_0 = arith.constant 0 : i32
    %c0_i32_1 = arith.constant 0 : i32
    return %c0_i32, %c0_i32_0 : i32, i32
  }
  func.func @transform_3(%arg0: i32) -> (i32, i32) {
    %c0_i32 = arith.constant 0 : i32
    %c0_i32_0 = arith.constant 0 : i32
    %c0_i32_1 = arith.constant 0 : i32
    return %c0_i32, %c0_i32_0 : i32, i32
  }
  func.func @transform_4(%arg0: i32) -> (i32, i32) {
    %c0_i32 = arith.constant 0 : i32
    %c0_i32_0 = arith.constant 0 : i32
    %c0_i32_1 = arith.constant 0 : i32
    return %c0_i32, %c0_i32_0 : i32, i32
  }
  func.func @transform_5(%arg0: i32) -> (i32, i32, i32) {
    %c0_i32 = arith.constant 0 : i32
    %c0_i32_0 = arith.constant 0 : i32
    %c0_i32_1 = arith.constant 0 : i32
    %c0_i32_2 = arith.constant 0 : i32
    return %c0_i32, %c0_i32_0, %c0_i32_1 : i32, i32, i32
  }
  func.func @transform_6(%arg0: i32) -> (i32, i32, i32) {
    %c0_i32 = arith.constant 0 : i32
    %c0_i32_0 = arith.constant 0 : i32
    %c0_i32_1 = arith.constant 0 : i32
    return %arg0, %c0_i32, %c0_i32_0 : i32, i32, i32
  }
  func.func @transform_7(%arg0: i32) -> (i32, i32, i32) {
    %c0_i32 = arith.constant 0 : i32
    %c0_i32_0 = arith.constant 0 : i32
    %c0_i32_1 = arith.constant 0 : i32
    return %arg0, %c0_i32, %c0_i32_0 : i32, i32, i32
  }
}

</mosaic_0001>

<llo_original>
// kernel: tpu_custom_call.1
$region0: #{tpu_custom_call.1}
  #allocation0 [shape = 'u32[]', space=smem, size = 0x4, offset = 0x4, fixed_abs, tag = 'smem constant byte address 0x4 - core index']
  #allocation1 [shape = 'u32[144,128]{1,0:T(1,128)}', space=vmem, size = 0x12000, scoped, tag = 'internal scratch']
  #allocation2 [shape = 'f32[1,32,256]{2,1,0:T(8,128)}', space=vmem, size = 0x8000, scoped, tag = 'scratch operand']
  %s0 = inlined_call_operand.vmem [shape: f32[2], index: 0, kind: input, shape index: {}]
  %s1 = inlined_call_operand.vmem [shape: f32[32,2], index: 1, kind: input, shape index: {}]
  %s2 = inlined_call_operand.vmem [shape: f32[1,2], index: 2, kind: input, shape index: {}]
  %s3 = inlined_call_operand.vmem [shape: f32[2,32], index: 3, kind: input, shape index: {}]
  %s4 = inlined_call_operand.vmem [shape: f32[1,32], index: 4, kind: input, shape index: {}]
  %s5 = inlined_call_operand.vmem [shape: f32[2,49,256], index: 5, kind: input, shape index: {}]
  %s6 = inlined_call_operand.vmem [shape: f32[2,32,256], index: 6, kind: input, shape index: {}]
  %s7 = inlined_call_operand.hbm [shape: f32[2,32,256], index: 7, kind: output, shape index: {}]
  %s8 = sld [smem:[#allocation0]]
  $region65: #{tpu_custom_call.1} parent=0
    _
  %s10 = ssub.s32 1, %s8
  %s11 = scalar_select 0, %s10, %s8
  $region1: #{tpu_custom_call.1} parent=0
    #allocation3 [shape = 'u8[512]{0}', space=smem, size = 0x200, scoped, tag = 'input window, operand 0, single buffered']
    #allocation4 [shape = 's32[2]{0}', space=sflag, size = 0x8, scoped, tag = 'scoped memory for tpu_custom_call.1']
    #allocation5 [shape = 's32[2]{0}', space=sflag, size = 0x8, scoped, tag = 'scoped memory for tpu_custom_call.1']
    #allocation6 [shape = 'u8[65536]{0}', space=vmem, size = 0x10000, scoped, tag = 'output window, operand 0']
    %12 = vsyncpa [#allocation5], 0
    %13 = vsyncpa [#allocation4], 0
    %s14 = scalar_lea.sflag [#allocation4], 1
    %15 = vsyncpa %s14, 0
    loop: start=0, step=1, limit=4
    $region2: #{tpu_custom_call.1} parent=1 // loop_pre_header
      _
    $region3: #{tpu_custom_call.1} parent=1 // loop_header
      %s17 = sphi 0, %s21
      %p18 = scmp.ge.s32.totalorder %s17, 4
      %s25 = sphi 0, %s25
      %s27 = sphi 0, %s25
      %s28 = sphi 0, %s27
      %s42 = sphi 0, %s28
      %s46 = sphi 0, %s46
      %s48 = sphi 0, %s46
      %s49 = sphi 0, %s48
      %s63 = sphi 0, %s49
      %s67 = sphi 0, %s67
      %s69 = sphi 0, %s67
      %s70 = sphi 0, %s69
      %s84 = sphi 0, %s70
      %s88 = sphi 0, %s88
      %s90 = sphi 0, %s88
      %s91 = sphi 0, %s90
      %s105 = sphi 0, %s91
      %s109 = sphi 0, %s109
      %s111 = sphi 0, %s109
      %s112 = sphi 0, %s111
      %s126 = sphi 0, %s112
      %s130 = sphi 0, %s130
      %s132 = sphi 0, %s130
      %s133 = sphi 0, %s132
      %s147 = sphi 0, %s133
      %s153 = sphi 0, %s155
      %s156 = sphi 0, %s153
      %s157 = sphi 0, %s156
      %s173 = sphi 0, %s157
      %s179 = sphi 0, %s181
      %s182 = sphi 0, %s179
      %s183 = sphi 0, %s182
      %s199 = sphi 0, %s183
    $region4: #{tpu_custom_call.1} parent=1 // loop_header_branch
      %20 = sbr.rel (%p18) target = $region8
    $region5: #{tpu_custom_call.1} parent=1 // loop_body
      %s22 = ssub.s32 %s17, 1
      %s23 = ssub.s32 %s17, 2
      %s24 = sadd.s32 %s17, 1
      %s26 = sadd.s32 %s25, 1
      %p29 = scmp.eq.s32.totalorder %s17, 1
      %p30 = scmp.ne.s32.totalorder %s25, %s27
      %p31 = scmp.eq.s32.totalorder %s17, 0
      %p32 = por %p30, %p31
      %p33 = scmp.ne.s32.totalorder %s25, %s27
      %p34 = scmp.eq.s32.totalorder %s22, 1
      %p35 = por %p33, %p34
      %p36 = scmp.ne.s32.totalorder %s27, %s28
      %p37 = scmp.eq.s32.totalorder %s22, 0
      %p38 = por %p36, %p37
      %p39 = scmp.ne.s32.totalorder %s27, %s28
      %p40 = scmp.eq.s32.totalorder %s23, 1
      %p41 = por %p39, %p40
      %p43 = scmp.ne.s32.totalorder %s28, %s42
      %p44 = scmp.eq.s32.totalorder %s23, 0
      %p45 = por %p43, %p44
      %s47 = sadd.s32 %s46, 1
      %p50 = scmp.eq.s32.totalorder %s17, 1
      %p51 = scmp.ne.s32.totalorder %s46, %s48
      %p52 = scmp.eq.s32.totalorder %s17, 0
      %p53 = por %p51, %p52
      %p54 = scmp.ne.s32.totalorder %s46, %s48
      %p55 = scmp.eq.s32.totalorder %s22, 1
      %p56 = por %p54, %p55
      %p57 = scmp.ne.s32.totalorder %s48, %s49
      %p58 = scmp.eq.s32.totalorder %s22, 0
      %p59 = por %p57, %p58
      %p60 = scmp.ne.s32.totalorder %s48, %s49
      %p61 = scmp.eq.s32.totalorder %s23, 1
      %p62 = por %p60, %p61
      %p64 = scmp.ne.s32.totalorder %s49, %s63
      %p65 = scmp.eq.s32.totalorder %s23, 0
      %p66 = por %p64, %p65
      %s68 = sadd.s32 %s67, 1
      %p71 = scmp.eq.s32.totalorder %s17, 1
      %p72 = scmp.ne.s32.totalorder %s67, %s69
      %p73 = scmp.eq.s32.totalorder %s17, 0
      %p74 = por %p72, %p73
      %p75 = scmp.ne.s32.totalorder %s67, %s69
      %p76 = scmp.eq.s32.totalorder %s22, 1
      %p77 = por %p75, %p76
      %p78 = scmp.ne.s32.totalorder %s69, %s70
      %p79 = scmp.eq.s32.totalorder %s22, 0
      %p80 = por %p78, %p79
      %p81 = scmp.ne.s32.totalorder %s69, %s70
      %p82 = scmp.eq.s32.totalorder %s23, 1
      %p83 = por %p81, %p82
      %p85 = scmp.ne.s32.totalorder %s70, %s84
      %p86 = scmp.eq.s32.totalorder %s23, 0
      %p87 = por %p85, %p86
      %s89 = sadd.s32 %s88, 1
      %p92 = scmp.eq.s32.totalorder %s17, 1
      %p93 = scmp.ne.s32.totalorder %s88, %s90
      %p94 = scmp.eq.s32.totalorder %s17, 0
      %p95 = por %p93, %p94
      %p96 = scmp.ne.s32.totalorder %s88, %s90
      %p97 = scmp.eq.s32.totalorder %s22, 1
      %p98 = por %p96, %p97
      %p99 = scmp.ne.s32.totalorder %s90, %s91
      %p100 = scmp.eq.s32.totalorder %s22, 0
      %p101 = por %p99, %p100
      %p102 = scmp.ne.s32.totalorder %s90, %s91
      %p103 = scmp.eq.s32.totalorder %s23, 1
      %p104 = por %p102, %p103
      %p106 = scmp.ne.s32.totalorder %s91, %s105
      %p107 = scmp.eq.s32.totalorder %s23, 0
      %p108 = por %p106, %p107
      %s110 = sadd.s32 %s109, 1
      %p113 = scmp.eq.s32.totalorder %s17, 1
      %p114 = scmp.ne.s32.totalorder %s109, %s111
      %p115 = scmp.eq.s32.totalorder %s17, 0
      %p116 = por %p114, %p115
      %p117 = scmp.ne.s32.totalorder %s109, %s111
      %p118 = scmp.eq.s32.totalorder %s22, 1
      %p119 = por %p117, %p118
      %p120 = scmp.ne.s32.totalorder %s111, %s112
      %p121 = scmp.eq.s32.totalorder %s22, 0
      %p122 = por %p120, %p121
      %p123 = scmp.ne.s32.totalorder %s111, %s112
      %p124 = scmp.eq.s32.totalorder %s23, 1
      %p125 = por %p123, %p124
      %p127 = scmp.ne.s32.totalorder %s112, %s126
      %p128 = scmp.eq.s32.totalorder %s23, 0
      %p129 = por %p127, %p128
      %s131 = sadd.s32 %s130, 1
      %p134 = scmp.eq.s32.totalorder %s17, 1
      %p135 = scmp.ne.s32.totalorder %s130, %s132
      %p136 = scmp.eq.s32.totalorder %s17, 0
      %p137 = por %p135, %p136
      %p138 = scmp.ne.s32.totalorder %s130, %s132
      %p139 = scmp.eq.s32.totalorder %s22, 1
      %p140 = por %p138, %p139
      %p141 = scmp.ne.s32.totalorder %s132, %s133
      %p142 = scmp.eq.s32.totalorder %s22, 0
      %p143 = por %p141, %p142
      %p144 = scmp.ne.s32.totalorder %s132, %s133
      %p145 = scmp.eq.s32.totalorder %s23, 1
      %p146 = por %p144, %p145
      %p148 = scmp.ne.s32.totalorder %s133, %s147
      %p149 = scmp.eq.s32.totalorder %s23, 0
      %p150 = por %p148, %p149
      %s151 = ssub.s32 %s17, %s24
      %p152 = scmp.eq.s32.totalorder %s151, 0
      %s154 = sadd.s32 %s153, 1
      %s155 = scalar_select %p152, %s153, %s154
      %p158 = pneg %p152
      %p159 = scmp.eq.s32.totalorder %s17, 1
      %p160 = por %p158, %p159
      %p161 = scmp.ne.s32.totalorder %s153, %s156
      %p162 = scmp.eq.s32.totalorder %s17, 0
      %p163 = por %p161, %p162
      %p164 = scmp.ne.s32.totalorder %s153, %s156
      %p165 = scmp.eq.s32.totalorder %s22, 1
      %p166 = por %p164, %p165
      %p167 = scmp.ne.s32.totalorder %s156, %s157
      %p168 = scmp.eq.s32.totalorder %s22, 0
      %p169 = por %p167, %p168
      %p170 = scmp.ne.s32.totalorder %s156, %s157
      %p171 = scmp.eq.s32.totalorder %s23, 1
      %p172 = por %p170, %p171
      %p174 = scmp.ne.s32.totalorder %s157, %s173
      %p175 = scmp.eq.s32.totalorder %s23, 0
      %p176 = por %p174, %p175
      %s177 = ssub.s32 %s17, %s24
      %p178 = scmp.eq.s32.totalorder %s177, 0
      %s180 = sadd.s32 %s179, 1
      %s181 = scalar_select %p178, %s179, %s180
      %p184 = pneg %p178
      %p185 = scmp.eq.s32.totalorder %s17, 1
      %p186 = por %p184, %p185
      %p187 = scmp.ne.s32.totalorder %s179, %s182
      %p188 = scmp.eq.s32.totalorder %s17, 0
      %p189 = por %p187, %p188
      %p190 = scmp.ne.s32.totalorder %s179, %s182
      %p191 = scmp.eq.s32.totalorder %s22, 1
      %p192 = por %p190, %p191
      %p193 = scmp.ne.s32.totalorder %s182, %s183
      %p194 = scmp.eq.s32.totalorder %s22, 0
      %p195 = por %p193, %p194
      %p196 = scmp.ne.s32.totalorder %s182, %s183
      %p197 = scmp.eq.s32.totalorder %s23, 1
      %p198 = por %p196, %p197
      %p200 = scmp.ne.s32.totalorder %s183, %s199
      %p201 = scmp.eq.s32.totalorder %s23, 0
      %p202 = por %p200, %p201
      %p203 = scmp.le.s32.totalorder 1, %s17
      %p204 = scmp.lt.s32.totalorder %s17, 3
      %p205 = pnand %p203, %p204
      %p206 = pneg %p205
      // Predicated region
      $region9: #{tpu_custom_call.1} parent=5 // pred_check
        _
      $region10: #{tpu_custom_call.1} parent=5 // pred_check_branch
        %208 = sbr.rel (%p205) target = $region12
      $region11: #{tpu_custom_call.1} parent=5 // pred_region
        %s209 = ssub.s32 %s17, 1
        // Predicated region
        $region13: #{tpu_custom_call.1} parent=11 // pred_check
          %p210 = pneg %p38
        $region14: #{tpu_custom_call.1} parent=11 // pred_check_branch
          %212 = sbr.rel (%p210) target = $region16
        $region15: #{tpu_custom_call.1} parent=11 // pred_region
          %s214 = ssub.s32 16, 16
          %215 = vsyncadd [#allocation5], %s214
          %s217 = sshll.u32 %s0, 4
          %s218 = int_to_ptr.vmem [resolvable:$true] %s217
          %220 = dma.vmem_to_smem %s218, 16, [#allocation3], [#allocation5]
        $region16: #{tpu_custom_call.1} parent=11 // pred_fallthru
          _
        // Predicated region
        $region17: #{tpu_custom_call.1} parent=11 // pred_check
          %p221 = pneg %p59
        $region18: #{tpu_custom_call.1} parent=11 // pred_check_branch
          %223 = sbr.rel (%p221) target = $region20
        $region19: #{tpu_custom_call.1} parent=11 // pred_region
          _
        $region20: #{tpu_custom_call.1} parent=11 // pred_fallthru
          _
        // Predicated region
        $region21: #{tpu_custom_call.1} parent=11 // pred_check
          %p224 = pneg %p80
        $region22: #{tpu_custom_call.1} parent=11 // pred_check_branch
          %226 = sbr.rel (%p224) target = $region24
        $region23: #{tpu_custom_call.1} parent=11 // pred_region
          _
        $region24: #{tpu_custom_call.1} parent=11 // pred_fallthru
          _
        // Predicated region
        $region25: #{tpu_custom_call.1} parent=11 // pred_check
          %p227 = pneg %p101
        $region26: #{tpu_custom_call.1} parent=11 // pred_check_branch
          %229 = sbr.rel (%p227) target = $region28
        $region27: #{tpu_custom_call.1} parent=11 // pred_region
          _
        $region28: #{tpu_custom_call.1} parent=11 // pred_fallthru
          _
        // Predicated region
        $region29: #{tpu_custom_call.1} parent=11 // pred_check
          %p230 = pneg %p122
        $region30: #{tpu_custom_call.1} parent=11 // pred_check_branch
          %232 = sbr.rel (%p230) target = $region32
        $region31: #{tpu_custom_call.1} parent=11 // pred_region
          _
        $region32: #{tpu_custom_call.1} parent=11 // pred_fallthru
          _
        // Predicated region
        $region33: #{tpu_custom_call.1} parent=11 // pred_check
          %p233 = pneg %p143
        $region34: #{tpu_custom_call.1} parent=11 // pred_check_branch
          %235 = sbr.rel (%p233) target = $region36
        $region35: #{tpu_custom_call.1} parent=11 // pred_region
          _
        $region36: #{tpu_custom_call.1} parent=11 // pred_fallthru
          _
      $region12: #{tpu_custom_call.1} parent=5 // pred_fallthru
        _
      %p236 = scmp.lt.s32.totalorder %s17, 2
      // Predicated region
      $region37: #{tpu_custom_call.1} parent=5 // pred_check
        %p237 = pneg %p236
      $region38: #{tpu_custom_call.1} parent=5 // pred_check_branch
        %239 = sbr.rel (%p237) target = $region40
      $region39: #{tpu_custom_call.1} parent=5 // pred_region
        // Predicated region
        $region41: #{tpu_custom_call.1} parent=39 // pred_check
          %p240 = pneg %p163
        $region42: #{tpu_custom_call.1} parent=39 // pred_check_branch
          %242 = sbr.rel (%p240) target = $region44
        $region43: #{tpu_custom_call.1} parent=39 // pred_region
          %p243 = scmp.lt.s32.totalorder %s17, 1
          %s244 = scalar_select %p243, %s17, 1
          %s245 = smul.addr %s244, 8
          %s246 = smul.addr %s245, 8
          %s247 = scalar_lea.vmem %s6, %s246
        $region44: #{tpu_custom_call.1} parent=39 // pred_fallthru
          _
      $region40: #{tpu_custom_call.1} parent=5 // pred_fallthru
        _
      %p248 = scmp.le.s32.totalorder 1, %s17
      %p249 = scmp.lt.s32.totalorder %s17, 3
      %p250 = pnand %p248, %p249
      %p251 = pneg %p250
      // Predicated region
      $region45: #{tpu_custom_call.1} parent=5 // pred_check
        _
      $region46: #{tpu_custom_call.1} parent=5 // pred_check_branch
        %253 = sbr.rel (%p250) target = $region48
      $region47: #{tpu_custom_call.1} parent=5 // pred_region
        %s254 = ssub.s32 %s17, 1
        // Predicated region
        $region49: #{tpu_custom_call.1} parent=47 // pred_check
          %p255 = pneg %p38
        $region50: #{tpu_custom_call.1} parent=47 // pred_check_branch
          %257 = sbr.rel (%p255) target = $region52
        $region51: #{tpu_custom_call.1} parent=47 // pred_region
          %258 = dma.done [#allocation5], 16
        $region52: #{tpu_custom_call.1} parent=47 // pred_fallthru
          _
        %259 = sfence
        %p260 = pneg %p38
        %p261 = pneg %p35
        %p262 = pneg %p59
        %p263 = pneg %p56
        %p264 = pneg %p80
        %p265 = pneg %p77
        %p266 = pneg %p101
        %p267 = pneg %p98
        %p268 = pneg %p122
        %p269 = pneg %p119
        %p270 = pneg %p143
        %p271 = pneg %p140
        %p272 = scmp.lt.s32.totalorder %s22, 1
        %s273 = scalar_select %p272, %s22, 1
        %s274 = smul.addr %s273, 8
        %s275 = smul.addr %s274, 8
        %s276 = scalar_lea.vmem %s6, %s275
        %p277 = pneg %p169
        %p278 = pneg %p166
        %p279 = pneg %p195
        %p280 = pneg %p192
        %s281 = sand.u32 %s182, 1
        %s282 = scalar_lea.sflag [#allocation4], %s281
        %s283 = sand.u32 %s182, 1
        %s284 = smul.addr %s283, 64
        %s285 = scalar_lea.vmem [#allocation6], %s284
        %p286 = scmp.lt.s32.totalorder %s22, 1
        %s287 = scalar_select %p286, %s22, 1
        %s288 = smul.addr %s287, 8
        %s289 = smul.addr %s288, 8
        %s290 = scalar_lea.vmem %s6, %s289
        %v291 = vld [vmem:[%s290] sm:$0xff]
        %v292 = vld [vmem:[%s290 + $0x8] sm:$0xff]
        %v293 = vld [vmem:[%s290 + $0x10] sm:$0xff]
        %v294 = vld [vmem:[%s290 + $0x18] sm:$0xff]
        %v295 = vld [vmem:[%s290 + $0x20] sm:$0xff]
        %v296 = vld [vmem:[%s290 + $0x28] sm:$0xff]
        %v297 = vld [vmem:[%s290 + $0x30] sm:$0xff]
        %v298 = vld [vmem:[%s290 + $0x38] sm:$0xff]
        %v299 = vadd.f32 %v291, %v292
        %300 = vadd.xlane.f32.xlu0 %v299
        %v301 = vpop.xlane.xlu0 %300
        %v302 = vadd.f32 %v293, %v294
        %303 = vadd.xlane.f32.xlu0 %v302
        %v304 = vpop.xlane.xlu0 %303
        %v305 = vadd.f32 %v295, %v296
        %306 = vadd.xlane.f32.xlu0 %v305
        %v307 = vpop.xlane.xlu0 %306
        %v308 = vadd.f32 %v297, %v298
        %309 = vadd.xlane.f32.xlu0 %v308
        %v310 = vpop.xlane.xlu0 %309
        %v311 = vrcp.pop 256.0
        %v312 = vmul.f32 %v301, %v311
        %v313 = vmul.f32 %v304, %v311
        %v314 = vmul.f32 %v307, %v311
        %v315 = vmul.f32 %v310, %v311
        %v316 = vmax.f32 %v291, %v292
        %317 = vmax.xlane.f32.xlu0 %v316
        %v318 = vpop.xlane.xlu0 %317
        %v319 = vmax.f32 %v293, %v294
        %320 = vmax.xlane.f32.xlu0 %v319
        %v321 = vpop.xlane.xlu0 %320
        %v322 = vmax.f32 %v295, %v296
        %323 = vmax.xlane.f32.xlu0 %v322
        %v324 = vpop.xlane.xlu0 %323
        %v325 = vmax.f32 %v297, %v298
        %326 = vmax.xlane.f32.xlu0 %v325
        %v327 = vpop.xlane.xlu0 %326
        %v332 = vlaneseq
        %v333 = vand.u32 %v332, 127
        %v334 = vlaneseq
        %v335 = vshrl.u32 %v334, 7
        %v336 = vsub.s32 %v333, %v335
        %v337 = vrot.slane %v312, %v336
        %v338 = vadd.s32 %v333, 4294967288
        %v339 = vlaneseq
        %v340 = vshrl.u32 %v339, 7
        %v341 = vsub.s32 %v338, %v340
        %v342 = vrot.slane %v313, %v341
        %vm343 = vcmask 130112
        %v344 = vsel %vm343, %v342, %v337
        %v345 = vadd.s32 %v333, 4294967280
        %v346 = vlaneseq
        %v347 = vshrl.u32 %v346, 7
        %v348 = vsub.s32 %v345, %v347
        %v349 = vrot.slane %v314, %v348
        %vm350 = vcmask 195712
        %v351 = vsel %vm350, %v349, %v344
        %v352 = vadd.s32 %v333, 4294967272
        %v353 = vlaneseq
        %v354 = vshrl.u32 %v353, 7
        %v355 = vsub.s32 %v352, %v354
        %v356 = vrot.slane %v315, %v355
        %vm357 = vcmask 261312
        %v358 = vsel %vm357, %v356, %v351
        %v364 = vlaneseq
        %v365 = vshrl.u32 %v364, 7
        %v366 = vsub.s32 %v333, %v365
        %v367 = vrot.slane %v318, %v366
        %v368 = vlaneseq
        %v369 = vshrl.u32 %v368, 7
        %v370 = vsub.s32 %v338, %v369
        %v371 = vrot.slane %v321, %v370
        %v372 = vsel %vm343, %v371, %v367
        %v373 = vlaneseq
        %v374 = vshrl.u32 %v373, 7
        %v375 = vsub.s32 %v345, %v374
        %v376 = vrot.slane %v324, %v375
        %v377 = vsel %vm350, %v376, %v372
        %v378 = vlaneseq
        %v379 = vshrl.u32 %v378, 7
        %v380 = vsub.s32 %v352, %v379
        %v381 = vrot.slane %v327, %v380
        %v382 = vsel %vm357, %v381, %v377
        %vm384 = vcmask 1040384
        %v385 = vsel %vm384, %v358, %v382
        %v386 = vld [vmem:[%s1] sm:$0xff]
        %v387 = vld [vmem:[%s1 + $0x8] sm:$0xff]
        %v388 = vld [vmem:[%s1 + $0x10] sm:$0xff]
        %v389 = vld [vmem:[%s1 + $0x18] sm:$0xff]
        %v390 = vld [vmem:[%s2] sm:$0x1]
        %v392 = vlaneseq
        %v393 = vshrl.u32 %v392, 7
        %v394 = vsub.s32 0, %v393
        %v395 = vrot.slane %v390, %v394
        %vm397 = vcmask 261120
        %v399 = vsel %vm397, %v385, 0
        %401 = vmatprep.subr.mxu0 0.0
        %402 = vmatpush1.msra.mxu0 0.0
        %403 = vmatprep.subr.mxu0 0.0
        %404 = vmatpush1.msra.mxu0 0.0
        %405 = vmatprep.subr.mxu0 0.0
        %406 = vmatpush1.msra.mxu0 0.0
        %407 = vmatprep.subr.mxu0 0.0
        %408 = vmatpush1.msra.mxu0 0.0
        %409 = vmatprep.subr.mxu0 0.0
        %410 = vmatpush1.msra.mxu0 0.0
        %411 = vmatprep.subr.mxu0 0.0
        %412 = vmatpush1.msra.mxu0 0.0
        %413 = vmatprep.subr.mxu0 0.0
        %414 = vmatpush1.msra.mxu0 0.0
        %415 = vmatprep.subr.mxu0 0.0
        %416 = vmatpush1.msra.mxu0 0.0
        %417 = vmatprep.subr.mxu0 0.0
        %418 = vmatpush1.msra.mxu0 0.0
        %419 = vmatprep.subr.mxu0 0.0
        %420 = vmatpush1.msra.mxu0 0.0
        %421 = vmatprep.subr.mxu0 0.0
        %422 = vmatpush1.msra.mxu0 0.0
        %423 = vmatprep.subr.mxu0 0.0
        %424 = vmatpush1.msra.mxu0 0.0
        %425 = vmatprep.subr.mxu0 0.0
        %v426 = vand.u32 %v389, 4294901760
        %427 = vmatpush1.msra.mxu0 %v426
        %428 = vmatprep.subr.mxu0 0.0
        %v429 = vand.u32 %v388, 4294901760
        %430 = vmatpush1.msra.mxu0 %v429
        %431 = vmatprep.subr.mxu0 0.0
        %v432 = vand.u32 %v387, 4294901760
        %433 = vmatpush1.msra.mxu0 %v432
        %434 = vmatprep.subr.mxu0 0.0
        %v435 = vand.u32 %v386, 4294901760
        %436 = vmatpush1.msra.mxu0 %v435
        %437 = vmatprep.subr.mxu0 0.0
        %438 = vmatpush2.msra.mxu0 0.0
        %439 = vmatprep.subr.mxu0 0.0
        %440 = vmatpush2.msra.mxu0 0.0
        %441 = vmatprep.subr.mxu0 0.0
        %442 = vmatpush2.msra.mxu0 0.0
        %443 = vmatprep.subr.mxu0 0.0
        %444 = vmatpush2.msra.mxu0 0.0
        %445 = vmatprep.subr.mxu0 0.0
        %446 = vmatpush2.msra.mxu0 0.0
        %447 = vmatprep.subr.mxu0 0.0
        %448 = vmatpush2.msra.mxu0 0.0
        %449 = vmatprep.subr.mxu0 0.0
        %450 = vmatpush2.msra.mxu0 0.0
        %451 = vmatprep.subr.mxu0 0.0
        %452 = vmatpush2.msra.mxu0 0.0
        %453 = vmatprep.subr.mxu0 0.0
        %454 = vmatpush2.msra.mxu0 0.0
        %455 = vmatprep.subr.mxu0 0.0
        %456 = vmatpush2.msra.mxu0 0.0
        %457 = vmatprep.subr.mxu0 0.0
        %458 = vmatpush2.msra.mxu0 0.0
        %459 = vmatprep.subr.mxu0 0.0
        %460 = vmatpush2.msra.mxu0 0.0
        %461 = vmatprep.subr.mxu0 0.0
        %462 = vmatpush2.msra.mxu0 0.0
        %463 = vmatprep.subr.mxu0 0.0
        %464 = vmatpush2.msra.mxu0 0.0
        %465 = vmatprep.subr.mxu0 0.0
        %466 = vmatpush2.msra.mxu0 0.0
        %467 = vmatprep.subr.mxu0 0.0
        %468 = vmatpush2.msra.mxu0 0.0
        %469 = vmatprep.mubr.f32.mxu0 0.0
        %v470 = vand.u32 %v399, 4294901760
        %v471 = vsub.f32 %v399, %v470
        %v472 = vand.u32 %v471, 4294901760
        %v473 = vsub.f32 %v471, %v472
        %v474 = vand.u32 %v473, 4294901760
        %475 = vmatmul.mubr.f32.gmra.mxu0 %v474
        %v476 = vpop.f32.mrf.mxu0
        %v477 = vadd.f32 %v395, %v476
        %v478 = vpop.f32.mrf.mxu0
        %479 = vdwg.mxu0
        %480 = vmatprep.subr.mxu0 0.0
        %481 = vmatpush1.msra.mxu0 0.0
        %482 = vmatprep.subr.mxu0 0.0
        %483 = vmatpush1.msra.mxu0 0.0
        %484 = vmatprep.subr.mxu0 0.0
        %485 = vmatpush1.msra.mxu0 0.0
        %486 = vmatprep.subr.mxu0 0.0
        %487 = vmatpush1.msra.mxu0 0.0
        %488 = vmatprep.subr.mxu0 0.0
        %489 = vmatpush1.msra.mxu0 0.0
        %490 = vmatprep.subr.mxu0 0.0
        %491 = vmatpush1.msra.mxu0 0.0
        %492 = vmatprep.subr.mxu0 0.0
        %493 = vmatpush1.msra.mxu0 0.0
        %494 = vmatprep.subr.mxu0 0.0
        %495 = vmatpush1.msra.mxu0 0.0
        %496 = vmatprep.subr.mxu0 0.0
        %497 = vmatpush1.msra.mxu0 0.0
        %498 = vmatprep.subr.mxu0 0.0
        %499 = vmatpush1.msra.mxu0 0.0
        %500 = vmatprep.subr.mxu0 0.0
        %501 = vmatpush1.msra.mxu0 0.0
        %502 = vmatprep.subr.mxu0 0.0
        %503 = vmatpush1.msra.mxu0 0.0
        %504 = vmatprep.subr.mxu0 0.0
        %v505 = vand.u32 %v389, 4294901760
        %v506 = vsub.f32 %v389, %v505
        %v507 = vand.u32 %v506, 4294901760
        %v508 = vsub.f32 %v506, %v507
        %v509 = vand.u32 %v508, 4294901760
        %510 = vmatpush1.msra.mxu0 %v509
        %511 = vmatprep.subr.mxu0 0.0
        %v512 = vand.u32 %v388, 4294901760
        %v513 = vsub.f32 %v388, %v512
        %v514 = vand.u32 %v513, 4294901760
        %v515 = vsub.f32 %v513, %v514
        %v516 = vand.u32 %v515, 4294901760
        %517 = vmatpush1.msra.mxu0 %v516
        %518 = vmatprep.subr.mxu0 0.0
        %v519 = vand.u32 %v387, 4294901760
        %v520 = vsub.f32 %v387, %v519
        %v521 = vand.u32 %v520, 4294901760
        %v522 = vsub.f32 %v520, %v521
        %v523 = vand.u32 %v522, 4294901760
        %524 = vmatpush1.msra.mxu0 %v523
        %525 = vmatprep.subr.mxu0 0.0
        %v526 = vand.u32 %v386, 4294901760
        %v527 = vsub.f32 %v386, %v526
        %v528 = vand.u32 %v527, 4294901760
        %v529 = vsub.f32 %v527, %v528
        %v530 = vand.u32 %v529, 4294901760
        %531 = vmatpush1.msra.mxu0 %v530
        %532 = vmatprep.subr.mxu0 0.0
        %533 = vmatpush2.msra.mxu0 0.0
        %534 = vmatprep.subr.mxu0 0.0
        %535 = vmatpush2.msra.mxu0 0.0
        %536 = vmatprep.subr.mxu0 0.0
        %537 = vmatpush2.msra.mxu0 0.0
        %538 = vmatprep.subr.mxu0 0.0
        %539 = vmatpush2.msra.mxu0 0.0
        %540 = vmatprep.subr.mxu0 0.0
        %541 = vmatpush2.msra.mxu0 0.0
        %542 = vmatprep.subr.mxu0 0.0
        %543 = vmatpush2.msra.mxu0 0.0
        %544 = vmatprep.subr.mxu0 0.0
        %545 = vmatpush2.msra.mxu0 0.0
        %546 = vmatprep.subr.mxu0 0.0
        %547 = vmatpush2.msra.mxu0 0.0
        %548 = vmatprep.subr.mxu0 0.0
        %549 = vmatpush2.msra.mxu0 0.0
        %550 = vmatprep.subr.mxu0 0.0
        %551 = vmatpush2.msra.mxu0 0.0
        %552 = vmatprep.subr.mxu0 0.0
        %553 = vmatpush2.msra.mxu0 0.0
        %554 = vmatprep.subr.mxu0 0.0
        %555 = vmatpush2.msra.mxu0 0.0
        %556 = vmatprep.subr.mxu0 0.0
        %557 = vmatpush2.msra.mxu0 0.0
        %558 = vmatprep.subr.mxu0 0.0
        %559 = vmatpush2.msra.mxu0 0.0
        %560 = vmatprep.subr.mxu0 0.0
        %561 = vmatpush2.msra.mxu0 0.0
        %562 = vmatprep.subr.mxu0 0.0
        %563 = vmatpush2.msra.mxu0 0.0
        %564 = vmatprep.mubr.f32.mxu0 0.0
        %v565 = vand.u32 %v399, 4294901760
        %566 = vmatmul.mubr.f32.gmra.mxu0 %v565
        %v567 = vpop.f32.mrf.mxu0
        %v568 = vadd.f32 %v477, %v567
        %v569 = vpop.f32.mrf.mxu0
        %570 = vdwg.mxu0
        %571 = vmatprep.subr.mxu0 0.0
        %572 = vmatpush1.msra.mxu0 0.0
        %573 = vmatprep.subr.mxu0 0.0
        %574 = vmatpush1.msra.mxu0 0.0
        %575 = vmatprep.subr.mxu0 0.0
        %576 = vmatpush1.msra.mxu0 0.0
        %577 = vmatprep.subr.mxu0 0.0
        %578 = vmatpush1.msra.mxu0 0.0
        %579 = vmatprep.subr.mxu0 0.0
        %580 = vmatpush1.msra.mxu0 0.0
        %581 = vmatprep.subr.mxu0 0.0
        %582 = vmatpush1.msra.mxu0 0.0
        %583 = vmatprep.subr.mxu0 0.0
        %584 = vmatpush1.msra.mxu0 0.0
        %585 = vmatprep.subr.mxu0 0.0
        %586 = vmatpush1.msra.mxu0 0.0
        %587 = vmatprep.subr.mxu0 0.0
        %588 = vmatpush1.msra.mxu0 0.0
        %589 = vmatprep.subr.mxu0 0.0
        %590 = vmatpush1.msra.mxu0 0.0
        %591 = vmatprep.subr.mxu0 0.0
        %592 = vmatpush1.msra.mxu0 0.0
        %593 = vmatprep.subr.mxu0 0.0
        %594 = vmatpush1.msra.mxu0 0.0
        %595 = vmatprep.subr.mxu0 0.0
        %v596 = vand.u32 %v389, 4294901760
        %v597 = vsub.f32 %v389, %v596
        %598 = vmatpush1.msra.mxu0 %v597
        %599 = vmatprep.subr.mxu0 0.0
        %v600 = vand.u32 %v388, 4294901760
        %v601 = vsub.f32 %v388, %v600
        %602 = vmatpush1.msra.mxu0 %v601
        %603 = vmatprep.subr.mxu0 0.0
        %v604 = vand.u32 %v387, 4294901760
        %v605 = vsub.f32 %v387, %v604
        %606 = vmatpush1.msra.mxu0 %v605
        %607 = vmatprep.subr.mxu0 0.0
        %v608 = vand.u32 %v386, 4294901760
        %v609 = vsub.f32 %v386, %v608
        %610 = vmatpush1.msra.mxu0 %v609
        %611 = vmatprep.subr.mxu0 0.0
        %612 = vmatpush2.msra.mxu0 0.0
        %613 = vmatprep.subr.mxu0 0.0
        %614 = vmatpush2.msra.mxu0 0.0
        %615 = vmatprep.subr.mxu0 0.0
        %616 = vmatpush2.msra.mxu0 0.0
        %617 = vmatprep.subr.mxu0 0.0
        %618 = vmatpush2.msra.mxu0 0.0
        %619 = vmatprep.subr.mxu0 0.0
        %620 = vmatpush2.msra.mxu0 0.0
        %621 = vmatprep.subr.mxu0 0.0
        %622 = vmatpush2.msra.mxu0 0.0
        %623 = vmatprep.subr.mxu0 0.0
        %624 = vmatpush2.msra.mxu0 0.0
        %625 = vmatprep.subr.mxu0 0.0
        %626 = vmatpush2.msra.mxu0 0.0
        %627 = vmatprep.subr.mxu0 0.0
        %628 = vmatpush2.msra.mxu0 0.0
        %629 = vmatprep.subr.mxu0 0.0
        %630 = vmatpush2.msra.mxu0 0.0
        %631 = vmatprep.subr.mxu0 0.0
        %632 = vmatpush2.msra.mxu0 0.0
        %633 = vmatprep.subr.mxu0 0.0
        %634 = vmatpush2.msra.mxu0 0.0
        %635 = vmatprep.subr.mxu0 0.0
        %636 = vmatpush2.msra.mxu0 0.0
        %637 = vmatprep.subr.mxu0 0.0
        %638 = vmatpush2.msra.mxu0 0.0
        %639 = vmatprep.subr.mxu0 0.0
        %640 = vmatpush2.msra.mxu0 0.0
        %641 = vmatprep.subr.mxu0 0.0
        %642 = vmatpush2.msra.mxu0 0.0
        %643 = vmatprep.mubr.f32.mxu0 0.0
        %v644 = vand.u32 %v399, 4294901760
        %v645 = vsub.f32 %v399, %v644
        %646 = vmatmul.mubr.f32.gmra.mxu0 %v645
        %v647 = vpop.f32.mrf.mxu0
        %v648 = vadd.f32 %v568, %v647
        %v649 = vpop.f32.mrf.mxu0
        %650 = vdwg.mxu0
        %651 = vmatprep.subr.mxu0 0.0
        %652 = vmatpush1.msra.mxu0 0.0
        %653 = vmatprep.subr.mxu0 0.0
        %654 = vmatpush1.msra.mxu0 0.0
        %655 = vmatprep.subr.mxu0 0.0
        %656 = vmatpush1.msra.mxu0 0.0
        %657 = vmatprep.subr.mxu0 0.0
        %658 = vmatpush1.msra.mxu0 0.0
        %659 = vmatprep.subr.mxu0 0.0
        %660 = vmatpush1.msra.mxu0 0.0
        %661 = vmatprep.subr.mxu0 0.0
        %662 = vmatpush1.msra.mxu0 0.0
        %663 = vmatprep.subr.mxu0 0.0
        %664 = vmatpush1.msra.mxu0 0.0
        %665 = vmatprep.subr.mxu0 0.0
        %666 = vmatpush1.msra.mxu0 0.0
        %667 = vmatprep.subr.mxu0 0.0
        %668 = vmatpush1.msra.mxu0 0.0
        %669 = vmatprep.subr.mxu0 0.0
        %670 = vmatpush1.msra.mxu0 0.0
        %671 = vmatprep.subr.mxu0 0.0
        %672 = vmatpush1.msra.mxu0 0.0
        %673 = vmatprep.subr.mxu0 0.0
        %674 = vmatpush1.msra.mxu0 0.0
        %675 = vmatprep.subr.mxu0 0.0
        %v676 = vand.u32 %v389, 4294901760
        %677 = vmatpush1.msra.mxu0 %v676
        %678 = vmatprep.subr.mxu0 0.0
        %v679 = vand.u32 %v388, 4294901760
        %680 = vmatpush1.msra.mxu0 %v679
        %681 = vmatprep.subr.mxu0 0.0
        %v682 = vand.u32 %v387, 4294901760
        %683 = vmatpush1.msra.mxu0 %v682
        %684 = vmatprep.subr.mxu0 0.0
        %v685 = vand.u32 %v386, 4294901760
        %686 = vmatpush1.msra.mxu0 %v685
        %687 = vmatprep.subr.mxu0 0.0
        %688 = vmatpush2.msra.mxu0 0.0
        %689 = vmatprep.subr.mxu0 0.0
        %690 = vmatpush2.msra.mxu0 0.0
        %691 = vmatprep.subr.mxu0 0.0
        %692 = vmatpush2.msra.mxu0 0.0
        %693 = vmatprep.subr.mxu0 0.0
        %694 = vmatpush2.msra.mxu0 0.0
        %695 = vmatprep.subr.mxu0 0.0
        %696 = vmatpush2.msra.mxu0 0.0
        %697 = vmatprep.subr.mxu0 0.0
        %698 = vmatpush2.msra.mxu0 0.0
        %699 = vmatprep.subr.mxu0 0.0
        %700 = vmatpush2.msra.mxu0 0.0
        %701 = vmatprep.subr.mxu0 0.0
        %702 = vmatpush2.msra.mxu0 0.0
        %703 = vmatprep.subr.mxu0 0.0
        %704 = vmatpush2.msra.mxu0 0.0
        %705 = vmatprep.subr.mxu0 0.0
        %706 = vmatpush2.msra.mxu0 0.0
        %707 = vmatprep.subr.mxu0 0.0
        %708 = vmatpush2.msra.mxu0 0.0
        %709 = vmatprep.subr.mxu0 0.0
        %710 = vmatpush2.msra.mxu0 0.0
        %711 = vmatprep.subr.mxu0 0.0
        %712 = vmatpush2.msra.mxu0 0.0
        %713 = vmatprep.subr.mxu0 0.0
        %714 = vmatpush2.msra.mxu0 0.0
        %715 = vmatprep.subr.mxu0 0.0
        %716 = vmatpush2.msra.mxu0 0.0
        %717 = vmatprep.subr.mxu0 0.0
        %718 = vmatpush2.msra.mxu0 0.0
        %719 = vmatprep.mubr.f32.mxu0 0.0
        %v720 = vand.u32 %v399, 4294901760
        %v721 = vsub.f32 %v399, %v720
        %v722 = vand.u32 %v721, 4294901760
        %723 = vmatmul.mubr.f32.gmra.mxu0 %v722
        %v724 = vpop.f32.mrf.mxu0
        %v725 = vadd.f32 %v648, %v724
        %v726 = vpop.f32.mrf.mxu0
        %727 = vdwg.mxu0
        %728 = vmatprep.subr.mxu0 0.0
        %729 = vmatpush1.msra.mxu0 0.0
        %730 = vmatprep.subr.mxu0 0.0
        %731 = vmatpush1.msra.mxu0 0.0
        %732 = vmatprep.subr.mxu0 0.0
        %733 = vmatpush1.msra.mxu0 0.0
        %734 = vmatprep.subr.mxu0 0.0
        %735 = vmatpush1.msra.mxu0 0.0
        %736 = vmatprep.subr.mxu0 0.0
        %737 = vmatpush1.msra.mxu0 0.0
        %738 = vmatprep.subr.mxu0 0.0
        %739 = vmatpush1.msra.mxu0 0.0
        %740 = vmatprep.subr.mxu0 0.0
        %741 = vmatpush1.msra.mxu0 0.0
        %742 = vmatprep.subr.mxu0 0.0
        %743 = vmatpush1.msra.mxu0 0.0
        %744 = vmatprep.subr.mxu0 0.0
        %745 = vmatpush1.msra.mxu0 0.0
        %746 = vmatprep.subr.mxu0 0.0
        %747 = vmatpush1.msra.mxu0 0.0
        %748 = vmatprep.subr.mxu0 0.0
        %749 = vmatpush1.msra.mxu0 0.0
        %750 = vmatprep.subr.mxu0 0.0
        %751 = vmatpush1.msra.mxu0 0.0
        %752 = vmatprep.subr.mxu0 0.0
        %v753 = vand.u32 %v389, 4294901760
        %v754 = vsub.f32 %v389, %v753
        %v755 = vand.u32 %v754, 4294901760
        %756 = vmatpush1.msra.mxu0 %v755
        %757 = vmatprep.subr.mxu0 0.0
        %v758 = vand.u32 %v388, 4294901760
        %v759 = vsub.f32 %v388, %v758
        %v760 = vand.u32 %v759, 4294901760
        %761 = vmatpush1.msra.mxu0 %v760
        %762 = vmatprep.subr.mxu0 0.0
        %v763 = vand.u32 %v387, 4294901760
        %v764 = vsub.f32 %v387, %v763
        %v765 = vand.u32 %v764, 4294901760
        %766 = vmatpush1.msra.mxu0 %v765
        %767 = vmatprep.subr.mxu0 0.0
        %v768 = vand.u32 %v386, 4294901760
        %v769 = vsub.f32 %v386, %v768
        %v770 = vand.u32 %v769, 4294901760
        %771 = vmatpush1.msra.mxu0 %v770
        %772 = vmatprep.subr.mxu0 0.0
        %773 = vmatpush2.msra.mxu0 0.0
        %774 = vmatprep.subr.mxu0 0.0
        %775 = vmatpush2.msra.mxu0 0.0
        %776 = vmatprep.subr.mxu0 0.0
        %777 = vmatpush2.msra.mxu0 0.0
        %778 = vmatprep.subr.mxu0 0.0
        %779 = vmatpush2.msra.mxu0 0.0
        %780 = vmatprep.subr.mxu0 0.0
        %781 = vmatpush2.msra.mxu0 0.0
        %782 = vmatprep.subr.mxu0 0.0
        %783 = vmatpush2.msra.mxu0 0.0
        %784 = vmatprep.subr.mxu0 0.0
        %785 = vmatpush2.msra.mxu0 0.0
        %786 = vmatprep.subr.mxu0 0.0
        %787 = vmatpush2.msra.mxu0 0.0
        %788 = vmatprep.subr.mxu0 0.0
        %789 = vmatpush2.msra.mxu0 0.0
        %790 = vmatprep.subr.mxu0 0.0
        %791 = vmatpush2.msra.mxu0 0.0
        %792 = vmatprep.subr.mxu0 0.0
        %793 = vmatpush2.msra.mxu0 0.0
        %794 = vmatprep.subr.mxu0 0.0
        %795 = vmatpush2.msra.mxu0 0.0
        %796 = vmatprep.subr.mxu0 0.0
        %797 = vmatpush2.msra.mxu0 0.0
        %798 = vmatprep.subr.mxu0 0.0
        %799 = vmatpush2.msra.mxu0 0.0
        %800 = vmatprep.subr.mxu0 0.0
        %801 = vmatpush2.msra.mxu0 0.0
        %802 = vmatprep.subr.mxu0 0.0
        %803 = vmatpush2.msra.mxu0 0.0
        %804 = vmatprep.mubr.f32.mxu0 0.0
        %v805 = vand.u32 %v399, 4294901760
        %806 = vmatmul.mubr.f32.gmra.mxu0 %v805
        %v807 = vpop.f32.mrf.mxu0
        %v808 = vadd.f32 %v725, %v807
        %v809 = vpop.f32.mrf.mxu0
        %810 = vdwg.mxu0
        %811 = vmatprep.subr.mxu0 0.0
        %812 = vmatpush1.msra.mxu0 0.0
        %813 = vmatprep.subr.mxu0 0.0
        %814 = vmatpush1.msra.mxu0 0.0
        %815 = vmatprep.subr.mxu0 0.0
        %816 = vmatpush1.msra.mxu0 0.0
        %817 = vmatprep.subr.mxu0 0.0
        %818 = vmatpush1.msra.mxu0 0.0
        %819 = vmatprep.subr.mxu0 0.0
        %820 = vmatpush1.msra.mxu0 0.0
        %821 = vmatprep.subr.mxu0 0.0
        %822 = vmatpush1.msra.mxu0 0.0
        %823 = vmatprep.subr.mxu0 0.0
        %824 = vmatpush1.msra.mxu0 0.0
        %825 = vmatprep.subr.mxu0 0.0
        %826 = vmatpush1.msra.mxu0 0.0
        %827 = vmatprep.subr.mxu0 0.0
        %828 = vmatpush1.msra.mxu0 0.0
        %829 = vmatprep.subr.mxu0 0.0
        %830 = vmatpush1.msra.mxu0 0.0
        %831 = vmatprep.subr.mxu0 0.0
        %832 = vmatpush1.msra.mxu0 0.0
        %833 = vmatprep.subr.mxu0 0.0
        %834 = vmatpush1.msra.mxu0 0.0
        %835 = vmatprep.subr.mxu0 0.0
        %v836 = vand.u32 %v389, 4294901760
        %837 = vmatpush1.msra.mxu0 %v836
        %838 = vmatprep.subr.mxu0 0.0
        %v839 = vand.u32 %v388, 4294901760
        %840 = vmatpush1.msra.mxu0 %v839
        %841 = vmatprep.subr.mxu0 0.0
        %v842 = vand.u32 %v387, 4294901760
        %843 = vmatpush1.msra.mxu0 %v842
        %844 = vmatprep.subr.mxu0 0.0
        %v845 = vand.u32 %v386, 4294901760
        %846 = vmatpush1.msra.mxu0 %v845
        %847 = vmatprep.subr.mxu0 0.0
        %848 = vmatpush2.msra.mxu0 0.0
        %849 = vmatprep.subr.mxu0 0.0
        %850 = vmatpush2.msra.mxu0 0.0
        %851 = vmatprep.subr.mxu0 0.0
        %852 = vmatpush2.msra.mxu0 0.0
        %853 = vmatprep.subr.mxu0 0.0
        %854 = vmatpush2.msra.mxu0 0.0
        %855 = vmatprep.subr.mxu0 0.0
        %856 = vmatpush2.msra.mxu0 0.0
        %857 = vmatprep.subr.mxu0 0.0
        %858 = vmatpush2.msra.mxu0 0.0
        %859 = vmatprep.subr.mxu0 0.0
        %860 = vmatpush2.msra.mxu0 0.0
        %861 = vmatprep.subr.mxu0 0.0
        %862 = vmatpush2.msra.mxu0 0.0
        %863 = vmatprep.subr.mxu0 0.0
        %864 = vmatpush2.msra.mxu0 0.0
        %865 = vmatprep.subr.mxu0 0.0
        %866 = vmatpush2.msra.mxu0 0.0
        %867 = vmatprep.subr.mxu0 0.0
        %868 = vmatpush2.msra.mxu0 0.0
        %869 = vmatprep.subr.mxu0 0.0
        %870 = vmatpush2.msra.mxu0 0.0
        %871 = vmatprep.subr.mxu0 0.0
        %872 = vmatpush2.msra.mxu0 0.0
        %873 = vmatprep.subr.mxu0 0.0
        %874 = vmatpush2.msra.mxu0 0.0
        %875 = vmatprep.subr.mxu0 0.0
        %876 = vmatpush2.msra.mxu0 0.0
        %877 = vmatprep.subr.mxu0 0.0
        %878 = vmatpush2.msra.mxu0 0.0
        %879 = vmatprep.mubr.f32.mxu0 0.0
        %v880 = vand.u32 %v399, 4294901760
        %881 = vmatmul.mubr.f32.gmra.mxu0 %v880
        %v882 = vpop.f32.mrf.mxu0
        %v883 = vadd.f32 %v808, %v882
        %v884 = vpop.f32.mrf.mxu0
        %885 = vdwg.mxu0
        %v886 = vmax.f32 %v883, 0.0
        %v887 = vld [vmem:[%s3] sm:$0x3]
        %v888 = vld [vmem:[%s4] sm:$0x1]
        %v890 = vlaneseq
        %v891 = vshrl.u32 %v890, 7
        %v892 = vsub.s32 0, %v891
        %v893 = vrot.slane %v888, %v892
        %vm895 = vcmask 15360
        %v897 = vsel %vm895, %v886, 0
        %vm899 = vcmask 1041408
        %v901 = vsel %vm899, %v887, 0
        %903 = vmatprep.subr.mxu0 0.0
        %904 = vmatpush1.msra.mxu0 0.0
        %905 = vmatprep.subr.mxu0 0.0
        %906 = vmatpush1.msra.mxu0 0.0
        %907 = vmatprep.subr.mxu0 0.0
        %908 = vmatpush1.msra.mxu0 0.0
        %909 = vmatprep.subr.mxu0 0.0
        %910 = vmatpush1.msra.mxu0 0.0
        %911 = vmatprep.subr.mxu0 0.0
        %912 = vmatpush1.msra.mxu0 0.0
        %913 = vmatprep.subr.mxu0 0.0
        %914 = vmatpush1.msra.mxu0 0.0
        %915 = vmatprep.subr.mxu0 0.0
        %916 = vmatpush1.msra.mxu0 0.0
        %917 = vmatprep.subr.mxu0 0.0
        %918 = vmatpush1.msra.mxu0 0.0
        %919 = vmatprep.subr.mxu0 0.0
        %920 = vmatpush1.msra.mxu0 0.0
        %921 = vmatprep.subr.mxu0 0.0
        %922 = vmatpush1.msra.mxu0 0.0
        %923 = vmatprep.subr.mxu0 0.0
        %924 = vmatpush1.msra.mxu0 0.0
        %925 = vmatprep.subr.mxu0 0.0
        %926 = vmatpush1.msra.mxu0 0.0
        %927 = vmatprep.subr.mxu0 0.0
        %928 = vmatpush1.msra.mxu0 0.0
        %929 = vmatprep.subr.mxu0 0.0
        %930 = vmatpush1.msra.mxu0 0.0
        %931 = vmatprep.subr.mxu0 0.0
        %932 = vmatpush1.msra.mxu0 0.0
        %933 = vmatprep.subr.mxu0 0.0
        %v934 = vand.u32 %v901, 4294901760
        %935 = vmatpush1.msra.mxu0 %v934
        %936 = vmatprep.subr.mxu0 0.0
        %937 = vmatpush2.msra.mxu0 0.0
        %938 = vmatprep.subr.mxu0 0.0
        %939 = vmatpush2.msra.mxu0 0.0
        %940 = vmatprep.subr.mxu0 0.0
        %941 = vmatpush2.msra.mxu0 0.0
        %942 = vmatprep.subr.mxu0 0.0
        %943 = vmatpush2.msra.mxu0 0.0
        %944 = vmatprep.subr.mxu0 0.0
        %945 = vmatpush2.msra.mxu0 0.0
        %946 = vmatprep.subr.mxu0 0.0
        %947 = vmatpush2.msra.mxu0 0.0
        %948 = vmatprep.subr.mxu0 0.0
        %949 = vmatpush2.msra.mxu0 0.0
        %950 = vmatprep.subr.mxu0 0.0
        %951 = vmatpush2.msra.mxu0 0.0
        %952 = vmatprep.subr.mxu0 0.0
        %953 = vmatpush2.msra.mxu0 0.0
        %954 = vmatprep.subr.mxu0 0.0
        %955 = vmatpush2.msra.mxu0 0.0
        %956 = vmatprep.subr.mxu0 0.0
        %957 = vmatpush2.msra.mxu0 0.0
        %958 = vmatprep.subr.mxu0 0.0
        %959 = vmatpush2.msra.mxu0 0.0
        %960 = vmatprep.subr.mxu0 0.0
        %961 = vmatpush2.msra.mxu0 0.0
        %962 = vmatprep.subr.mxu0 0.0
        %963 = vmatpush2.msra.mxu0 0.0
        %964 = vmatprep.subr.mxu0 0.0
        %965 = vmatpush2.msra.mxu0 0.0
        %966 = vmatprep.subr.mxu0 0.0
        %967 = vmatpush2.msra.mxu0 0.0
        %968 = vmatprep.mubr.f32.mxu0 0.0
        %v969 = vand.u32 %v897, 4294901760
        %v970 = vsub.f32 %v897, %v969
        %v971 = vand.u32 %v970, 4294901760
        %v972 = vsub.f32 %v970, %v971
        %v973 = vand.u32 %v972, 4294901760
        %974 = vmatmul.mubr.f32.gmra.mxu0 %v973
        %v975 = vpop.f32.mrf.mxu0
        %v976 = vadd.f32 %v893, %v975
        %v977 = vpop.f32.mrf.mxu0
        %978 = vdwg.mxu0
        %979 = vmatprep.subr.mxu0 0.0
        %980 = vmatpush1.msra.mxu0 0.0
        %981 = vmatprep.subr.mxu0 0.0
        %982 = vmatpush1.msra.mxu0 0.0
        %983 = vmatprep.subr.mxu0 0.0
        %984 = vmatpush1.msra.mxu0 0.0
        %985 = vmatprep.subr.mxu0 0.0
        %986 = vmatpush1.msra.mxu0 0.0
        %987 = vmatprep.subr.mxu0 0.0
        %988 = vmatpush1.msra.mxu0 0.0
        %989 = vmatprep.subr.mxu0 0.0
        %990 = vmatpush1.msra.mxu0 0.0
        %991 = vmatprep.subr.mxu0 0.0
        %992 = vmatpush1.msra.mxu0 0.0
        %993 = vmatprep.subr.mxu0 0.0
        %994 = vmatpush1.msra.mxu0 0.0
        %995 = vmatprep.subr.mxu0 0.0
        %996 = vmatpush1.msra.mxu0 0.0
        %997 = vmatprep.subr.mxu0 0.0
        %998 = vmatpush1.msra.mxu0 0.0
        %999 = vmatprep.subr.mxu0 0.0
        %1000 = vmatpush1.msra.mxu0 0.0
        %1001 = vmatprep.subr.mxu0 0.0
        %1002 = vmatpush1.msra.mxu0 0.0
        %1003 = vmatprep.subr.mxu0 0.0
        %1004 = vmatpush1.msra.mxu0 0.0
        %1005 = vmatprep.subr.mxu0 0.0
        %1006 = vmatpush1.msra.mxu0 0.0
        %1007 = vmatprep.subr.mxu0 0.0
        %1008 = vmatpush1.msra.mxu0 0.0
        %1009 = vmatprep.subr.mxu0 0.0
        %v1010 = vand.u32 %v901, 4294901760
        %v1011 = vsub.f32 %v901, %v1010
        %v1012 = vand.u32 %v1011, 4294901760
        %v1013 = vsub.f32 %v1011, %v1012
        %v1014 = vand.u32 %v1013, 4294901760
        %1015 = vmatpush1.msra.mxu0 %v1014
        %1016 = vmatprep.subr.mxu0 0.0
        %1017 = vmatpush2.msra.mxu0 0.0
        %1018 = vmatprep.subr.mxu0 0.0
        %1019 = vmatpush2.msra.mxu0 0.0
        %1020 = vmatprep.subr.mxu0 0.0
        %1021 = vmatpush2.msra.mxu0 0.0
        %1022 = vmatprep.subr.mxu0 0.0
        %1023 = vmatpush2.msra.mxu0 0.0
        %1024 = vmatprep.subr.mxu0 0.0
        %1025 = vmatpush2.msra.mxu0 0.0
        %1026 = vmatprep.subr.mxu0 0.0
        %1027 = vmatpush2.msra.mxu0 0.0
        %1028 = vmatprep.subr.mxu0 0.0
        %1029 = vmatpush2.msra.mxu0 0.0
        %1030 = vmatprep.subr.mxu0 0.0
        %1031 = vmatpush2.msra.mxu0 0.0
        %1032 = vmatprep.subr.mxu0 0.0
        %1033 = vmatpush2.msra.mxu0 0.0
        %1034 = vmatprep.subr.mxu0 0.0
        %1035 = vmatpush2.msra.mxu0 0.0
        %1036 = vmatprep.subr.mxu0 0.0
        %1037 = vmatpush2.msra.mxu0 0.0
        %1038 = vmatprep.subr.mxu0 0.0
        %1039 = vmatpush2.msra.mxu0 0.0
        %1040 = vmatprep.subr.mxu0 0.0
        %1041 = vmatpush2.msra.mxu0 0.0
        %1042 = vmatprep.subr.mxu0 0.0
        %1043 = vmatpush2.msra.mxu0 0.0
        %1044 = vmatprep.subr.mxu0 0.0
        %1045 = vmatpush2.msra.mxu0 0.0
        %1046 = vmatprep.subr.mxu0 0.0
        %1047 = vmatpush2.msra.mxu0 0.0
        %1048 = vmatprep.mubr.f32.mxu0 0.0
        %v1049 = vand.u32 %v897, 4294901760
        %1050 = vmatmul.mubr.f32.gmra.mxu0 %v1049
        %v1051 = vpop.f32.mrf.mxu0
        %v1052 = vadd.f32 %v976, %v1051
        %v1053 = vpop.f32.mrf.mxu0
        %1054 = vdwg.mxu0
        %1055 = vmatprep.subr.mxu0 0.0
        %1056 = vmatpush1.msra.mxu0 0.0
        %1057 = vmatprep.subr.mxu0 0.0
        %1058 = vmatpush1.msra.mxu0 0.0
        %1059 = vmatprep.subr.mxu0 0.0
        %1060 = vmatpush1.msra.mxu0 0.0
        %1061 = vmatprep.subr.mxu0 0.0
        %1062 = vmatpush1.msra.mxu0 0.0
        %1063 = vmatprep.subr.mxu0 0.0
        %1064 = vmatpush1.msra.mxu0 0.0
        %1065 = vmatprep.subr.mxu0 0.0
        %1066 = vmatpush1.msra.mxu0 0.0
        %1067 = vmatprep.subr.mxu0 0.0
        %1068 = vmatpush1.msra.mxu0 0.0
        %1069 = vmatprep.subr.mxu0 0.0
        %1070 = vmatpush1.msra.mxu0 0.0
        %1071 = vmatprep.subr.mxu0 0.0
        %1072 = vmatpush1.msra.mxu0 0.0
        %1073 = vmatprep.subr.mxu0 0.0
        %1074 = vmatpush1.msra.mxu0 0.0
        %1075 = vmatprep.subr.mxu0 0.0
        %1076 = vmatpush1.msra.mxu0 0.0
        %1077 = vmatprep.subr.mxu0 0.0
        %1078 = vmatpush1.msra.mxu0 0.0
        %1079 = vmatprep.subr.mxu0 0.0
        %1080 = vmatpush1.msra.mxu0 0.0
        %1081 = vmatprep.subr.mxu0 0.0
        %1082 = vmatpush1.msra.mxu0 0.0
        %1083 = vmatprep.subr.mxu0 0.0
        %1084 = vmatpush1.msra.mxu0 0.0
        %1085 = vmatprep.subr.mxu0 0.0
        %v1086 = vand.u32 %v901, 4294901760
        %v1087 = vsub.f32 %v901, %v1086
        %1088 = vmatpush1.msra.mxu0 %v1087
        %1089 = vmatprep.subr.mxu0 0.0
        %1090 = vmatpush2.msra.mxu0 0.0
        %1091 = vmatprep.subr.mxu0 0.0
        %1092 = vmatpush2.msra.mxu0 0.0
        %1093 = vmatprep.subr.mxu0 0.0
        %1094 = vmatpush2.msra.mxu0 0.0
        %1095 = vmatprep.subr.mxu0 0.0
        %1096 = vmatpush2.msra.mxu0 0.0
        %1097 = vmatprep.subr.mxu0 0.0
        %1098 = vmatpush2.msra.mxu0 0.0
        %1099 = vmatprep.subr.mxu0 0.0
        %1100 = vmatpush2.msra.mxu0 0.0
        %1101 = vmatprep.subr.mxu0 0.0
        %1102 = vmatpush2.msra.mxu0 0.0
        %1103 = vmatprep.subr.mxu0 0.0
        %1104 = vmatpush2.msra.mxu0 0.0
        %1105 = vmatprep.subr.mxu0 0.0
        %1106 = vmatpush2.msra.mxu0 0.0
        %1107 = vmatprep.subr.mxu0 0.0
        %1108 = vmatpush2.msra.mxu0 0.0
        %1109 = vmatprep.subr.mxu0 0.0
        %1110 = vmatpush2.msra.mxu0 0.0
        %1111 = vmatprep.subr.mxu0 0.0
        %1112 = vmatpush2.msra.mxu0 0.0
        %1113 = vmatprep.subr.mxu0 0.0
        %1114 = vmatpush2.msra.mxu0 0.0
        %1115 = vmatprep.subr.mxu0 0.0
        %1116 = vmatpush2.msra.mxu0 0.0
        %1117 = vmatprep.subr.mxu0 0.0
        %1118 = vmatpush2.msra.mxu0 0.0
        %1119 = vmatprep.subr.mxu0 0.0
        %1120 = vmatpush2.msra.mxu0 0.0
        %1121 = vmatprep.mubr.f32.mxu0 0.0
        %v1122 = vand.u32 %v897, 4294901760
        %v1123 = vsub.f32 %v897, %v1122
        %1124 = vmatmul.mubr.f32.gmra.mxu0 %v1123
        %v1125 = vpop.f32.mrf.mxu0
        %v1126 = vadd.f32 %v1052, %v1125
        %v1127 = vpop.f32.mrf.mxu0
        %1128 = vdwg.mxu0
        %1129 = vmatprep.subr.mxu0 0.0
        %1130 = vmatpush1.msra.mxu0 0.0
        %1131 = vmatprep.subr.mxu0 0.0
        %1132 = vmatpush1.msra.mxu0 0.0
        %1133 = vmatprep.subr.mxu0 0.0
        %1134 = vmatpush1.msra.mxu0 0.0
        %1135 = vmatprep.subr.mxu0 0.0
        %1136 = vmatpush1.msra.mxu0 0.0
        %1137 = vmatprep.subr.mxu0 0.0
        %1138 = vmatpush1.msra.mxu0 0.0
        %1139 = vmatprep.subr.mxu0 0.0
        %1140 = vmatpush1.msra.mxu0 0.0
        %1141 = vmatprep.subr.mxu0 0.0
        %1142 = vmatpush1.msra.mxu0 0.0
        %1143 = vmatprep.subr.mxu0 0.0
        %1144 = vmatpush1.msra.mxu0 0.0
        %1145 = vmatprep.subr.mxu0 0.0
        %1146 = vmatpush1.msra.mxu0 0.0
        %1147 = vmatprep.subr.mxu0 0.0
        %1148 = vmatpush1.msra.mxu0 0.0
        %1149 = vmatprep.subr.mxu0 0.0
        %1150 = vmatpush1.msra.mxu0 0.0
        %1151 = vmatprep.subr.mxu0 0.0
        %1152 = vmatpush1.msra.mxu0 0.0
        %1153 = vmatprep.subr.mxu0 0.0
        %1154 = vmatpush1.msra.mxu0 0.0
        %1155 = vmatprep.subr.mxu0 0.0
        %1156 = vmatpush1.msra.mxu0 0.0
        %1157 = vmatprep.subr.mxu0 0.0
        %1158 = vmatpush1.msra.mxu0 0.0
        %1159 = vmatprep.subr.mxu0 0.0
        %v1160 = vand.u32 %v901, 4294901760
        %1161 = vmatpush1.msra.mxu0 %v1160
        %1162 = vmatprep.subr.mxu0 0.0
        %1163 = vmatpush2.msra.mxu0 0.0
        %1164 = vmatprep.subr.mxu0 0.0
        %1165 = vmatpush2.msra.mxu0 0.0
        %1166 = vmatprep.subr.mxu0 0.0
        %1167 = vmatpush2.msra.mxu0 0.0
        %1168 = vmatprep.subr.mxu0 0.0
        %1169 = vmatpush2.msra.mxu0 0.0
        %1170 = vmatprep.subr.mxu0 0.0
        %1171 = vmatpush2.msra.mxu0 0.0
        %1172 = vmatprep.subr.mxu0 0.0
        %1173 = vmatpush2.msra.mxu0 0.0
        %1174 = vmatprep.subr.mxu0 0.0
        %1175 = vmatpush2.msra.mxu0 0.0
        %1176 = vmatprep.subr.mxu0 0.0
        %1177 = vmatpush2.msra.mxu0 0.0
        %1178 = vmatprep.subr.mxu0 0.0
        %1179 = vmatpush2.msra.mxu0 0.0
        %1180 = vmatprep.subr.mxu0 0.0
        %1181 = vmatpush2.msra.mxu0 0.0
        %1182 = vmatprep.subr.mxu0 0.0
        %1183 = vmatpush2.msra.mxu0 0.0
        %1184 = vmatprep.subr.mxu0 0.0
        %1185 = vmatpush2.msra.mxu0 0.0
        %1186 = vmatprep.subr.mxu0 0.0
        %1187 = vmatpush2.msra.mxu0 0.0
        %1188 = vmatprep.subr.mxu0 0.0
        %1189 = vmatpush2.msra.mxu0 0.0
        %1190 = vmatprep.subr.mxu0 0.0
        %1191 = vmatpush2.msra.mxu0 0.0
        %1192 = vmatprep.subr.mxu0 0.0
        %1193 = vmatpush2.msra.mxu0 0.0
        %1194 = vmatprep.mubr.f32.mxu0 0.0
        %v1195 = vand.u32 %v897, 4294901760
        %v1196 = vsub.f32 %v897, %v1195
        %v1197 = vand.u32 %v1196, 4294901760
        %1198 = vmatmul.mubr.f32.gmra.mxu0 %v1197
        %v1199 = vpop.f32.mrf.mxu0
        %v1200 = vadd.f32 %v1126, %v1199
        %v1201 = vpop.f32.mrf.mxu0
        %1202 = vdwg.mxu0
        %1203 = vmatprep.subr.mxu0 0.0
        %1204 = vmatpush1.msra.mxu0 0.0
        %1205 = vmatprep.subr.mxu0 0.0
        %1206 = vmatpush1.msra.mxu0 0.0
        %1207 = vmatprep.subr.mxu0 0.0
        %1208 = vmatpush1.msra.mxu0 0.0
        %1209 = vmatprep.subr.mxu0 0.0
        %1210 = vmatpush1.msra.mxu0 0.0
        %1211 = vmatprep.subr.mxu0 0.0
        %1212 = vmatpush1.msra.mxu0 0.0
        %1213 = vmatprep.subr.mxu0 0.0
        %1214 = vmatpush1.msra.mxu0 0.0
        %1215 = vmatprep.subr.mxu0 0.0
        %1216 = vmatpush1.msra.mxu0 0.0
        %1217 = vmatprep.subr.mxu0 0.0
        %1218 = vmatpush1.msra.mxu0 0.0
        %1219 = vmatprep.subr.mxu0 0.0
        %1220 = vmatpush1.msra.mxu0 0.0
        %1221 = vmatprep.subr.mxu0 0.0
        %1222 = vmatpush1.msra.mxu0 0.0
        %1223 = vmatprep.subr.mxu0 0.0
        %1224 = vmatpush1.msra.mxu0 0.0
        %1225 = vmatprep.subr.mxu0 0.0
        %1226 = vmatpush1.msra.mxu0 0.0
        %1227 = vmatprep.subr.mxu0 0.0
        %1228 = vmatpush1.msra.mxu0 0.0
        %1229 = vmatprep.subr.mxu0 0.0
        %1230 = vmatpush1.msra.mxu0 0.0
        %1231 = vmatprep.subr.mxu0 0.0
        %1232 = vmatpush1.msra.mxu0 0.0
        %1233 = vmatprep.subr.mxu0 0.0
        %v1234 = vand.u32 %v901, 4294901760
        %v1235 = vsub.f32 %v901, %v1234
        %v1236 = vand.u32 %v1235, 4294901760
        %1237 = vmatpush1.msra.mxu0 %v1236
        %1238 = vmatprep.subr.mxu0 0.0
        %1239 = vmatpush2.msra.mxu0 0.0
        %1240 = vmatprep.subr.mxu0 0.0
        %1241 = vmatpush2.msra.mxu0 0.0
        %1242 = vmatprep.subr.mxu0 0.0
        %1243 = vmatpush2.msra.mxu0 0.0
        %1244 = vmatprep.subr.mxu0 0.0
        %1245 = vmatpush2.msra.mxu0 0.0
        %1246 = vmatprep.subr.mxu0 0.0
        %1247 = vmatpush2.msra.mxu0 0.0
        %1248 = vmatprep.subr.mxu0 0.0
        %1249 = vmatpush2.msra.mxu0 0.0
        %1250 = vmatprep.subr.mxu0 0.0
        %1251 = vmatpush2.msra.mxu0 0.0
        %1252 = vmatprep.subr.mxu0 0.0
        %1253 = vmatpush2.msra.mxu0 0.0
        %1254 = vmatprep.subr.mxu0 0.0
        %1255 = vmatpush2.msra.mxu0 0.0
        %1256 = vmatprep.subr.mxu0 0.0
        %1257 = vmatpush2.msra.mxu0 0.0
        %1258 = vmatprep.subr.mxu0 0.0
        %1259 = vmatpush2.msra.mxu0 0.0
        %1260 = vmatprep.subr.mxu0 0.0
        %1261 = vmatpush2.msra.mxu0 0.0
        %1262 = vmatprep.subr.mxu0 0.0
        %1263 = vmatpush2.msra.mxu0 0.0
        %1264 = vmatprep.subr.mxu0 0.0
        %1265 = vmatpush2.msra.mxu0 0.0
        %1266 = vmatprep.subr.mxu0 0.0
        %1267 = vmatpush2.msra.mxu0 0.0
        %1268 = vmatprep.subr.mxu0 0.0
        %1269 = vmatpush2.msra.mxu0 0.0
        %1270 = vmatprep.mubr.f32.mxu0 0.0
        %v1271 = vand.u32 %v897, 4294901760
        %1272 = vmatmul.mubr.f32.gmra.mxu0 %v1271
        %v1273 = vpop.f32.mrf.mxu0
        %v1274 = vadd.f32 %v1200, %v1273
        %v1275 = vpop.f32.mrf.mxu0
        %1276 = vdwg.mxu0
        %1277 = vmatprep.subr.mxu0 0.0
        %1278 = vmatpush1.msra.mxu0 0.0
        %1279 = vmatprep.subr.mxu0 0.0
        %1280 = vmatpush1.msra.mxu0 0.0
        %1281 = vmatprep.subr.mxu0 0.0
        %1282 = vmatpush1.msra.mxu0 0.0
        %1283 = vmatprep.subr.mxu0 0.0
        %1284 = vmatpush1.msra.mxu0 0.0
        %1285 = vmatprep.subr.mxu0 0.0
        %1286 = vmatpush1.msra.mxu0 0.0
        %1287 = vmatprep.subr.mxu0 0.0
        %1288 = vmatpush1.msra.mxu0 0.0
        %1289 = vmatprep.subr.mxu0 0.0
        %1290 = vmatpush1.msra.mxu0 0.0
        %1291 = vmatprep.subr.mxu0 0.0
        %1292 = vmatpush1.msra.mxu0 0.0
        %1293 = vmatprep.subr.mxu0 0.0
        %1294 = vmatpush1.msra.mxu0 0.0
        %1295 = vmatprep.subr.mxu0 0.0
        %1296 = vmatpush1.msra.mxu0 0.0
        %1297 = vmatprep.subr.mxu0 0.0
        %1298 = vmatpush1.msra.mxu0 0.0
        %1299 = vmatprep.subr.mxu0 0.0
        %1300 = vmatpush1.msra.mxu0 0.0
        %1301 = vmatprep.subr.mxu0 0.0
        %1302 = vmatpush1.msra.mxu0 0.0
        %1303 = vmatprep.subr.mxu0 0.0
        %1304 = vmatpush1.msra.mxu0 0.0
        %1305 = vmatprep.subr.mxu0 0.0
        %1306 = vmatpush1.msra.mxu0 0.0
        %1307 = vmatprep.subr.mxu0 0.0
        %v1308 = vand.u32 %v901, 4294901760
        %1309 = vmatpush1.msra.mxu0 %v1308
        %1310 = vmatprep.subr.mxu0 0.0
        %1311 = vmatpush2.msra.mxu0 0.0
        %1312 = vmatprep.subr.mxu0 0.0
        %1313 = vmatpush2.msra.mxu0 0.0
        %1314 = vmatprep.subr.mxu0 0.0
        %1315 = vmatpush2.msra.mxu0 0.0
        %1316 = vmatprep.subr.mxu0 0.0
        %1317 = vmatpush2.msra.mxu0 0.0
        %1318 = vmatprep.subr.mxu0 0.0
        %1319 = vmatpush2.msra.mxu0 0.0
        %1320 = vmatprep.subr.mxu0 0.0
        %1321 = vmatpush2.msra.mxu0 0.0
        %1322 = vmatprep.subr.mxu0 0.0
        %1323 = vmatpush2.msra.mxu0 0.0
        %1324 = vmatprep.subr.mxu0 0.0
        %1325 = vmatpush2.msra.mxu0 0.0
        %1326 = vmatprep.subr.mxu0 0.0
        %1327 = vmatpush2.msra.mxu0 0.0
        %1328 = vmatprep.subr.mxu0 0.0
        %1329 = vmatpush2.msra.mxu0 0.0
        %1330 = vmatprep.subr.mxu0 0.0
        %1331 = vmatpush2.msra.mxu0 0.0
        %1332 = vmatprep.subr.mxu0 0.0
        %1333 = vmatpush2.msra.mxu0 0.0
        %1334 = vmatprep.subr.mxu0 0.0
        %1335 = vmatpush2.msra.mxu0 0.0
        %1336 = vmatprep.subr.mxu0 0.0
        %1337 = vmatpush2.msra.mxu0 0.0
        %1338 = vmatprep.subr.mxu0 0.0
        %1339 = vmatpush2.msra.mxu0 0.0
        %1340 = vmatprep.subr.mxu0 0.0
        %1341 = vmatpush2.msra.mxu0 0.0
        %1342 = vmatprep.mubr.f32.mxu0 0.0
        %v1343 = vand.u32 %v897, 4294901760
        %1344 = vmatmul.mubr.f32.gmra.mxu0 %v1343
        %v1345 = vpop.f32.mrf.mxu0
        %v1346 = vadd.f32 %v1274, %v1345
        %v1347 = vpop.f32.mrf.mxu0
        %1348 = vdwg.mxu0
        %v1350 = vrot.slane %v1346, 1
        %v1352 = vadd.f32 %v1346, %v1350
        %v1353 = vsub.f32 0.0, %v1352
        %v1354 = vmul.f32 %v1353, 1.442695
        %v1355 = vpow.pop %v1354
        %v1356 = vadd.f32 %v1355, 1.0
        %v1357 = vrcp.pop %v1356
        %v1358 = vmul.f32 1.0, %v1357
        %v1359 = vlaneseq
        %v1360 = vshrl.u32 %v1359, 7
        %v1361 = vsub.s32 0, %v1360
        %v1362 = vrot.slane %v1358, %v1361
        %1364 = vbcast.lane.b32.xlu0 %v1362, 256
        %v1365 = vpop.permute.xlu0 %1364
        %s1367 = sor.u32 256, 8
        %1368 = vbcast.lane.b32.xlu0 %v1362, %s1367
        %v1369 = vpop.permute.xlu0 %1368
        %s1371 = sor.u32 256, 16
        %1372 = vbcast.lane.b32.xlu0 %v1362, %s1371
        %v1373 = vpop.permute.xlu0 %1372
        %s1375 = sor.u32 256, 24
        %1376 = vbcast.lane.b32.xlu0 %v1362, %s1375
        %v1377 = vpop.permute.xlu0 %1376
        %v1378 = vmul.f32 %v291, %v1365
        %v1379 = vmul.f32 %v292, %v1365
        %v1380 = vmul.f32 %v293, %v1369
        %v1381 = vmul.f32 %v294, %v1369
        %v1382 = vmul.f32 %v295, %v1373
        %v1383 = vmul.f32 %v296, %v1373
        %v1384 = vmul.f32 %v297, %v1377
        %v1385 = vmul.f32 %v298, %v1377
        %1386 = vst [vmem:[#allocation2] sm:$0xff] %v1378
        %1387 = vst [vmem:[#allocation2 + $0x8] sm:$0xff] %v1379
        %1388 = vst [vmem:[#allocation2 + $0x10] sm:$0xff] %v1380
        %1389 = vst [vmem:[#allocation2 + $0x18] sm:$0xff] %v1381
        %1390 = vst [vmem:[#allocation2 + $0x20] sm:$0xff] %v1382
        %1391 = vst [vmem:[#allocation2 + $0x28] sm:$0xff] %v1383
        %1392 = vst [vmem:[#allocation2 + $0x30] sm:$0xff] %v1384
        %1393 = vst [vmem:[#allocation2 + $0x38] sm:$0xff] %v1385
        %v1394 = vld [vmem:[#allocation2] sm:$0xff]
        %v1395 = vld [vmem:[#allocation2 + $0x8] sm:$0xff]
        %v1396 = vld [vmem:[#allocation2 + $0x10] sm:$0xff]
        %v1397 = vld [vmem:[#allocation2 + $0x18] sm:$0xff]
        %v1398 = vld [vmem:[#allocation2 + $0x20] sm:$0xff]
        %v1399 = vld [vmem:[#allocation2 + $0x28] sm:$0xff]
        %v1400 = vld [vmem:[#allocation2 + $0x30] sm:$0xff]
        %v1401 = vld [vmem:[#allocation2 + $0x38] sm:$0xff]
        %v1402 = vmax.f32 %v1394, %v1398
        %v1403 = vmax.f32 %v1396, %v1400
        %v1404 = vmax.f32 %v1402, %v1403
        %v1405 = vrot.slane %v1404, 4
        %v1406 = vmax.f32 %v1404, %v1405
        %v1407 = vrot.slane %v1406, 2
        %v1408 = vmax.f32 %v1406, %v1407
        %v1409 = vrot.slane %v1408, 1
        %v1410 = vmax.f32 %v1408, %v1409
        %v1411 = vmax.f32 %v1395, %v1399
        %v1412 = vmax.f32 %v1397, %v1401
        %v1413 = vmax.f32 %v1411, %v1412
        %v1414 = vrot.slane %v1413, 4
        %v1415 = vmax.f32 %v1413, %v1414
        %v1416 = vrot.slane %v1415, 2
        %v1417 = vmax.f32 %v1415, %v1416
        %v1418 = vrot.slane %v1417, 1
        %v1419 = vmax.f32 %v1417, %v1418
        %v1420 = vadd.f32 %v1394, %v1396
        %v1421 = vadd.f32 %v1420, %v1398
        %v1422 = vadd.f32 %v1421, %v1400
        %v1423 = vrot.slane %v1422, 4
        %v1424 = vadd.f32 %v1422, %v1423
        %v1425 = vrot.slane %v1424, 2
        %v1426 = vadd.f32 %v1424, %v1425
        %v1427 = vrot.slane %v1426, 1
        %v1428 = vadd.f32 %v1426, %v1427
        %v1429 = vadd.f32 %v1395, %v1397
        %v1430 = vadd.f32 %v1429, %v1399
        %v1431 = vadd.f32 %v1430, %v1401
        %v1432 = vrot.slane %v1431, 4
        %v1433 = vadd.f32 %v1431, %v1432
        %v1434 = vrot.slane %v1433, 2
        %v1435 = vadd.f32 %v1433, %v1434
        %v1436 = vrot.slane %v1435, 1
        %v1437 = vadd.f32 %v1435, %v1436
        %v1438 = vrcp.pop 32.0
        %v1439 = vmul.f32 %v1428, %v1438
        %v1440 = vmul.f32 %v1437, %v1438
        %1441 = vrot.lane.b32.xlu0 %v1410, 51
        %v1442 = vpop.permute.xlu0 %1441
        %1443 = vrot.lane.b32.xlu0 %v1419, 51
        %v1444 = vpop.permute.xlu0 %1443
        %vm1445 = vcmp.lt.s32.totalorder %v333, 51
        %v1446 = vsel %vm1445, %v1442, %v1444
        %v1447 = vsel %vm1445, %v1444, %v1442
        %1448 = vrot.lane.b32.xlu0 %v1439, 51
        %v1449 = vpop.permute.xlu0 %1448
        %1450 = vrot.lane.b32.xlu0 %v1440, 51
        %v1451 = vpop.permute.xlu0 %1450
        %v1452 = vsel %vm1445, %v1449, %v1451
        %v1453 = vsel %vm1445, %v1451, %v1449
        %v1454 = vld [vmem:[%s5] ss:$8 sm:$0x3]
        %v1456 = vlaneseq
        %v1457 = vshrl.u32 %v1456, 7
        %v1458 = vsub.s32 0, %v1457
        %v1459 = vrot.slane %v1454, %v1458
        %v1460 = vlaneseq
        %v1461 = vshrl.u32 %v1460, 7
        %v1462 = vsub.s32 1, %v1461
        %v1463 = vrot.slane %v1454, %v1462
        %v1466 = vmul.f32 %v1447, %v1459
        %v1467 = vmul.f32 %v1446, %v1463
        %v1468 = vadd.f32 %v1466, 0.0
        %v1469 = vadd.f32 %v1467, 0.0
        %s1470 = scalar_lea.vmem %s5, 112
        %v1471 = vld [vmem:[%s1470] ss:$8 sm:$0x3]
        %v1473 = vlaneseq
        %v1474 = vshrl.u32 %v1473, 7
        %v1475 = vsub.s32 0, %v1474
        %v1476 = vrot.slane %v1471, %v1475
        %v1477 = vlaneseq
        %v1478 = vshrl.u32 %v1477, 7
        %v1479 = vsub.s32 1, %v1478
        %v1480 = vrot.slane %v1471, %v1479
        %v1483 = vmul.f32 %v1453, %v1476
        %v1484 = vmul.f32 %v1452, %v1480
        %v1485 = vadd.f32 %v1468, %v1483
        %v1486 = vadd.f32 %v1469, %v1484
        %1487 = vrot.lane.b32.xlu0 %v1410, 50
        %v1488 = vpop.permute.xlu0 %1487
        %1489 = vrot.lane.b32.xlu0 %v1419, 50
        %v1490 = vpop.permute.xlu0 %1489
        %vm1491 = vcmp.lt.s32.totalorder %v333, 50
        %v1492 = vsel %vm1491, %v1488, %v1490
        %v1493 = vsel %vm1491, %v1490, %v1488
        %1494 = vrot.lane.b32.xlu0 %v1439, 50
        %v1495 = vpop.permute.xlu0 %1494
        %1496 = vrot.lane.b32.xlu0 %v1440, 50
        %v1497 = vpop.permute.xlu0 %1496
        %v1498 = vsel %vm1491, %v1495, %v1497
        %v1499 = vsel %vm1491, %v1497, %v1495
        %s1500 = scalar_lea.vmem %s5, 1
        %v1501 = vld [vmem:[%s1500] ss:$8 sm:$0x3]
        %v1503 = vlaneseq
        %v1504 = vshrl.u32 %v1503, 7
        %v1505 = vsub.s32 0, %v1504
        %v1506 = vrot.slane %v1501, %v1505
        %v1507 = vlaneseq
        %v1508 = vshrl.u32 %v1507, 7
        %v1509 = vsub.s32 1, %v1508
        %v1510 = vrot.slane %v1501, %v1509
        %v1513 = vmul.f32 %v1493, %v1506
        %v1514 = vmul.f32 %v1492, %v1510
        %v1515 = vadd.f32 %v1485, %v1513
        %v1516 = vadd.f32 %v1486, %v1514
        %s1517 = scalar_lea.vmem %s1470, 1
        %v1518 = vld [vmem:[%s1517] ss:$8 sm:$0x3]
        %v1520 = vlaneseq
        %v1521 = vshrl.u32 %v1520, 7
        %v1522 = vsub.s32 0, %v1521
        %v1523 = vrot.slane %v1518, %v1522
        %v1524 = vlaneseq
        %v1525 = vshrl.u32 %v1524, 7
        %v1526 = vsub.s32 1, %v1525
        %v1527 = vrot.slane %v1518, %v1526
        %v1530 = vmul.f32 %v1499, %v1523
        %v1531 = vmul.f32 %v1498, %v1527
        %v1532 = vadd.f32 %v1515, %v1530
        %v1533 = vadd.f32 %v1516, %v1531
        %1534 = vrot.lane.b32.xlu0 %v1410, 49
        %v1535 = vpop.permute.xlu0 %1534
        %1536 = vrot.lane.b32.xlu0 %v1419, 49
        %v1537 = vpop.permute.xlu0 %1536
        %vm1538 = vcmp.lt.s32.totalorder %v333, 49
        %v1539 = vsel %vm1538, %v1535, %v1537
        %v1540 = vsel %vm1538, %v1537, %v1535
        %1541 = vrot.lane.b32.xlu0 %v1439, 49
        %v1542 = vpop.permute.xlu0 %1541
        %1543 = vrot.lane.b32.xlu0 %v1440, 49
        %v1544 = vpop.permute.xlu0 %1543
        %v1545 = vsel %vm1538, %v1542, %v1544
        %v1546 = vsel %vm1538, %v1544, %v1542
        %s1547 = scalar_lea.vmem %s5, 2
        %v1548 = vld [vmem:[%s1547] ss:$8 sm:$0x3]
        %v1550 = vlaneseq
        %v1551 = vshrl.u32 %v1550, 7
        %v1552 = vsub.s32 0, %v1551
        %v1553 = vrot.slane %v1548, %v1552
        %v1554 = vlaneseq
        %v1555 = vshrl.u32 %v1554, 7
        %v1556 = vsub.s32 1, %v1555
        %v1557 = vrot.slane %v1548, %v1556
        %v1560 = vmul.f32 %v1540, %v1553
        %v1561 = vmul.f32 %v1539, %v1557
        %v1562 = vadd.f32 %v1532, %v1560
        %v1563 = vadd.f32 %v1533, %v1561
        %s1564 = scalar_lea.vmem %s1470, 2
        %v1565 = vld [vmem:[%s1564] ss:$8 sm:$0x3]
        %v1567 = vlaneseq
        %v1568 = vshrl.u32 %v1567, 7
        %v1569 = vsub.s32 0, %v1568
        %v1570 = vrot.slane %v1565, %v1569
        %v1571 = vlaneseq
        %v1572 = vshrl.u32 %v1571, 7
        %v1573 = vsub.s32 1, %v1572
        %v1574 = vrot.slane %v1565, %v1573
        %v1577 = vmul.f32 %v1546, %v1570
        %v1578 = vmul.f32 %v1545, %v1574
        %v1579 = vadd.f32 %v1562, %v1577
        %v1580 = vadd.f32 %v1563, %v1578
        %1581 = vrot.lane.b32.xlu0 %v1410, 48
        %v1582 = vpop.permute.xlu0 %1581
        %1583 = vrot.lane.b32.xlu0 %v1419, 48
        %v1584 = vpop.permute.xlu0 %1583
        %vm1585 = vcmp.lt.s32.totalorder %v333, 48
        %v1586 = vsel %vm1585, %v1582, %v1584
        %v1587 = vsel %vm1585, %v1584, %v1582
        %1588 = vrot.lane.b32.xlu0 %v1439, 48
        %v1589 = vpop.permute.xlu0 %1588
        %1590 = vrot.lane.b32.xlu0 %v1440, 48
        %v1591 = vpop.permute.xlu0 %1590
        %v1592 = vsel %vm1585, %v1589, %v1591
        %v1593 = vsel %vm1585, %v1591, %v1589
        %s1594 = scalar_lea.vmem %s5, 3
        %v1595 = vld [vmem:[%s1594] ss:$8 sm:$0x3]
        %v1597 = vlaneseq
        %v1598 = vshrl.u32 %v1597, 7
        %v1599 = vsub.s32 0, %v1598
        %v1600 = vrot.slane %v1595, %v1599
        %v1601 = vlaneseq
        %v1602 = vshrl.u32 %v1601, 7
        %v1603 = vsub.s32 1, %v1602
        %v1604 = vrot.slane %v1595, %v1603
        %v1607 = vmul.f32 %v1587, %v1600
        %v1608 = vmul.f32 %v1586, %v1604
        %v1609 = vadd.f32 %v1579, %v1607
        %v1610 = vadd.f32 %v1580, %v1608
        %s1611 = scalar_lea.vmem %s1470, 3
        %v1612 = vld [vmem:[%s1611] ss:$8 sm:$0x3]
        %v1614 = vlaneseq
        %v1615 = vshrl.u32 %v1614, 7
        %v1616 = vsub.s32 0, %v1615
        %v1617 = vrot.slane %v1612, %v1616
        %v1618 = vlaneseq
        %v1619 = vshrl.u32 %v1618, 7
        %v1620 = vsub.s32 1, %v1619
        %v1621 = vrot.slane %v1612, %v1620
        %v1624 = vmul.f32 %v1593, %v1617
        %v1625 = vmul.f32 %v1592, %v1621
        %v1626 = vadd.f32 %v1609, %v1624
        %v1627 = vadd.f32 %v1610, %v1625
        %1628 = vrot.lane.b32.xlu0 %v1410, 47
        %v1629 = vpop.permute.xlu0 %1628
        %1630 = vrot.lane.b32.xlu0 %v1419, 47
        %v1631 = vpop.permute.xlu0 %1630
        %vm1632 = vcmp.lt.s32.totalorder %v333, 47
        %v1633 = vsel %vm1632, %v1629, %v1631
        %v1634 = vsel %vm1632, %v1631, %v1629
        %1635 = vrot.lane.b32.xlu0 %v1439, 47
        %v1636 = vpop.permute.xlu0 %1635
        %1637 = vrot.lane.b32.xlu0 %v1440, 47
        %v1638 = vpop.permute.xlu0 %1637
        %v1639 = vsel %vm1632, %v1636, %v1638
        %v1640 = vsel %vm1632, %v1638, %v1636
        %s1641 = scalar_lea.vmem %s5, 4
        %v1642 = vld [vmem:[%s1641] ss:$8 sm:$0x3]
        %v1644 = vlaneseq
        %v1645 = vshrl.u32 %v1644, 7
        %v1646 = vsub.s32 0, %v1645
        %v1647 = vrot.slane %v1642, %v1646
        %v1648 = vlaneseq
        %v1649 = vshrl.u32 %v1648, 7
        %v1650 = vsub.s32 1, %v1649
        %v1651 = vrot.slane %v1642, %v1650
        %v1654 = vmul.f32 %v1634, %v1647
        %v1655 = vmul.f32 %v1633, %v1651
        %v1656 = vadd.f32 %v1626, %v1654
        %v1657 = vadd.f32 %v1627, %v1655
        %s1658 = scalar_lea.vmem %s1470, 4
        %v1659 = vld [vmem:[%s1658] ss:$8 sm:$0x3]
        %v1661 = vlaneseq
        %v1662 = vshrl.u32 %v1661, 7
        %v1663 = vsub.s32 0, %v1662
        %v1664 = vrot.slane %v1659, %v1663
        %v1665 = vlaneseq
        %v1666 = vshrl.u32 %v1665, 7
        %v1667 = vsub.s32 1, %v1666
        %v1668 = vrot.slane %v1659, %v1667
        %v1671 = vmul.f32 %v1640, %v1664
        %v1672 = vmul.f32 %v1639, %v1668
        %v1673 = vadd.f32 %v1656, %v1671
        %v1674 = vadd.f32 %v1657, %v1672
        %1675 = vrot.lane.b32.xlu0 %v1410, 46
        %v1676 = vpop.permute.xlu0 %1675
        %1677 = vrot.lane.b32.xlu0 %v1419, 46
        %v1678 = vpop.permute.xlu0 %1677
        %vm1679 = vcmp.lt.s32.totalorder %v333, 46
        %v1680 = vsel %vm1679, %v1676, %v1678
        %v1681 = vsel %vm1679, %v1678, %v1676
        %1682 = vrot.lane.b32.xlu0 %v1439, 46
        %v1683 = vpop.permute.xlu0 %1682
        %1684 = vrot.lane.b32.xlu0 %v1440, 46
        %v1685 = vpop.permute.xlu0 %1684
        %v1686 = vsel %vm1679, %v1683, %v1685
        %v1687 = vsel %vm1679, %v1685, %v1683
        %s1688 = scalar_lea.vmem %s5, 5
        %v1689 = vld [vmem:[%s1688] ss:$8 sm:$0x3]
        %v1691 = vlaneseq
        %v1692 = vshrl.u32 %v1691, 7
        %v1693 = vsub.s32 0, %v1692
        %v1694 = vrot.slane %v1689, %v1693
        %v1695 = vlaneseq
        %v1696 = vshrl.u32 %v1695, 7
        %v1697 = vsub.s32 1, %v1696
        %v1698 = vrot.slane %v1689, %v1697
        %v1701 = vmul.f32 %v1681, %v1694
        %v1702 = vmul.f32 %v1680, %v1698
        %v1703 = vadd.f32 %v1673, %v1701
        %v1704 = vadd.f32 %v1674, %v1702
        %s1705 = scalar_lea.vmem %s1470, 5
        %v1706 = vld [vmem:[%s1705] ss:$8 sm:$0x3]
        %v1708 = vlaneseq
        %v1709 = vshrl.u32 %v1708, 7
        %v1710 = vsub.s32 0, %v1709
        %v1711 = vrot.slane %v1706, %v1710
        %v1712 = vlaneseq
        %v1713 = vshrl.u32 %v1712, 7
        %v1714 = vsub.s32 1, %v1713
        %v1715 = vrot.slane %v1706, %v1714
        %v1718 = vmul.f32 %v1687, %v1711
        %v1719 = vmul.f32 %v1686, %v1715
        %v1720 = vadd.f32 %v1703, %v1718
        %v1721 = vadd.f32 %v1704, %v1719
        %1722 = vrot.lane.b32.xlu0 %v1410, 45
        %v1723 = vpop.permute.xlu0 %1722
        %1724 = vrot.lane.b32.xlu0 %v1419, 45
        %v1725 = vpop.permute.xlu0 %1724
        %vm1726 = vcmp.lt.s32.totalorder %v333, 45
        %v1727 = vsel %vm1726, %v1723, %v1725
        %v1728 = vsel %vm1726, %v1725, %v1723
        %1729 = vrot.lane.b32.xlu0 %v1439, 45
        %v1730 = vpop.permute.xlu0 %1729
        %1731 = vrot.lane.b32.xlu0 %v1440, 45
        %v1732 = vpop.permute.xlu0 %1731
        %v1733 = vsel %vm1726, %v1730, %v1732
        %v1734 = vsel %vm1726, %v1732, %v1730
        %s1735 = scalar_lea.vmem %s5, 6
        %v1736 = vld [vmem:[%s1735] ss:$8 sm:$0x3]
        %v1738 = vlaneseq
        %v1739 = vshrl.u32 %v1738, 7
        %v1740 = vsub.s32 0, %v1739
        %v1741 = vrot.slane %v1736, %v1740
        %v1742 = vlaneseq
        %v1743 = vshrl.u32 %v1742, 7
        %v1744 = vsub.s32 1, %v1743
        %v1745 = vrot.slane %v1736, %v1744
        %v1748 = vmul.f32 %v1728, %v1741
        %v1749 = vmul.f32 %v1727, %v1745
        %v1750 = vadd.f32 %v1720, %v1748
        %v1751 = vadd.f32 %v1721, %v1749
        %s1752 = scalar_lea.vmem %s1470, 6
        %v1753 = vld [vmem:[%s1752] ss:$8 sm:$0x3]
        %v1755 = vlaneseq
        %v1756 = vshrl.u32 %v1755, 7
        %v1757 = vsub.s32 0, %v1756
        %v1758 = vrot.slane %v1753, %v1757
        %v1759 = vlaneseq
        %v1760 = vshrl.u32 %v1759, 7
        %v1761 = vsub.s32 1, %v1760
        %v1762 = vrot.slane %v1753, %v1761
        %v1765 = vmul.f32 %v1734, %v1758
        %v1766 = vmul.f32 %v1733, %v1762
        %v1767 = vadd.f32 %v1750, %v1765
        %v1768 = vadd.f32 %v1751, %v1766
        %1769 = vrot.lane.b32.xlu0 %v1410, 35
        %v1770 = vpop.permute.xlu0 %1769
        %1771 = vrot.lane.b32.xlu0 %v1419, 35
        %v1772 = vpop.permute.xlu0 %1771
        %vm1773 = vcmp.lt.s32.totalorder %v333, 35
        %v1774 = vsel %vm1773, %v1770, %v1772
        %v1775 = vsel %vm1773, %v1772, %v1770
        %1776 = vrot.lane.b32.xlu0 %v1439, 35
        %v1777 = vpop.permute.xlu0 %1776
        %1778 = vrot.lane.b32.xlu0 %v1440, 35
        %v1779 = vpop.permute.xlu0 %1778
        %v1780 = vsel %vm1773, %v1777, %v1779
        %v1781 = vsel %vm1773, %v1779, %v1777
        %s1782 = scalar_lea.vmem %s5, 7
        %v1783 = vld [vmem:[%s1782] ss:$8 sm:$0x3]
        %v1785 = vlaneseq
        %v1786 = vshrl.u32 %v1785, 7
        %v1787 = vsub.s32 0, %v1786
        %v1788 = vrot.slane %v1783, %v1787
        %v1789 = vlaneseq
        %v1790 = vshrl.u32 %v1789, 7
        %v1791 = vsub.s32 1, %v1790
        %v1792 = vrot.slane %v1783, %v1791
        %v1795 = vmul.f32 %v1775, %v1788
        %v1796 = vmul.f32 %v1774, %v1792
        %v1797 = vadd.f32 %v1767, %v1795
        %v1798 = vadd.f32 %v1768, %v1796
        %s1799 = scalar_lea.vmem %s1470, 7
        %v1800 = vld [vmem:[%s1799] ss:$8 sm:$0x3]
        %v1802 = vlaneseq
        %v1803 = vshrl.u32 %v1802, 7
        %v1804 = vsub.s32 0, %v1803
        %v1805 = vrot.slane %v1800, %v1804
        %v1806 = vlaneseq
        %v1807 = vshrl.u32 %v1806, 7
        %v1808 = vsub.s32 1, %v1807
        %v1809 = vrot.slane %v1800, %v1808
        %v1812 = vmul.f32 %v1781, %v1805
        %v1813 = vmul.f32 %v1780, %v1809
        %v1814 = vadd.f32 %v1797, %v1812
        %v1815 = vadd.f32 %v1798, %v1813
        %1816 = vrot.lane.b32.xlu0 %v1410, 34
        %v1817 = vpop.permute.xlu0 %1816
        %1818 = vrot.lane.b32.xlu0 %v1419, 34
        %v1819 = vpop.permute.xlu0 %1818
        %vm1820 = vcmp.lt.s32.totalorder %v333, 34
        %v1821 = vsel %vm1820, %v1817, %v1819
        %v1822 = vsel %vm1820, %v1819, %v1817
        %1823 = vrot.lane.b32.xlu0 %v1439, 34
        %v1824 = vpop.permute.xlu0 %1823
        %1825 = vrot.lane.b32.xlu0 %v1440, 34
        %v1826 = vpop.permute.xlu0 %1825
        %v1827 = vsel %vm1820, %v1824, %v1826
        %v1828 = vsel %vm1820, %v1826, %v1824
        %s1829 = scalar_lea.vmem %s5, 16
        %v1830 = vld [vmem:[%s1829] ss:$8 sm:$0x3]
        %v1832 = vlaneseq
        %v1833 = vshrl.u32 %v1832, 7
        %v1834 = vsub.s32 0, %v1833
        %v1835 = vrot.slane %v1830, %v1834
        %v1836 = vlaneseq
        %v1837 = vshrl.u32 %v1836, 7
        %v1838 = vsub.s32 1, %v1837
        %v1839 = vrot.slane %v1830, %v1838
        %v1842 = vmul.f32 %v1822, %v1835
        %v1843 = vmul.f32 %v1821, %v1839
        %v1844 = vadd.f32 %v1814, %v1842
        %v1845 = vadd.f32 %v1815, %v1843
        %s1846 = scalar_lea.vmem %s1470, 16
        %v1847 = vld [vmem:[%s1846] ss:$8 sm:$0x3]
        %v1849 = vlaneseq
        %v1850 = vshrl.u32 %v1849, 7
        %v1851 = vsub.s32 0, %v1850
        %v1852 = vrot.slane %v1847, %v1851
        %v1853 = vlaneseq
        %v1854 = vshrl.u32 %v1853, 7
        %v1855 = vsub.s32 1, %v1854
        %v1856 = vrot.slane %v1847, %v1855
        %v1859 = vmul.f32 %v1828, %v1852
        %v1860 = vmul.f32 %v1827, %v1856
        %v1861 = vadd.f32 %v1844, %v1859
        %v1862 = vadd.f32 %v1845, %v1860
        %1863 = vrot.lane.b32.xlu0 %v1410, 33
        %v1864 = vpop.permute.xlu0 %1863
        %1865 = vrot.lane.b32.xlu0 %v1419, 33
        %v1866 = vpop.permute.xlu0 %1865
        %vm1867 = vcmp.lt.s32.totalorder %v333, 33
        %v1868 = vsel %vm1867, %v1864, %v1866
        %v1869 = vsel %vm1867, %v1866, %v1864
        %1870 = vrot.lane.b32.xlu0 %v1439, 33
        %v1871 = vpop.permute.xlu0 %1870
        %1872 = vrot.lane.b32.xlu0 %v1440, 33
        %v1873 = vpop.permute.xlu0 %1872
        %v1874 = vsel %vm1867, %v1871, %v1873
        %v1875 = vsel %vm1867, %v1873, %v1871
        %s1876 = scalar_lea.vmem %s5, 17
        %v1877 = vld [vmem:[%s1876] ss:$8 sm:$0x3]
        %v1879 = vlaneseq
        %v1880 = vshrl.u32 %v1879, 7
        %v1881 = vsub.s32 0, %v1880
        %v1882 = vrot.slane %v1877, %v1881
        %v1883 = vlaneseq
        %v1884 = vshrl.u32 %v1883, 7
        %v1885 = vsub.s32 1, %v1884
        %v1886 = vrot.slane %v1877, %v1885
        %v1889 = vmul.f32 %v1869, %v1882
        %v1890 = vmul.f32 %v1868, %v1886
        %v1891 = vadd.f32 %v1861, %v1889
        %v1892 = vadd.f32 %v1862, %v1890
        %s1893 = scalar_lea.vmem %s1470, 17
        %v1894 = vld [vmem:[%s1893] ss:$8 sm:$0x3]
        %v1896 = vlaneseq
        %v1897 = vshrl.u32 %v1896, 7
        %v1898 = vsub.s32 0, %v1897
        %v1899 = vrot.slane %v1894, %v1898
        %v1900 = vlaneseq
        %v1901 = vshrl.u32 %v1900, 7
        %v1902 = vsub.s32 1, %v1901
        %v1903 = vrot.slane %v1894, %v1902
        %v1906 = vmul.f32 %v1875, %v1899
        %v1907 = vmul.f32 %v1874, %v1903
        %v1908 = vadd.f32 %v1891, %v1906
        %v1909 = vadd.f32 %v1892, %v1907
        %1910 = vrot.lane.b32.xlu0 %v1410, 32
        %v1911 = vpop.permute.xlu0 %1910
        %1912 = vrot.lane.b32.xlu0 %v1419, 32
        %v1913 = vpop.permute.xlu0 %1912
        %vm1914 = vcmp.lt.s32.totalorder %v333, 32
        %v1915 = vsel %vm1914, %v1911, %v1913
        %v1916 = vsel %vm1914, %v1913, %v1911
        %1917 = vrot.lane.b32.xlu0 %v1439, 32
        %v1918 = vpop.permute.xlu0 %1917
        %1919 = vrot.lane.b32.xlu0 %v1440, 32
        %v1920 = vpop.permute.xlu0 %1919
        %v1921 = vsel %vm1914, %v1918, %v1920
        %v1922 = vsel %vm1914, %v1920, %v1918
        %s1923 = scalar_lea.vmem %s5, 18
        %v1924 = vld [vmem:[%s1923] ss:$8 sm:$0x3]
        %v1926 = vlaneseq
        %v1927 = vshrl.u32 %v1926, 7
        %v1928 = vsub.s32 0, %v1927
        %v1929 = vrot.slane %v1924, %v1928
        %v1930 = vlaneseq
        %v1931 = vshrl.u32 %v1930, 7
        %v1932 = vsub.s32 1, %v1931
        %v1933 = vrot.slane %v1924, %v1932
        %v1936 = vmul.f32 %v1916, %v1929
        %v1937 = vmul.f32 %v1915, %v1933
        %v1938 = vadd.f32 %v1908, %v1936
        %v1939 = vadd.f32 %v1909, %v1937
        %s1940 = scalar_lea.vmem %s1470, 18
        %v1941 = vld [vmem:[%s1940] ss:$8 sm:$0x3]
        %v1943 = vlaneseq
        %v1944 = vshrl.u32 %v1943, 7
        %v1945 = vsub.s32 0, %v1944
        %v1946 = vrot.slane %v1941, %v1945
        %v1947 = vlaneseq
        %v1948 = vshrl.u32 %v1947, 7
        %v1949 = vsub.s32 1, %v1948
        %v1950 = vrot.slane %v1941, %v1949
        %v1953 = vmul.f32 %v1922, %v1946
        %v1954 = vmul.f32 %v1921, %v1950
        %v1955 = vadd.f32 %v1938, %v1953
        %v1956 = vadd.f32 %v1939, %v1954
        %1957 = vrot.lane.b32.xlu0 %v1410, 31
        %v1958 = vpop.permute.xlu0 %1957
        %1959 = vrot.lane.b32.xlu0 %v1419, 31
        %v1960 = vpop.permute.xlu0 %1959
        %vm1961 = vcmp.lt.s32.totalorder %v333, 31
        %v1962 = vsel %vm1961, %v1958, %v1960
        %v1963 = vsel %vm1961, %v1960, %v1958
        %1964 = vrot.lane.b32.xlu0 %v1439, 31
        %v1965 = vpop.permute.xlu0 %1964
        %1966 = vrot.lane.b32.xlu0 %v1440, 31
        %v1967 = vpop.permute.xlu0 %1966
        %v1968 = vsel %vm1961, %v1965, %v1967
        %v1969 = vsel %vm1961, %v1967, %v1965
        %s1970 = scalar_lea.vmem %s5, 19
        %v1971 = vld [vmem:[%s1970] ss:$8 sm:$0x3]
        %v1973 = vlaneseq
        %v1974 = vshrl.u32 %v1973, 7
        %v1975 = vsub.s32 0, %v1974
        %v1976 = vrot.slane %v1971, %v1975
        %v1977 = vlaneseq
        %v1978 = vshrl.u32 %v1977, 7
        %v1979 = vsub.s32 1, %v1978
        %v1980 = vrot.slane %v1971, %v1979
        %v1983 = vmul.f32 %v1963, %v1976
        %v1984 = vmul.f32 %v1962, %v1980
        %v1985 = vadd.f32 %v1955, %v1983
        %v1986 = vadd.f32 %v1956, %v1984
        %s1987 = scalar_lea.vmem %s1470, 19
        %v1988 = vld [vmem:[%s1987] ss:$8 sm:$0x3]
        %v1990 = vlaneseq
        %v1991 = vshrl.u32 %v1990, 7
        %v1992 = vsub.s32 0, %v1991
        %v1993 = vrot.slane %v1988, %v1992
        %v1994 = vlaneseq
        %v1995 = vshrl.u32 %v1994, 7
        %v1996 = vsub.s32 1, %v1995
        %v1997 = vrot.slane %v1988, %v1996
        %v2000 = vmul.f32 %v1969, %v1993
        %v2001 = vmul.f32 %v1968, %v1997
        %v2002 = vadd.f32 %v1985, %v2000
        %v2003 = vadd.f32 %v1986, %v2001
        %2004 = vrot.lane.b32.xlu0 %v1410, 30
        %v2005 = vpop.permute.xlu0 %2004
        %2006 = vrot.lane.b32.xlu0 %v1419, 30
        %v2007 = vpop.permute.xlu0 %2006
        %vm2008 = vcmp.lt.s32.totalorder %v333, 30
        %v2009 = vsel %vm2008, %v2005, %v2007
        %v2010 = vsel %vm2008, %v2007, %v2005
        %2011 = vrot.lane.b32.xlu0 %v1439, 30
        %v2012 = vpop.permute.xlu0 %2011
        %2013 = vrot.lane.b32.xlu0 %v1440, 30
        %v2014 = vpop.permute.xlu0 %2013
        %v2015 = vsel %vm2008, %v2012, %v2014
        %v2016 = vsel %vm2008, %v2014, %v2012
        %s2017 = scalar_lea.vmem %s5, 20
        %v2018 = vld [vmem:[%s2017] ss:$8 sm:$0x3]
        %v2020 = vlaneseq
        %v2021 = vshrl.u32 %v2020, 7
        %v2022 = vsub.s32 0, %v2021
        %v2023 = vrot.slane %v2018, %v2022
        %v2024 = vlaneseq
        %v2025 = vshrl.u32 %v2024, 7
        %v2026 = vsub.s32 1, %v2025
        %v2027 = vrot.slane %v2018, %v2026
        %v2030 = vmul.f32 %v2010, %v2023
        %v2031 = vmul.f32 %v2009, %v2027
        %v2032 = vadd.f32 %v2002, %v2030
        %v2033 = vadd.f32 %v2003, %v2031
        %s2034 = scalar_lea.vmem %s1470, 20
        %v2035 = vld [vmem:[%s2034] ss:$8 sm:$0x3]
        %v2037 = vlaneseq
        %v2038 = vshrl.u32 %v2037, 7
        %v2039 = vsub.s32 0, %v2038
        %v2040 = vrot.slane %v2035, %v2039
        %v2041 = vlaneseq
        %v2042 = vshrl.u32 %v2041, 7
        %v2043 = vsub.s32 1, %v2042
        %v2044 = vrot.slane %v2035, %v2043
        %v2047 = vmul.f32 %v2016, %v2040
        %v2048 = vmul.f32 %v2015, %v2044
        %v2049 = vadd.f32 %v2032, %v2047
        %v2050 = vadd.f32 %v2033, %v2048
        %2051 = vrot.lane.b32.xlu0 %v1410, 29
        %v2052 = vpop.permute.xlu0 %2051
        %2053 = vrot.lane.b32.xlu0 %v1419, 29
        %v2054 = vpop.permute.xlu0 %2053
        %vm2055 = vcmp.lt.s32.totalorder %v333, 29
        %v2056 = vsel %vm2055, %v2052, %v2054
        %v2057 = vsel %vm2055, %v2054, %v2052
        %2058 = vrot.lane.b32.xlu0 %v1439, 29
        %v2059 = vpop.permute.xlu0 %2058
        %2060 = vrot.lane.b32.xlu0 %v1440, 29
        %v2061 = vpop.permute.xlu0 %2060
        %v2062 = vsel %vm2055, %v2059, %v2061
        %v2063 = vsel %vm2055, %v2061, %v2059
        %s2064 = scalar_lea.vmem %s5, 21
        %v2065 = vld [vmem:[%s2064] ss:$8 sm:$0x3]
        %v2067 = vlaneseq
        %v2068 = vshrl.u32 %v2067, 7
        %v2069 = vsub.s32 0, %v2068
        %v2070 = vrot.slane %v2065, %v2069
        %v2071 = vlaneseq
        %v2072 = vshrl.u32 %v2071, 7
        %v2073 = vsub.s32 1, %v2072
        %v2074 = vrot.slane %v2065, %v2073
        %v2077 = vmul.f32 %v2057, %v2070
        %v2078 = vmul.f32 %v2056, %v2074
        %v2079 = vadd.f32 %v2049, %v2077
        %v2080 = vadd.f32 %v2050, %v2078
        %s2081 = scalar_lea.vmem %s1470, 21
        %v2082 = vld [vmem:[%s2081] ss:$8 sm:$0x3]
        %v2084 = vlaneseq
        %v2085 = vshrl.u32 %v2084, 7
        %v2086 = vsub.s32 0, %v2085
        %v2087 = vrot.slane %v2082, %v2086
        %v2088 = vlaneseq
        %v2089 = vshrl.u32 %v2088, 7
        %v2090 = vsub.s32 1, %v2089
        %v2091 = vrot.slane %v2082, %v2090
        %v2094 = vmul.f32 %v2063, %v2087
        %v2095 = vmul.f32 %v2062, %v2091
        %v2096 = vadd.f32 %v2079, %v2094
        %v2097 = vadd.f32 %v2080, %v2095
        %2098 = vrot.lane.b32.xlu0 %v1410, 19
        %v2099 = vpop.permute.xlu0 %2098
        %2100 = vrot.lane.b32.xlu0 %v1419, 19
        %v2101 = vpop.permute.xlu0 %2100
        %vm2102 = vcmp.lt.s32.totalorder %v333, 19
        %v2103 = vsel %vm2102, %v2099, %v2101
        %v2104 = vsel %vm2102, %v2101, %v2099
        %2105 = vrot.lane.b32.xlu0 %v1439, 19
        %v2106 = vpop.permute.xlu0 %2105
        %2107 = vrot.lane.b32.xlu0 %v1440, 19
        %v2108 = vpop.permute.xlu0 %2107
        %v2109 = vsel %vm2102, %v2106, %v2108
        %v2110 = vsel %vm2102, %v2108, %v2106
        %s2111 = scalar_lea.vmem %s5, 22
        %v2112 = vld [vmem:[%s2111] ss:$8 sm:$0x3]
        %v2114 = vlaneseq
        %v2115 = vshrl.u32 %v2114, 7
        %v2116 = vsub.s32 0, %v2115
        %v2117 = vrot.slane %v2112, %v2116
        %v2118 = vlaneseq
        %v2119 = vshrl.u32 %v2118, 7
        %v2120 = vsub.s32 1, %v2119
        %v2121 = vrot.slane %v2112, %v2120
        %v2124 = vmul.f32 %v2104, %v2117
        %v2125 = vmul.f32 %v2103, %v2121
        %v2126 = vadd.f32 %v2096, %v2124
        %v2127 = vadd.f32 %v2097, %v2125
        %s2128 = scalar_lea.vmem %s1470, 22
        %v2129 = vld [vmem:[%s2128] ss:$8 sm:$0x3]
        %v2131 = vlaneseq
        %v2132 = vshrl.u32 %v2131, 7
        %v2133 = vsub.s32 0, %v2132
        %v2134 = vrot.slane %v2129, %v2133
        %v2135 = vlaneseq
        %v2136 = vshrl.u32 %v2135, 7
        %v2137 = vsub.s32 1, %v2136
        %v2138 = vrot.slane %v2129, %v2137
        %v2141 = vmul.f32 %v2110, %v2134
        %v2142 = vmul.f32 %v2109, %v2138
        %v2143 = vadd.f32 %v2126, %v2141
        %v2144 = vadd.f32 %v2127, %v2142
        %2145 = vrot.lane.b32.xlu0 %v1410, 18
        %v2146 = vpop.permute.xlu0 %2145
        %2147 = vrot.lane.b32.xlu0 %v1419, 18
        %v2148 = vpop.permute.xlu0 %2147
        %vm2149 = vcmp.lt.s32.totalorder %v333, 18
        %v2150 = vsel %vm2149, %v2146, %v2148
        %v2151 = vsel %vm2149, %v2148, %v2146
        %2152 = vrot.lane.b32.xlu0 %v1439, 18
        %v2153 = vpop.permute.xlu0 %2152
        %2154 = vrot.lane.b32.xlu0 %v1440, 18
        %v2155 = vpop.permute.xlu0 %2154
        %v2156 = vsel %vm2149, %v2153, %v2155
        %v2157 = vsel %vm2149, %v2155, %v2153
        %s2158 = scalar_lea.vmem %s5, 23
        %v2159 = vld [vmem:[%s2158] ss:$8 sm:$0x3]
        %v2161 = vlaneseq
        %v2162 = vshrl.u32 %v2161, 7
        %v2163 = vsub.s32 0, %v2162
        %v2164 = vrot.slane %v2159, %v2163
        %v2165 = vlaneseq
        %v2166 = vshrl.u32 %v2165, 7
        %v2167 = vsub.s32 1, %v2166
        %v2168 = vrot.slane %v2159, %v2167
        %v2171 = vmul.f32 %v2151, %v2164
        %v2172 = vmul.f32 %v2150, %v2168
        %v2173 = vadd.f32 %v2143, %v2171
        %v2174 = vadd.f32 %v2144, %v2172
        %s2175 = scalar_lea.vmem %s1470, 23
        %v2176 = vld [vmem:[%s2175] ss:$8 sm:$0x3]
        %v2178 = vlaneseq
        %v2179 = vshrl.u32 %v2178, 7
        %v2180 = vsub.s32 0, %v2179
        %v2181 = vrot.slane %v2176, %v2180
        %v2182 = vlaneseq
        %v2183 = vshrl.u32 %v2182, 7
        %v2184 = vsub.s32 1, %v2183
        %v2185 = vrot.slane %v2176, %v2184
        %v2188 = vmul.f32 %v2157, %v2181
        %v2189 = vmul.f32 %v2156, %v2185
        %v2190 = vadd.f32 %v2173, %v2188
        %v2191 = vadd.f32 %v2174, %v2189
        %2192 = vrot.lane.b32.xlu0 %v1410, 17
        %v2193 = vpop.permute.xlu0 %2192
        %2194 = vrot.lane.b32.xlu0 %v1419, 17
        %v2195 = vpop.permute.xlu0 %2194
        %vm2196 = vcmp.lt.s32.totalorder %v333, 17
        %v2197 = vsel %vm2196, %v2193, %v2195
        %v2198 = vsel %vm2196, %v2195, %v2193
        %2199 = vrot.lane.b32.xlu0 %v1439, 17
        %v2200 = vpop.permute.xlu0 %2199
        %2201 = vrot.lane.b32.xlu0 %v1440, 17
        %v2202 = vpop.permute.xlu0 %2201
        %v2203 = vsel %vm2196, %v2200, %v2202
        %v2204 = vsel %vm2196, %v2202, %v2200
        %s2205 = scalar_lea.vmem %s5, 32
        %v2206 = vld [vmem:[%s2205] ss:$8 sm:$0x3]
        %v2208 = vlaneseq
        %v2209 = vshrl.u32 %v2208, 7
        %v2210 = vsub.s32 0, %v2209
        %v2211 = vrot.slane %v2206, %v2210
        %v2212 = vlaneseq
        %v2213 = vshrl.u32 %v2212, 7
        %v2214 = vsub.s32 1, %v2213
        %v2215 = vrot.slane %v2206, %v2214
        %v2218 = vmul.f32 %v2198, %v2211
        %v2219 = vmul.f32 %v2197, %v2215
        %v2220 = vadd.f32 %v2190, %v2218
        %v2221 = vadd.f32 %v2191, %v2219
        %s2222 = scalar_lea.vmem %s1470, 32
        %v2223 = vld [vmem:[%s2222] ss:$8 sm:$0x3]
        %v2225 = vlaneseq
        %v2226 = vshrl.u32 %v2225, 7
        %v2227 = vsub.s32 0, %v2226
        %v2228 = vrot.slane %v2223, %v2227
        %v2229 = vlaneseq
        %v2230 = vshrl.u32 %v2229, 7
        %v2231 = vsub.s32 1, %v2230
        %v2232 = vrot.slane %v2223, %v2231
        %v2235 = vmul.f32 %v2204, %v2228
        %v2236 = vmul.f32 %v2203, %v2232
        %v2237 = vadd.f32 %v2220, %v2235
        %v2238 = vadd.f32 %v2221, %v2236
        %2239 = vrot.lane.b32.xlu0 %v1410, 16
        %v2240 = vpop.permute.xlu0 %2239
        %2241 = vrot.lane.b32.xlu0 %v1419, 16
        %v2242 = vpop.permute.xlu0 %2241
        %vm2243 = vcmp.lt.s32.totalorder %v333, 16
        %v2244 = vsel %vm2243, %v2240, %v2242
        %v2245 = vsel %vm2243, %v2242, %v2240
        %2246 = vrot.lane.b32.xlu0 %v1439, 16
        %v2247 = vpop.permute.xlu0 %2246
        %2248 = vrot.lane.b32.xlu0 %v1440, 16
        %v2249 = vpop.permute.xlu0 %2248
        %v2250 = vsel %vm2243, %v2247, %v2249
        %v2251 = vsel %vm2243, %v2249, %v2247
        %s2252 = scalar_lea.vmem %s5, 33
        %v2253 = vld [vmem:[%s2252] ss:$8 sm:$0x3]
        %v2255 = vlaneseq
        %v2256 = vshrl.u32 %v2255, 7
        %v2257 = vsub.s32 0, %v2256
        %v2258 = vrot.slane %v2253, %v2257
        %v2259 = vlaneseq
        %v2260 = vshrl.u32 %v2259, 7
        %v2261 = vsub.s32 1, %v2260
        %v2262 = vrot.slane %v2253, %v2261
        %v2265 = vmul.f32 %v2245, %v2258
        %v2266 = vmul.f32 %v2244, %v2262
        %v2267 = vadd.f32 %v2237, %v2265
        %v2268 = vadd.f32 %v2238, %v2266
        %s2269 = scalar_lea.vmem %s1470, 33
        %v2270 = vld [vmem:[%s2269] ss:$8 sm:$0x3]
        %v2272 = vlaneseq
        %v2273 = vshrl.u32 %v2272, 7
        %v2274 = vsub.s32 0, %v2273
        %v2275 = vrot.slane %v2270, %v2274
        %v2276 = vlaneseq
        %v2277 = vshrl.u32 %v2276, 7
        %v2278 = vsub.s32 1, %v2277
        %v2279 = vrot.slane %v2270, %v2278
        %v2282 = vmul.f32 %v2251, %v2275
        %v2283 = vmul.f32 %v2250, %v2279
        %v2284 = vadd.f32 %v2267, %v2282
        %v2285 = vadd.f32 %v2268, %v2283
        %2286 = vrot.lane.b32.xlu0 %v1410, 15
        %v2287 = vpop.permute.xlu0 %2286
        %2288 = vrot.lane.b32.xlu0 %v1419, 15
        %v2289 = vpop.permute.xlu0 %2288
        %vm2290 = vcmp.lt.s32.totalorder %v333, 15
        %v2291 = vsel %vm2290, %v2287, %v2289
        %v2292 = vsel %vm2290, %v2289, %v2287
        %2293 = vrot.lane.b32.xlu0 %v1439, 15
        %v2294 = vpop.permute.xlu0 %2293
        %2295 = vrot.lane.b32.xlu0 %v1440, 15
        %v2296 = vpop.permute.xlu0 %2295
        %v2297 = vsel %vm2290, %v2294, %v2296
        %v2298 = vsel %vm2290, %v2296, %v2294
        %s2299 = scalar_lea.vmem %s5, 34
        %v2300 = vld [vmem:[%s2299] ss:$8 sm:$0x3]
        %v2302 = vlaneseq
        %v2303 = vshrl.u32 %v2302, 7
        %v2304 = vsub.s32 0, %v2303
        %v2305 = vrot.slane %v2300, %v2304
        %v2306 = vlaneseq
        %v2307 = vshrl.u32 %v2306, 7
        %v2308 = vsub.s32 1, %v2307
        %v2309 = vrot.slane %v2300, %v2308
        %v2312 = vmul.f32 %v2292, %v2305
        %v2313 = vmul.f32 %v2291, %v2309
        %v2314 = vadd.f32 %v2284, %v2312
        %v2315 = vadd.f32 %v2285, %v2313
        %s2316 = scalar_lea.vmem %s1470, 34
        %v2317 = vld [vmem:[%s2316] ss:$8 sm:$0x3]
        %v2319 = vlaneseq
        %v2320 = vshrl.u32 %v2319, 7
        %v2321 = vsub.s32 0, %v2320
        %v2322 = vrot.slane %v2317, %v2321
        %v2323 = vlaneseq
        %v2324 = vshrl.u32 %v2323, 7
        %v2325 = vsub.s32 1, %v2324
        %v2326 = vrot.slane %v2317, %v2325
        %v2329 = vmul.f32 %v2298, %v2322
        %v2330 = vmul.f32 %v2297, %v2326
        %v2331 = vadd.f32 %v2314, %v2329
        %v2332 = vadd.f32 %v2315, %v2330
        %2333 = vrot.lane.b32.xlu0 %v1410, 14
        %v2334 = vpop.permute.xlu0 %2333
        %2335 = vrot.lane.b32.xlu0 %v1419, 14
        %v2336 = vpop.permute.xlu0 %2335
        %vm2337 = vcmp.lt.s32.totalorder %v333, 14
        %v2338 = vsel %vm2337, %v2334, %v2336
        %v2339 = vsel %vm2337, %v2336, %v2334
        %2340 = vrot.lane.b32.xlu0 %v1439, 14
        %v2341 = vpop.permute.xlu0 %2340
        %2342 = vrot.lane.b32.xlu0 %v1440, 14
        %v2343 = vpop.permute.xlu0 %2342
        %v2344 = vsel %vm2337, %v2341, %v2343
        %v2345 = vsel %vm2337, %v2343, %v2341
        %s2346 = scalar_lea.vmem %s5, 35
        %v2347 = vld [vmem:[%s2346] ss:$8 sm:$0x3]
        %v2349 = vlaneseq
        %v2350 = vshrl.u32 %v2349, 7
        %v2351 = vsub.s32 0, %v2350
        %v2352 = vrot.slane %v2347, %v2351
        %v2353 = vlaneseq
        %v2354 = vshrl.u32 %v2353, 7
        %v2355 = vsub.s32 1, %v2354
        %v2356 = vrot.slane %v2347, %v2355
        %v2359 = vmul.f32 %v2339, %v2352
        %v2360 = vmul.f32 %v2338, %v2356
        %v2361 = vadd.f32 %v2331, %v2359
        %v2362 = vadd.f32 %v2332, %v2360
        %s2363 = scalar_lea.vmem %s1470, 35
        %v2364 = vld [vmem:[%s2363] ss:$8 sm:$0x3]
        %v2366 = vlaneseq
        %v2367 = vshrl.u32 %v2366, 7
        %v2368 = vsub.s32 0, %v2367
        %v2369 = vrot.slane %v2364, %v2368
        %v2370 = vlaneseq
        %v2371 = vshrl.u32 %v2370, 7
        %v2372 = vsub.s32 1, %v2371
        %v2373 = vrot.slane %v2364, %v2372
        %v2376 = vmul.f32 %v2345, %v2369
        %v2377 = vmul.f32 %v2344, %v2373
        %v2378 = vadd.f32 %v2361, %v2376
        %v2379 = vadd.f32 %v2362, %v2377
        %2380 = vrot.lane.b32.xlu0 %v1410, 13
        %v2381 = vpop.permute.xlu0 %2380
        %2382 = vrot.lane.b32.xlu0 %v1419, 13
        %v2383 = vpop.permute.xlu0 %2382
        %vm2384 = vcmp.lt.s32.totalorder %v333, 13
        %v2385 = vsel %vm2384, %v2381, %v2383
        %v2386 = vsel %vm2384, %v2383, %v2381
        %2387 = vrot.lane.b32.xlu0 %v1439, 13
        %v2388 = vpop.permute.xlu0 %2387
        %2389 = vrot.lane.b32.xlu0 %v1440, 13
        %v2390 = vpop.permute.xlu0 %2389
        %v2391 = vsel %vm2384, %v2388, %v2390
        %v2392 = vsel %vm2384, %v2390, %v2388
        %s2393 = scalar_lea.vmem %s5, 36
        %v2394 = vld [vmem:[%s2393] ss:$8 sm:$0x3]
        %v2396 = vlaneseq
        %v2397 = vshrl.u32 %v2396, 7
        %v2398 = vsub.s32 0, %v2397
        %v2399 = vrot.slane %v2394, %v2398
        %v2400 = vlaneseq
        %v2401 = vshrl.u32 %v2400, 7
        %v2402 = vsub.s32 1, %v2401
        %v2403 = vrot.slane %v2394, %v2402
        %v2406 = vmul.f32 %v2386, %v2399
        %v2407 = vmul.f32 %v2385, %v2403
        %v2408 = vadd.f32 %v2378, %v2406
        %v2409 = vadd.f32 %v2379, %v2407
        %s2410 = scalar_lea.vmem %s1470, 36
        %v2411 = vld [vmem:[%s2410] ss:$8 sm:$0x3]
        %v2413 = vlaneseq
        %v2414 = vshrl.u32 %v2413, 7
        %v2415 = vsub.s32 0, %v2414
        %v2416 = vrot.slane %v2411, %v2415
        %v2417 = vlaneseq
        %v2418 = vshrl.u32 %v2417, 7
        %v2419 = vsub.s32 1, %v2418
        %v2420 = vrot.slane %v2411, %v2419
        %v2423 = vmul.f32 %v2392, %v2416
        %v2424 = vmul.f32 %v2391, %v2420
        %v2425 = vadd.f32 %v2408, %v2423
        %v2426 = vadd.f32 %v2409, %v2424
        %2427 = vrot.lane.b32.xlu0 %v1410, 3
        %v2428 = vpop.permute.xlu0 %2427
        %2429 = vrot.lane.b32.xlu0 %v1419, 3
        %v2430 = vpop.permute.xlu0 %2429
        %vm2431 = vcmp.lt.s32.totalorder %v333, 3
        %v2432 = vsel %vm2431, %v2428, %v2430
        %v2433 = vsel %vm2431, %v2430, %v2428
        %2434 = vrot.lane.b32.xlu0 %v1439, 3
        %v2435 = vpop.permute.xlu0 %2434
        %2436 = vrot.lane.b32.xlu0 %v1440, 3
        %v2437 = vpop.permute.xlu0 %2436
        %v2438 = vsel %vm2431, %v2435, %v2437
        %v2439 = vsel %vm2431, %v2437, %v2435
        %s2440 = scalar_lea.vmem %s5, 37
        %v2441 = vld [vmem:[%s2440] ss:$8 sm:$0x3]
        %v2443 = vlaneseq
        %v2444 = vshrl.u32 %v2443, 7
        %v2445 = vsub.s32 0, %v2444
        %v2446 = vrot.slane %v2441, %v2445
        %v2447 = vlaneseq
        %v2448 = vshrl.u32 %v2447, 7
        %v2449 = vsub.s32 1, %v2448
        %v2450 = vrot.slane %v2441, %v2449
        %v2453 = vmul.f32 %v2433, %v2446
        %v2454 = vmul.f32 %v2432, %v2450
        %v2455 = vadd.f32 %v2425, %v2453
        %v2456 = vadd.f32 %v2426, %v2454
        %s2457 = scalar_lea.vmem %s1470, 37
        %v2458 = vld [vmem:[%s2457] ss:$8 sm:$0x3]
        %v2460 = vlaneseq
        %v2461 = vshrl.u32 %v2460, 7
        %v2462 = vsub.s32 0, %v2461
        %v2463 = vrot.slane %v2458, %v2462
        %v2464 = vlaneseq
        %v2465 = vshrl.u32 %v2464, 7
        %v2466 = vsub.s32 1, %v2465
        %v2467 = vrot.slane %v2458, %v2466
        %v2470 = vmul.f32 %v2439, %v2463
        %v2471 = vmul.f32 %v2438, %v2467
        %v2472 = vadd.f32 %v2455, %v2470
        %v2473 = vadd.f32 %v2456, %v2471
        %2474 = vrot.lane.b32.xlu0 %v1410, 2
        %v2475 = vpop.permute.xlu0 %2474
        %2476 = vrot.lane.b32.xlu0 %v1419, 2
        %v2477 = vpop.permute.xlu0 %2476
        %vm2478 = vcmp.lt.s32.totalorder %v333, 2
        %v2479 = vsel %vm2478, %v2475, %v2477
        %v2480 = vsel %vm2478, %v2477, %v2475
        %2481 = vrot.lane.b32.xlu0 %v1439, 2
        %v2482 = vpop.permute.xlu0 %2481
        %2483 = vrot.lane.b32.xlu0 %v1440, 2
        %v2484 = vpop.permute.xlu0 %2483
        %v2485 = vsel %vm2478, %v2482, %v2484
        %v2486 = vsel %vm2478, %v2484, %v2482
        %s2487 = scalar_lea.vmem %s5, 38
        %v2488 = vld [vmem:[%s2487] ss:$8 sm:$0x3]
        %v2490 = vlaneseq
        %v2491 = vshrl.u32 %v2490, 7
        %v2492 = vsub.s32 0, %v2491
        %v2493 = vrot.slane %v2488, %v2492
        %v2494 = vlaneseq
        %v2495 = vshrl.u32 %v2494, 7
        %v2496 = vsub.s32 1, %v2495
        %v2497 = vrot.slane %v2488, %v2496
        %v2500 = vmul.f32 %v2480, %v2493
        %v2501 = vmul.f32 %v2479, %v2497
        %v2502 = vadd.f32 %v2472, %v2500
        %v2503 = vadd.f32 %v2473, %v2501
        %s2504 = scalar_lea.vmem %s1470, 38
        %v2505 = vld [vmem:[%s2504] ss:$8 sm:$0x3]
        %v2507 = vlaneseq
        %v2508 = vshrl.u32 %v2507, 7
        %v2509 = vsub.s32 0, %v2508
        %v2510 = vrot.slane %v2505, %v2509
        %v2511 = vlaneseq
        %v2512 = vshrl.u32 %v2511, 7
        %v2513 = vsub.s32 1, %v2512
        %v2514 = vrot.slane %v2505, %v2513
        %v2517 = vmul.f32 %v2486, %v2510
        %v2518 = vmul.f32 %v2485, %v2514
        %v2519 = vadd.f32 %v2502, %v2517
        %v2520 = vadd.f32 %v2503, %v2518
        %2521 = vrot.lane.b32.xlu0 %v1410, 1
        %v2522 = vpop.permute.xlu0 %2521
        %2523 = vrot.lane.b32.xlu0 %v1419, 1
        %v2524 = vpop.permute.xlu0 %2523
        %vm2525 = vcmp.lt.s32.totalorder %v333, 1
        %v2526 = vsel %vm2525, %v2522, %v2524
        %v2527 = vsel %vm2525, %v2524, %v2522
        %2528 = vrot.lane.b32.xlu0 %v1439, 1
        %v2529 = vpop.permute.xlu0 %2528
        %2530 = vrot.lane.b32.xlu0 %v1440, 1
        %v2531 = vpop.permute.xlu0 %2530
        %v2532 = vsel %vm2525, %v2529, %v2531
        %v2533 = vsel %vm2525, %v2531, %v2529
        %s2534 = scalar_lea.vmem %s5, 39
        %v2535 = vld [vmem:[%s2534] ss:$8 sm:$0x3]
        %v2537 = vlaneseq
        %v2538 = vshrl.u32 %v2537, 7
        %v2539 = vsub.s32 0, %v2538
        %v2540 = vrot.slane %v2535, %v2539
        %v2541 = vlaneseq
        %v2542 = vshrl.u32 %v2541, 7
        %v2543 = vsub.s32 1, %v2542
        %v2544 = vrot.slane %v2535, %v2543
        %v2547 = vmul.f32 %v2527, %v2540
        %v2548 = vmul.f32 %v2526, %v2544
        %v2549 = vadd.f32 %v2519, %v2547
        %v2550 = vadd.f32 %v2520, %v2548
        %s2551 = scalar_lea.vmem %s1470, 39
        %v2552 = vld [vmem:[%s2551] ss:$8 sm:$0x3]
        %v2554 = vlaneseq
        %v2555 = vshrl.u32 %v2554, 7
        %v2556 = vsub.s32 0, %v2555
        %v2557 = vrot.slane %v2552, %v2556
        %v2558 = vlaneseq
        %v2559 = vshrl.u32 %v2558, 7
        %v2560 = vsub.s32 1, %v2559
        %v2561 = vrot.slane %v2552, %v2560
        %v2564 = vmul.f32 %v2533, %v2557
        %v2565 = vmul.f32 %v2532, %v2561
        %v2566 = vadd.f32 %v2549, %v2564
        %v2567 = vadd.f32 %v2550, %v2565
        %s2568 = scalar_lea.vmem %s5, 48
        %v2569 = vld [vmem:[%s2568] ss:$8 sm:$0x3]
        %v2571 = vlaneseq
        %v2572 = vshrl.u32 %v2571, 7
        %v2573 = vsub.s32 0, %v2572
        %v2574 = vrot.slane %v2569, %v2573
        %v2575 = vlaneseq
        %v2576 = vshrl.u32 %v2575, 7
        %v2577 = vsub.s32 1, %v2576
        %v2578 = vrot.slane %v2569, %v2577
        %v2581 = vmul.f32 %v1410, %v2574
        %v2582 = vmul.f32 %v1419, %v2578
        %v2583 = vadd.f32 %v2566, %v2581
        %v2584 = vadd.f32 %v2567, %v2582
        %s2585 = scalar_lea.vmem %s1470, 48
        %v2586 = vld [vmem:[%s2585] ss:$8 sm:$0x3]
        %v2588 = vlaneseq
        %v2589 = vshrl.u32 %v2588, 7
        %v2590 = vsub.s32 0, %v2589
        %v2591 = vrot.slane %v2586, %v2590
        %v2592 = vlaneseq
        %v2593 = vshrl.u32 %v2592, 7
        %v2594 = vsub.s32 1, %v2593
        %v2595 = vrot.slane %v2586, %v2594
        %v2598 = vmul.f32 %v1439, %v2591
        %v2599 = vmul.f32 %v1440, %v2595
        %v2600 = vadd.f32 %v2583, %v2598
        %v2601 = vadd.f32 %v2584, %v2599
        %2602 = vrot.lane.b32.xlu0 %v1410, 127
        %v2603 = vpop.permute.xlu0 %2602
        %2604 = vrot.lane.b32.xlu0 %v1419, 127
        %v2605 = vpop.permute.xlu0 %2604
        %vm2606 = vcmp.lt.s32.totalorder %v333, 127
        %v2607 = vsel %vm2606, %v2603, %v2605
        %v2608 = vsel %vm2606, %v2605, %v2603
        %2609 = vrot.lane.b32.xlu0 %v1439, 127
        %v2610 = vpop.permute.xlu0 %2609
        %2611 = vrot.lane.b32.xlu0 %v1440, 127
        %v2612 = vpop.permute.xlu0 %2611
        %v2613 = vsel %vm2606, %v2610, %v2612
        %v2614 = vsel %vm2606, %v2612, %v2610
        %s2615 = scalar_lea.vmem %s5, 49
        %v2616 = vld [vmem:[%s2615] ss:$8 sm:$0x3]
        %v2618 = vlaneseq
        %v2619 = vshrl.u32 %v2618, 7
        %v2620 = vsub.s32 0, %v2619
        %v2621 = vrot.slane %v2616, %v2620
        %v2622 = vlaneseq
        %v2623 = vshrl.u32 %v2622, 7
        %v2624 = vsub.s32 1, %v2623
        %v2625 = vrot.slane %v2616, %v2624
        %v2628 = vmul.f32 %v2607, %v2621
        %v2629 = vmul.f32 %v2608, %v2625
        %v2630 = vadd.f32 %v2600, %v2628
        %v2631 = vadd.f32 %v2601, %v2629
        %s2632 = scalar_lea.vmem %s1470, 49
        %v2633 = vld [vmem:[%s2632] ss:$8 sm:$0x3]
        %v2635 = vlaneseq
        %v2636 = vshrl.u32 %v2635, 7
        %v2637 = vsub.s32 0, %v2636
        %v2638 = vrot.slane %v2633, %v2637
        %v2639 = vlaneseq
        %v2640 = vshrl.u32 %v2639, 7
        %v2641 = vsub.s32 1, %v2640
        %v2642 = vrot.slane %v2633, %v2641
        %v2645 = vmul.f32 %v2613, %v2638
        %v2646 = vmul.f32 %v2614, %v2642
        %v2647 = vadd.f32 %v2630, %v2645
        %v2648 = vadd.f32 %v2631, %v2646
        %2649 = vrot.lane.b32.xlu0 %v1410, 126
        %v2650 = vpop.permute.xlu0 %2649
        %2651 = vrot.lane.b32.xlu0 %v1419, 126
        %v2652 = vpop.permute.xlu0 %2651
        %vm2653 = vcmp.lt.s32.totalorder %v333, 126
        %v2654 = vsel %vm2653, %v2650, %v2652
        %v2655 = vsel %vm2653, %v2652, %v2650
        %2656 = vrot.lane.b32.xlu0 %v1439, 126
        %v2657 = vpop.permute.xlu0 %2656
        %2658 = vrot.lane.b32.xlu0 %v1440, 126
        %v2659 = vpop.permute.xlu0 %2658
        %v2660 = vsel %vm2653, %v2657, %v2659
        %v2661 = vsel %vm2653, %v2659, %v2657
        %s2662 = scalar_lea.vmem %s5, 50
        %v2663 = vld [vmem:[%s2662] ss:$8 sm:$0x3]
        %v2665 = vlaneseq
        %v2666 = vshrl.u32 %v2665, 7
        %v2667 = vsub.s32 0, %v2666
        %v2668 = vrot.slane %v2663, %v2667
        %v2669 = vlaneseq
        %v2670 = vshrl.u32 %v2669, 7
        %v2671 = vsub.s32 1, %v2670
        %v2672 = vrot.slane %v2663, %v2671
        %v2675 = vmul.f32 %v2654, %v2668
        %v2676 = vmul.f32 %v2655, %v2672
        %v2677 = vadd.f32 %v2647, %v2675
        %v2678 = vadd.f32 %v2648, %v2676
        %s2679 = scalar_lea.vmem %s1470, 50
        %v2680 = vld [vmem:[%s2679] ss:$8 sm:$0x3]
        %v2682 = vlaneseq
        %v2683 = vshrl.u32 %v2682, 7
        %v2684 = vsub.s32 0, %v2683
        %v2685 = vrot.slane %v2680, %v2684
        %v2686 = vlaneseq
        %v2687 = vshrl.u32 %v2686, 7
        %v2688 = vsub.s32 1, %v2687
        %v2689 = vrot.slane %v2680, %v2688
        %v2692 = vmul.f32 %v2660, %v2685
        %v2693 = vmul.f32 %v2661, %v2689
        %v2694 = vadd.f32 %v2677, %v2692
        %v2695 = vadd.f32 %v2678, %v2693
        %2696 = vrot.lane.b32.xlu0 %v1410, 125
        %v2697 = vpop.permute.xlu0 %2696
        %2698 = vrot.lane.b32.xlu0 %v1419, 125
        %v2699 = vpop.permute.xlu0 %2698
        %vm2700 = vcmp.lt.s32.totalorder %v333, 125
        %v2701 = vsel %vm2700, %v2697, %v2699
        %v2702 = vsel %vm2700, %v2699, %v2697
        %2703 = vrot.lane.b32.xlu0 %v1439, 125
        %v2704 = vpop.permute.xlu0 %2703
        %2705 = vrot.lane.b32.xlu0 %v1440, 125
        %v2706 = vpop.permute.xlu0 %2705
        %v2707 = vsel %vm2700, %v2704, %v2706
        %v2708 = vsel %vm2700, %v2706, %v2704
        %s2709 = scalar_lea.vmem %s5, 51
        %v2710 = vld [vmem:[%s2709] ss:$8 sm:$0x3]
        %v2712 = vlaneseq
        %v2713 = vshrl.u32 %v2712, 7
        %v2714 = vsub.s32 0, %v2713
        %v2715 = vrot.slane %v2710, %v2714
        %v2716 = vlaneseq
        %v2717 = vshrl.u32 %v2716, 7
        %v2718 = vsub.s32 1, %v2717
        %v2719 = vrot.slane %v2710, %v2718
        %v2722 = vmul.f32 %v2701, %v2715
        %v2723 = vmul.f32 %v2702, %v2719
        %v2724 = vadd.f32 %v2694, %v2722
        %v2725 = vadd.f32 %v2695, %v2723
        %s2726 = scalar_lea.vmem %s1470, 51
        %v2727 = vld [vmem:[%s2726] ss:$8 sm:$0x3]
        %v2729 = vlaneseq
        %v2730 = vshrl.u32 %v2729, 7
        %v2731 = vsub.s32 0, %v2730
        %v2732 = vrot.slane %v2727, %v2731
        %v2733 = vlaneseq
        %v2734 = vshrl.u32 %v2733, 7
        %v2735 = vsub.s32 1, %v2734
        %v2736 = vrot.slane %v2727, %v2735
        %v2739 = vmul.f32 %v2707, %v2732
        %v2740 = vmul.f32 %v2708, %v2736
        %v2741 = vadd.f32 %v2724, %v2739
        %v2742 = vadd.f32 %v2725, %v2740
        %2743 = vrot.lane.b32.xlu0 %v1410, 115
        %v2744 = vpop.permute.xlu0 %2743
        %2745 = vrot.lane.b32.xlu0 %v1419, 115
        %v2746 = vpop.permute.xlu0 %2745
        %vm2747 = vcmp.lt.s32.totalorder %v333, 115
        %v2748 = vsel %vm2747, %v2744, %v2746
        %v2749 = vsel %vm2747, %v2746, %v2744
        %2750 = vrot.lane.b32.xlu0 %v1439, 115
        %v2751 = vpop.permute.xlu0 %2750
        %2752 = vrot.lane.b32.xlu0 %v1440, 115
        %v2753 = vpop.permute.xlu0 %2752
        %v2754 = vsel %vm2747, %v2751, %v2753
        %v2755 = vsel %vm2747, %v2753, %v2751
        %s2756 = scalar_lea.vmem %s5, 52
        %v2757 = vld [vmem:[%s2756] ss:$8 sm:$0x3]
        %v2759 = vlaneseq
        %v2760 = vshrl.u32 %v2759, 7
        %v2761 = vsub.s32 0, %v2760
        %v2762 = vrot.slane %v2757, %v2761
        %v2763 = vlaneseq
        %v2764 = vshrl.u32 %v2763, 7
        %v2765 = vsub.s32 1, %v2764
        %v2766 = vrot.slane %v2757, %v2765
        %v2769 = vmul.f32 %v2748, %v2762
        %v2770 = vmul.f32 %v2749, %v2766
        %v2771 = vadd.f32 %v2741, %v2769
        %v2772 = vadd.f32 %v2742, %v2770
        %s2773 = scalar_lea.vmem %s1470, 52
        %v2774 = vld [vmem:[%s2773] ss:$8 sm:$0x3]
        %v2776 = vlaneseq
        %v2777 = vshrl.u32 %v2776, 7
        %v2778 = vsub.s32 0, %v2777
        %v2779 = vrot.slane %v2774, %v2778
        %v2780 = vlaneseq
        %v2781 = vshrl.u32 %v2780, 7
        %v2782 = vsub.s32 1, %v2781
        %v2783 = vrot.slane %v2774, %v2782
        %v2786 = vmul.f32 %v2754, %v2779
        %v2787 = vmul.f32 %v2755, %v2783
        %v2788 = vadd.f32 %v2771, %v2786
        %v2789 = vadd.f32 %v2772, %v2787
        %2790 = vrot.lane.b32.xlu0 %v1410, 114
        %v2791 = vpop.permute.xlu0 %2790
        %2792 = vrot.lane.b32.xlu0 %v1419, 114
        %v2793 = vpop.permute.xlu0 %2792
        %vm2794 = vcmp.lt.s32.totalorder %v333, 114
        %v2795 = vsel %vm2794, %v2791, %v2793
        %v2796 = vsel %vm2794, %v2793, %v2791
        %2797 = vrot.lane.b32.xlu0 %v1439, 114
        %v2798 = vpop.permute.xlu0 %2797
        %2799 = vrot.lane.b32.xlu0 %v1440, 114
        %v2800 = vpop.permute.xlu0 %2799
        %v2801 = vsel %vm2794, %v2798, %v2800
        %v2802 = vsel %vm2794, %v2800, %v2798
        %s2803 = scalar_lea.vmem %s5, 53
        %v2804 = vld [vmem:[%s2803] ss:$8 sm:$0x3]
        %v2806 = vlaneseq
        %v2807 = vshrl.u32 %v2806, 7
        %v2808 = vsub.s32 0, %v2807
        %v2809 = vrot.slane %v2804, %v2808
        %v2810 = vlaneseq
        %v2811 = vshrl.u32 %v2810, 7
        %v2812 = vsub.s32 1, %v2811
        %v2813 = vrot.slane %v2804, %v2812
        %v2816 = vmul.f32 %v2795, %v2809
        %v2817 = vmul.f32 %v2796, %v2813
        %v2818 = vadd.f32 %v2788, %v2816
        %v2819 = vadd.f32 %v2789, %v2817
        %s2820 = scalar_lea.vmem %s1470, 53
        %v2821 = vld [vmem:[%s2820] ss:$8 sm:$0x3]
        %v2823 = vlaneseq
        %v2824 = vshrl.u32 %v2823, 7
        %v2825 = vsub.s32 0, %v2824
        %v2826 = vrot.slane %v2821, %v2825
        %v2827 = vlaneseq
        %v2828 = vshrl.u32 %v2827, 7
        %v2829 = vsub.s32 1, %v2828
        %v2830 = vrot.slane %v2821, %v2829
        %v2833 = vmul.f32 %v2801, %v2826
        %v2834 = vmul.f32 %v2802, %v2830
        %v2835 = vadd.f32 %v2818, %v2833
        %v2836 = vadd.f32 %v2819, %v2834
        %2837 = vrot.lane.b32.xlu0 %v1410, 113
        %v2838 = vpop.permute.xlu0 %2837
        %2839 = vrot.lane.b32.xlu0 %v1419, 113
        %v2840 = vpop.permute.xlu0 %2839
        %vm2841 = vcmp.lt.s32.totalorder %v333, 113
        %v2842 = vsel %vm2841, %v2838, %v2840
        %v2843 = vsel %vm2841, %v2840, %v2838
        %2844 = vrot.lane.b32.xlu0 %v1439, 113
        %v2845 = vpop.permute.xlu0 %2844
        %2846 = vrot.lane.b32.xlu0 %v1440, 113
        %v2847 = vpop.permute.xlu0 %2846
        %v2848 = vsel %vm2841, %v2845, %v2847
        %v2849 = vsel %vm2841, %v2847, %v2845
        %s2850 = scalar_lea.vmem %s5, 54
        %v2851 = vld [vmem:[%s2850] ss:$8 sm:$0x3]
        %v2853 = vlaneseq
        %v2854 = vshrl.u32 %v2853, 7
        %v2855 = vsub.s32 0, %v2854
        %v2856 = vrot.slane %v2851, %v2855
        %v2857 = vlaneseq
        %v2858 = vshrl.u32 %v2857, 7
        %v2859 = vsub.s32 1, %v2858
        %v2860 = vrot.slane %v2851, %v2859
        %v2863 = vmul.f32 %v2842, %v2856
        %v2864 = vmul.f32 %v2843, %v2860
        %v2865 = vadd.f32 %v2835, %v2863
        %v2866 = vadd.f32 %v2836, %v2864
        %s2867 = scalar_lea.vmem %s1470, 54
        %v2868 = vld [vmem:[%s2867] ss:$8 sm:$0x3]
        %v2870 = vlaneseq
        %v2871 = vshrl.u32 %v2870, 7
        %v2872 = vsub.s32 0, %v2871
        %v2873 = vrot.slane %v2868, %v2872
        %v2874 = vlaneseq
        %v2875 = vshrl.u32 %v2874, 7
        %v2876 = vsub.s32 1, %v2875
        %v2877 = vrot.slane %v2868, %v2876
        %v2880 = vmul.f32 %v2848, %v2873
        %v2881 = vmul.f32 %v2849, %v2877
        %v2882 = vadd.f32 %v2865, %v2880
        %v2883 = vadd.f32 %v2866, %v2881
        %2884 = vrot.lane.b32.xlu0 %v1410, 112
        %v2885 = vpop.permute.xlu0 %2884
        %2886 = vrot.lane.b32.xlu0 %v1419, 112
        %v2887 = vpop.permute.xlu0 %2886
        %vm2888 = vcmp.lt.s32.totalorder %v333, 112
        %v2889 = vsel %vm2888, %v2885, %v2887
        %v2890 = vsel %vm2888, %v2887, %v2885
        %2891 = vrot.lane.b32.xlu0 %v1439, 112
        %v2892 = vpop.permute.xlu0 %2891
        %2893 = vrot.lane.b32.xlu0 %v1440, 112
        %v2894 = vpop.permute.xlu0 %2893
        %v2895 = vsel %vm2888, %v2892, %v2894
        %v2896 = vsel %vm2888, %v2894, %v2892
        %s2897 = scalar_lea.vmem %s5, 55
        %v2898 = vld [vmem:[%s2897] ss:$8 sm:$0x3]
        %v2900 = vlaneseq
        %v2901 = vshrl.u32 %v2900, 7
        %v2902 = vsub.s32 0, %v2901
        %v2903 = vrot.slane %v2898, %v2902
        %v2904 = vlaneseq
        %v2905 = vshrl.u32 %v2904, 7
        %v2906 = vsub.s32 1, %v2905
        %v2907 = vrot.slane %v2898, %v2906
        %v2910 = vmul.f32 %v2889, %v2903
        %v2911 = vmul.f32 %v2890, %v2907
        %v2912 = vadd.f32 %v2882, %v2910
        %v2913 = vadd.f32 %v2883, %v2911
        %s2914 = scalar_lea.vmem %s1470, 55
        %v2915 = vld [vmem:[%s2914] ss:$8 sm:$0x3]
        %v2917 = vlaneseq
        %v2918 = vshrl.u32 %v2917, 7
        %v2919 = vsub.s32 0, %v2918
        %v2920 = vrot.slane %v2915, %v2919
        %v2921 = vlaneseq
        %v2922 = vshrl.u32 %v2921, 7
        %v2923 = vsub.s32 1, %v2922
        %v2924 = vrot.slane %v2915, %v2923
        %v2927 = vmul.f32 %v2895, %v2920
        %v2928 = vmul.f32 %v2896, %v2924
        %v2929 = vadd.f32 %v2912, %v2927
        %v2930 = vadd.f32 %v2913, %v2928
        %2931 = vrot.lane.b32.xlu0 %v1410, 111
        %v2932 = vpop.permute.xlu0 %2931
        %2933 = vrot.lane.b32.xlu0 %v1419, 111
        %v2934 = vpop.permute.xlu0 %2933
        %vm2935 = vcmp.lt.s32.totalorder %v333, 111
        %v2936 = vsel %vm2935, %v2932, %v2934
        %v2937 = vsel %vm2935, %v2934, %v2932
        %2938 = vrot.lane.b32.xlu0 %v1439, 111
        %v2939 = vpop.permute.xlu0 %2938
        %2940 = vrot.lane.b32.xlu0 %v1440, 111
        %v2941 = vpop.permute.xlu0 %2940
        %v2942 = vsel %vm2935, %v2939, %v2941
        %v2943 = vsel %vm2935, %v2941, %v2939
        %s2944 = scalar_lea.vmem %s5, 64
        %v2945 = vld [vmem:[%s2944] ss:$8 sm:$0x3]
        %v2947 = vlaneseq
        %v2948 = vshrl.u32 %v2947, 7
        %v2949 = vsub.s32 0, %v2948
        %v2950 = vrot.slane %v2945, %v2949
        %v2951 = vlaneseq
        %v2952 = vshrl.u32 %v2951, 7
        %v2953 = vsub.s32 1, %v2952
        %v2954 = vrot.slane %v2945, %v2953
        %v2957 = vmul.f32 %v2936, %v2950
        %v2958 = vmul.f32 %v2937, %v2954
        %v2959 = vadd.f32 %v2929, %v2957
        %v2960 = vadd.f32 %v2930, %v2958
        %s2961 = scalar_lea.vmem %s1470, 64
        %v2962 = vld [vmem:[%s2961] ss:$8 sm:$0x3]
        %v2964 = vlaneseq
        %v2965 = vshrl.u32 %v2964, 7
        %v2966 = vsub.s32 0, %v2965
        %v2967 = vrot.slane %v2962, %v2966
        %v2968 = vlaneseq
        %v2969 = vshrl.u32 %v2968, 7
        %v2970 = vsub.s32 1, %v2969
        %v2971 = vrot.slane %v2962, %v2970
        %v2974 = vmul.f32 %v2942, %v2967
        %v2975 = vmul.f32 %v2943, %v2971
        %v2976 = vadd.f32 %v2959, %v2974
        %v2977 = vadd.f32 %v2960, %v2975
        %2978 = vrot.lane.b32.xlu0 %v1410, 110
        %v2979 = vpop.permute.xlu0 %2978
        %2980 = vrot.lane.b32.xlu0 %v1419, 110
        %v2981 = vpop.permute.xlu0 %2980
        %vm2982 = vcmp.lt.s32.totalorder %v333, 110
        %v2983 = vsel %vm2982, %v2979, %v2981
        %v2984 = vsel %vm2982, %v2981, %v2979
        %2985 = vrot.lane.b32.xlu0 %v1439, 110
        %v2986 = vpop.permute.xlu0 %2985
        %2987 = vrot.lane.b32.xlu0 %v1440, 110
        %v2988 = vpop.permute.xlu0 %2987
        %v2989 = vsel %vm2982, %v2986, %v2988
        %v2990 = vsel %vm2982, %v2988, %v2986
        %s2991 = scalar_lea.vmem %s5, 65
        %v2992 = vld [vmem:[%s2991] ss:$8 sm:$0x3]
        %v2994 = vlaneseq
        %v2995 = vshrl.u32 %v2994, 7
        %v2996 = vsub.s32 0, %v2995
        %v2997 = vrot.slane %v2992, %v2996
        %v2998 = vlaneseq
        %v2999 = vshrl.u32 %v2998, 7
        %v3000 = vsub.s32 1, %v2999
        %v3001 = vrot.slane %v2992, %v3000
        %v3004 = vmul.f32 %v2983, %v2997
        %v3005 = vmul.f32 %v2984, %v3001
        %v3006 = vadd.f32 %v2976, %v3004
        %v3007 = vadd.f32 %v2977, %v3005
        %s3008 = scalar_lea.vmem %s1470, 65
        %v3009 = vld [vmem:[%s3008] ss:$8 sm:$0x3]
        %v3011 = vlaneseq
        %v3012 = vshrl.u32 %v3011, 7
        %v3013 = vsub.s32 0, %v3012
        %v3014 = vrot.slane %v3009, %v3013
        %v3015 = vlaneseq
        %v3016 = vshrl.u32 %v3015, 7
        %v3017 = vsub.s32 1, %v3016
        %v3018 = vrot.slane %v3009, %v3017
        %v3021 = vmul.f32 %v2989, %v3014
        %v3022 = vmul.f32 %v2990, %v3018
        %v3023 = vadd.f32 %v3006, %v3021
        %v3024 = vadd.f32 %v3007, %v3022
        %3025 = vrot.lane.b32.xlu0 %v1410, 109
        %v3026 = vpop.permute.xlu0 %3025
        %3027 = vrot.lane.b32.xlu0 %v1419, 109
        %v3028 = vpop.permute.xlu0 %3027
        %vm3029 = vcmp.lt.s32.totalorder %v333, 109
        %v3030 = vsel %vm3029, %v3026, %v3028
        %v3031 = vsel %vm3029, %v3028, %v3026
        %3032 = vrot.lane.b32.xlu0 %v1439, 109
        %v3033 = vpop.permute.xlu0 %3032
        %3034 = vrot.lane.b32.xlu0 %v1440, 109
        %v3035 = vpop.permute.xlu0 %3034
        %v3036 = vsel %vm3029, %v3033, %v3035
        %v3037 = vsel %vm3029, %v3035, %v3033
        %s3038 = scalar_lea.vmem %s5, 66
        %v3039 = vld [vmem:[%s3038] ss:$8 sm:$0x3]
        %v3041 = vlaneseq
        %v3042 = vshrl.u32 %v3041, 7
        %v3043 = vsub.s32 0, %v3042
        %v3044 = vrot.slane %v3039, %v3043
        %v3045 = vlaneseq
        %v3046 = vshrl.u32 %v3045, 7
        %v3047 = vsub.s32 1, %v3046
        %v3048 = vrot.slane %v3039, %v3047
        %v3051 = vmul.f32 %v3030, %v3044
        %v3052 = vmul.f32 %v3031, %v3048
        %v3053 = vadd.f32 %v3023, %v3051
        %v3054 = vadd.f32 %v3024, %v3052
        %s3055 = scalar_lea.vmem %s1470, 66
        %v3056 = vld [vmem:[%s3055] ss:$8 sm:$0x3]
        %v3058 = vlaneseq
        %v3059 = vshrl.u32 %v3058, 7
        %v3060 = vsub.s32 0, %v3059
        %v3061 = vrot.slane %v3056, %v3060
        %v3062 = vlaneseq
        %v3063 = vshrl.u32 %v3062, 7
        %v3064 = vsub.s32 1, %v3063
        %v3065 = vrot.slane %v3056, %v3064
        %v3068 = vmul.f32 %v3036, %v3061
        %v3069 = vmul.f32 %v3037, %v3065
        %v3070 = vadd.f32 %v3053, %v3068
        %v3071 = vadd.f32 %v3054, %v3069
        %3072 = vrot.lane.b32.xlu0 %v1410, 99
        %v3073 = vpop.permute.xlu0 %3072
        %3074 = vrot.lane.b32.xlu0 %v1419, 99
        %v3075 = vpop.permute.xlu0 %3074
        %vm3076 = vcmp.lt.s32.totalorder %v333, 99
        %v3077 = vsel %vm3076, %v3073, %v3075
        %v3078 = vsel %vm3076, %v3075, %v3073
        %3079 = vrot.lane.b32.xlu0 %v1439, 99
        %v3080 = vpop.permute.xlu0 %3079
        %3081 = vrot.lane.b32.xlu0 %v1440, 99
        %v3082 = vpop.permute.xlu0 %3081
        %v3083 = vsel %vm3076, %v3080, %v3082
        %v3084 = vsel %vm3076, %v3082, %v3080
        %s3085 = scalar_lea.vmem %s5, 67
        %v3086 = vld [vmem:[%s3085] ss:$8 sm:$0x3]
        %v3088 = vlaneseq
        %v3089 = vshrl.u32 %v3088, 7
        %v3090 = vsub.s32 0, %v3089
        %v3091 = vrot.slane %v3086, %v3090
        %v3092 = vlaneseq
        %v3093 = vshrl.u32 %v3092, 7
        %v3094 = vsub.s32 1, %v3093
        %v3095 = vrot.slane %v3086, %v3094
        %v3098 = vmul.f32 %v3077, %v3091
        %v3099 = vmul.f32 %v3078, %v3095
        %v3100 = vadd.f32 %v3070, %v3098
        %v3101 = vadd.f32 %v3071, %v3099
        %s3102 = scalar_lea.vmem %s1470, 67
        %v3103 = vld [vmem:[%s3102] ss:$8 sm:$0x3]
        %v3105 = vlaneseq
        %v3106 = vshrl.u32 %v3105, 7
        %v3107 = vsub.s32 0, %v3106
        %v3108 = vrot.slane %v3103, %v3107
        %v3109 = vlaneseq
        %v3110 = vshrl.u32 %v3109, 7
        %v3111 = vsub.s32 1, %v3110
        %v3112 = vrot.slane %v3103, %v3111
        %v3115 = vmul.f32 %v3083, %v3108
        %v3116 = vmul.f32 %v3084, %v3112
        %v3117 = vadd.f32 %v3100, %v3115
        %v3118 = vadd.f32 %v3101, %v3116
        %3119 = vrot.lane.b32.xlu0 %v1410, 98
        %v3120 = vpop.permute.xlu0 %3119
        %3121 = vrot.lane.b32.xlu0 %v1419, 98
        %v3122 = vpop.permute.xlu0 %3121
        %vm3123 = vcmp.lt.s32.totalorder %v333, 98
        %v3124 = vsel %vm3123, %v3120, %v3122
        %v3125 = vsel %vm3123, %v3122, %v3120
        %3126 = vrot.lane.b32.xlu0 %v1439, 98
        %v3127 = vpop.permute.xlu0 %3126
        %3128 = vrot.lane.b32.xlu0 %v1440, 98
        %v3129 = vpop.permute.xlu0 %3128
        %v3130 = vsel %vm3123, %v3127, %v3129
        %v3131 = vsel %vm3123, %v3129, %v3127
        %s3132 = scalar_lea.vmem %s5, 68
        %v3133 = vld [vmem:[%s3132] ss:$8 sm:$0x3]
        %v3135 = vlaneseq
        %v3136 = vshrl.u32 %v3135, 7
        %v3137 = vsub.s32 0, %v3136
        %v3138 = vrot.slane %v3133, %v3137
        %v3139 = vlaneseq
        %v3140 = vshrl.u32 %v3139, 7
        %v3141 = vsub.s32 1, %v3140
        %v3142 = vrot.slane %v3133, %v3141
        %v3145 = vmul.f32 %v3124, %v3138
        %v3146 = vmul.f32 %v3125, %v3142
        %v3147 = vadd.f32 %v3117, %v3145
        %v3148 = vadd.f32 %v3118, %v3146
        %s3149 = scalar_lea.vmem %s1470, 68
        %v3150 = vld [vmem:[%s3149] ss:$8 sm:$0x3]
        %v3152 = vlaneseq
        %v3153 = vshrl.u32 %v3152, 7
        %v3154 = vsub.s32 0, %v3153
        %v3155 = vrot.slane %v3150, %v3154
        %v3156 = vlaneseq
        %v3157 = vshrl.u32 %v3156, 7
        %v3158 = vsub.s32 1, %v3157
        %v3159 = vrot.slane %v3150, %v3158
        %v3162 = vmul.f32 %v3130, %v3155
        %v3163 = vmul.f32 %v3131, %v3159
        %v3164 = vadd.f32 %v3147, %v3162
        %v3165 = vadd.f32 %v3148, %v3163
        %3166 = vrot.lane.b32.xlu0 %v1410, 97
        %v3167 = vpop.permute.xlu0 %3166
        %3168 = vrot.lane.b32.xlu0 %v1419, 97
        %v3169 = vpop.permute.xlu0 %3168
        %vm3170 = vcmp.lt.s32.totalorder %v333, 97
        %v3171 = vsel %vm3170, %v3167, %v3169
        %v3172 = vsel %vm3170, %v3169, %v3167
        %3173 = vrot.lane.b32.xlu0 %v1439, 97
        %v3174 = vpop.permute.xlu0 %3173
        %3175 = vrot.lane.b32.xlu0 %v1440, 97
        %v3176 = vpop.permute.xlu0 %3175
        %v3177 = vsel %vm3170, %v3174, %v3176
        %v3178 = vsel %vm3170, %v3176, %v3174
        %s3179 = scalar_lea.vmem %s5, 69
        %v3180 = vld [vmem:[%s3179] ss:$8 sm:$0x3]
        %v3182 = vlaneseq
        %v3183 = vshrl.u32 %v3182, 7
        %v3184 = vsub.s32 0, %v3183
        %v3185 = vrot.slane %v3180, %v3184
        %v3186 = vlaneseq
        %v3187 = vshrl.u32 %v3186, 7
        %v3188 = vsub.s32 1, %v3187
        %v3189 = vrot.slane %v3180, %v3188
        %v3192 = vmul.f32 %v3171, %v3185
        %v3193 = vmul.f32 %v3172, %v3189
        %v3194 = vadd.f32 %v3164, %v3192
        %v3195 = vadd.f32 %v3165, %v3193
        %s3196 = scalar_lea.vmem %s1470, 69
        %v3197 = vld [vmem:[%s3196] ss:$8 sm:$0x3]
        %v3199 = vlaneseq
        %v3200 = vshrl.u32 %v3199, 7
        %v3201 = vsub.s32 0, %v3200
        %v3202 = vrot.slane %v3197, %v3201
        %v3203 = vlaneseq
        %v3204 = vshrl.u32 %v3203, 7
        %v3205 = vsub.s32 1, %v3204
        %v3206 = vrot.slane %v3197, %v3205
        %v3209 = vmul.f32 %v3177, %v3202
        %v3210 = vmul.f32 %v3178, %v3206
        %v3211 = vadd.f32 %v3194, %v3209
        %v3212 = vadd.f32 %v3195, %v3210
        %3213 = vrot.lane.b32.xlu0 %v1410, 96
        %v3214 = vpop.permute.xlu0 %3213
        %3215 = vrot.lane.b32.xlu0 %v1419, 96
        %v3216 = vpop.permute.xlu0 %3215
        %vm3217 = vcmp.lt.s32.totalorder %v333, 96
        %v3218 = vsel %vm3217, %v3214, %v3216
        %v3219 = vsel %vm3217, %v3216, %v3214
        %3220 = vrot.lane.b32.xlu0 %v1439, 96
        %v3221 = vpop.permute.xlu0 %3220
        %3222 = vrot.lane.b32.xlu0 %v1440, 96
        %v3223 = vpop.permute.xlu0 %3222
        %v3224 = vsel %vm3217, %v3221, %v3223
        %v3225 = vsel %vm3217, %v3223, %v3221
        %s3226 = scalar_lea.vmem %s5, 70
        %v3227 = vld [vmem:[%s3226] ss:$8 sm:$0x3]
        %v3229 = vlaneseq
        %v3230 = vshrl.u32 %v3229, 7
        %v3231 = vsub.s32 0, %v3230
        %v3232 = vrot.slane %v3227, %v3231
        %v3233 = vlaneseq
        %v3234 = vshrl.u32 %v3233, 7
        %v3235 = vsub.s32 1, %v3234
        %v3236 = vrot.slane %v3227, %v3235
        %v3239 = vmul.f32 %v3218, %v3232
        %v3240 = vmul.f32 %v3219, %v3236
        %v3241 = vadd.f32 %v3211, %v3239
        %v3242 = vadd.f32 %v3212, %v3240
        %s3243 = scalar_lea.vmem %s1470, 70
        %v3244 = vld [vmem:[%s3243] ss:$8 sm:$0x3]
        %v3246 = vlaneseq
        %v3247 = vshrl.u32 %v3246, 7
        %v3248 = vsub.s32 0, %v3247
        %v3249 = vrot.slane %v3244, %v3248
        %v3250 = vlaneseq
        %v3251 = vshrl.u32 %v3250, 7
        %v3252 = vsub.s32 1, %v3251
        %v3253 = vrot.slane %v3244, %v3252
        %v3256 = vmul.f32 %v3224, %v3249
        %v3257 = vmul.f32 %v3225, %v3253
        %v3258 = vadd.f32 %v3241, %v3256
        %v3259 = vadd.f32 %v3242, %v3257
        %3260 = vrot.lane.b32.xlu0 %v1410, 95
        %v3261 = vpop.permute.xlu0 %3260
        %3262 = vrot.lane.b32.xlu0 %v1419, 95
        %v3263 = vpop.permute.xlu0 %3262
        %vm3264 = vcmp.lt.s32.totalorder %v333, 95
        %v3265 = vsel %vm3264, %v3261, %v3263
        %v3266 = vsel %vm3264, %v3263, %v3261
        %3267 = vrot.lane.b32.xlu0 %v1439, 95
        %v3268 = vpop.permute.xlu0 %3267
        %3269 = vrot.lane.b32.xlu0 %v1440, 95
        %v3270 = vpop.permute.xlu0 %3269
        %v3271 = vsel %vm3264, %v3268, %v3270
        %v3272 = vsel %vm3264, %v3270, %v3268
        %s3273 = scalar_lea.vmem %s5, 71
        %v3274 = vld [vmem:[%s3273] ss:$8 sm:$0x3]
        %v3276 = vlaneseq
        %v3277 = vshrl.u32 %v3276, 7
        %v3278 = vsub.s32 0, %v3277
        %v3279 = vrot.slane %v3274, %v3278
        %v3280 = vlaneseq
        %v3281 = vshrl.u32 %v3280, 7
        %v3282 = vsub.s32 1, %v3281
        %v3283 = vrot.slane %v3274, %v3282
        %v3286 = vmul.f32 %v3265, %v3279
        %v3287 = vmul.f32 %v3266, %v3283
        %v3288 = vadd.f32 %v3258, %v3286
        %v3289 = vadd.f32 %v3259, %v3287
        %s3290 = scalar_lea.vmem %s1470, 71
        %v3291 = vld [vmem:[%s3290] ss:$8 sm:$0x3]
        %v3293 = vlaneseq
        %v3294 = vshrl.u32 %v3293, 7
        %v3295 = vsub.s32 0, %v3294
        %v3296 = vrot.slane %v3291, %v3295
        %v3297 = vlaneseq
        %v3298 = vshrl.u32 %v3297, 7
        %v3299 = vsub.s32 1, %v3298
        %v3300 = vrot.slane %v3291, %v3299
        %v3303 = vmul.f32 %v3271, %v3296
        %v3304 = vmul.f32 %v3272, %v3300
        %v3305 = vadd.f32 %v3288, %v3303
        %v3306 = vadd.f32 %v3289, %v3304
        %3307 = vrot.lane.b32.xlu0 %v1410, 94
        %v3308 = vpop.permute.xlu0 %3307
        %3309 = vrot.lane.b32.xlu0 %v1419, 94
        %v3310 = vpop.permute.xlu0 %3309
        %vm3311 = vcmp.lt.s32.totalorder %v333, 94
        %v3312 = vsel %vm3311, %v3308, %v3310
        %v3313 = vsel %vm3311, %v3310, %v3308
        %3314 = vrot.lane.b32.xlu0 %v1439, 94
        %v3315 = vpop.permute.xlu0 %3314
        %3316 = vrot.lane.b32.xlu0 %v1440, 94
        %v3317 = vpop.permute.xlu0 %3316
        %v3318 = vsel %vm3311, %v3315, %v3317
        %v3319 = vsel %vm3311, %v3317, %v3315
        %s3320 = scalar_lea.vmem %s5, 80
        %v3321 = vld [vmem:[%s3320] ss:$8 sm:$0x3]
        %v3323 = vlaneseq
        %v3324 = vshrl.u32 %v3323, 7
        %v3325 = vsub.s32 0, %v3324
        %v3326 = vrot.slane %v3321, %v3325
        %v3327 = vlaneseq
        %v3328 = vshrl.u32 %v3327, 7
        %v3329 = vsub.s32 1, %v3328
        %v3330 = vrot.slane %v3321, %v3329
        %v3333 = vmul.f32 %v3312, %v3326
        %v3334 = vmul.f32 %v3313, %v3330
        %v3335 = vadd.f32 %v3305, %v3333
        %v3336 = vadd.f32 %v3306, %v3334
        %s3337 = scalar_lea.vmem %s1470, 80
        %v3338 = vld [vmem:[%s3337] ss:$8 sm:$0x3]
        %v3340 = vlaneseq
        %v3341 = vshrl.u32 %v3340, 7
        %v3342 = vsub.s32 0, %v3341
        %v3343 = vrot.slane %v3338, %v3342
        %v3344 = vlaneseq
        %v3345 = vshrl.u32 %v3344, 7
        %v3346 = vsub.s32 1, %v3345
        %v3347 = vrot.slane %v3338, %v3346
        %v3350 = vmul.f32 %v3318, %v3343
        %v3351 = vmul.f32 %v3319, %v3347
        %v3352 = vadd.f32 %v3335, %v3350
        %v3353 = vadd.f32 %v3336, %v3351
        %3354 = vrot.lane.b32.xlu0 %v1410, 93
        %v3355 = vpop.permute.xlu0 %3354
        %3356 = vrot.lane.b32.xlu0 %v1419, 93
        %v3357 = vpop.permute.xlu0 %3356
        %vm3358 = vcmp.lt.s32.totalorder %v333, 93
        %v3359 = vsel %vm3358, %v3355, %v3357
        %v3360 = vsel %vm3358, %v3357, %v3355
        %3361 = vrot.lane.b32.xlu0 %v1439, 93
        %v3362 = vpop.permute.xlu0 %3361
        %3363 = vrot.lane.b32.xlu0 %v1440, 93
        %v3364 = vpop.permute.xlu0 %3363
        %v3365 = vsel %vm3358, %v3362, %v3364
        %v3366 = vsel %vm3358, %v3364, %v3362
        %s3367 = scalar_lea.vmem %s5, 81
        %v3368 = vld [vmem:[%s3367] ss:$8 sm:$0x3]
        %v3370 = vlaneseq
        %v3371 = vshrl.u32 %v3370, 7
        %v3372 = vsub.s32 0, %v3371
        %v3373 = vrot.slane %v3368, %v3372
        %v3374 = vlaneseq
        %v3375 = vshrl.u32 %v3374, 7
        %v3376 = vsub.s32 1, %v3375
        %v3377 = vrot.slane %v3368, %v3376
        %v3380 = vmul.f32 %v3359, %v3373
        %v3381 = vmul.f32 %v3360, %v3377
        %v3382 = vadd.f32 %v3352, %v3380
        %v3383 = vadd.f32 %v3353, %v3381
        %s3384 = scalar_lea.vmem %s1470, 81
        %v3385 = vld [vmem:[%s3384] ss:$8 sm:$0x3]
        %v3387 = vlaneseq
        %v3388 = vshrl.u32 %v3387, 7
        %v3389 = vsub.s32 0, %v3388
        %v3390 = vrot.slane %v3385, %v3389
        %v3391 = vlaneseq
        %v3392 = vshrl.u32 %v3391, 7
        %v3393 = vsub.s32 1, %v3392
        %v3394 = vrot.slane %v3385, %v3393
        %v3397 = vmul.f32 %v3365, %v3390
        %v3398 = vmul.f32 %v3366, %v3394
        %v3399 = vadd.f32 %v3382, %v3397
        %v3400 = vadd.f32 %v3383, %v3398
        %3401 = vrot.lane.b32.xlu0 %v1410, 83
        %v3402 = vpop.permute.xlu0 %3401
        %3403 = vrot.lane.b32.xlu0 %v1419, 83
        %v3404 = vpop.permute.xlu0 %3403
        %vm3405 = vcmp.lt.s32.totalorder %v333, 83
        %v3406 = vsel %vm3405, %v3402, %v3404
        %v3407 = vsel %vm3405, %v3404, %v3402
        %3408 = vrot.lane.b32.xlu0 %v1439, 83
        %v3409 = vpop.permute.xlu0 %3408
        %3410 = vrot.lane.b32.xlu0 %v1440, 83
        %v3411 = vpop.permute.xlu0 %3410
        %v3412 = vsel %vm3405, %v3409, %v3411
        %v3413 = vsel %vm3405, %v3411, %v3409
        %s3414 = scalar_lea.vmem %s5, 82
        %v3415 = vld [vmem:[%s3414] ss:$8 sm:$0x3]
        %v3417 = vlaneseq
        %v3418 = vshrl.u32 %v3417, 7
        %v3419 = vsub.s32 0, %v3418
        %v3420 = vrot.slane %v3415, %v3419
        %v3421 = vlaneseq
        %v3422 = vshrl.u32 %v3421, 7
        %v3423 = vsub.s32 1, %v3422
        %v3424 = vrot.slane %v3415, %v3423
        %v3427 = vmul.f32 %v3406, %v3420
        %v3428 = vmul.f32 %v3407, %v3424
        %v3429 = vadd.f32 %v3399, %v3427
        %v3430 = vadd.f32 %v3400, %v3428
        %s3431 = scalar_lea.vmem %s1470, 82
        %v3432 = vld [vmem:[%s3431] ss:$8 sm:$0x3]
        %v3434 = vlaneseq
        %v3435 = vshrl.u32 %v3434, 7
        %v3436 = vsub.s32 0, %v3435
        %v3437 = vrot.slane %v3432, %v3436
        %v3438 = vlaneseq
        %v3439 = vshrl.u32 %v3438, 7
        %v3440 = vsub.s32 1, %v3439
        %v3441 = vrot.slane %v3432, %v3440
        %v3444 = vmul.f32 %v3412, %v3437
        %v3445 = vmul.f32 %v3413, %v3441
        %v3446 = vadd.f32 %v3429, %v3444
        %v3447 = vadd.f32 %v3430, %v3445
        %3448 = vrot.lane.b32.xlu0 %v1410, 82
        %v3449 = vpop.permute.xlu0 %3448
        %3450 = vrot.lane.b32.xlu0 %v1419, 82
        %v3451 = vpop.permute.xlu0 %3450
        %vm3452 = vcmp.lt.s32.totalorder %v333, 82
        %v3453 = vsel %vm3452, %v3449, %v3451
        %v3454 = vsel %vm3452, %v3451, %v3449
        %3455 = vrot.lane.b32.xlu0 %v1439, 82
        %v3456 = vpop.permute.xlu0 %3455
        %3457 = vrot.lane.b32.xlu0 %v1440, 82
        %v3458 = vpop.permute.xlu0 %3457
        %v3459 = vsel %vm3452, %v3456, %v3458
        %v3460 = vsel %vm3452, %v3458, %v3456
        %s3461 = scalar_lea.vmem %s5, 83
        %v3462 = vld [vmem:[%s3461] ss:$8 sm:$0x3]
        %v3464 = vlaneseq
        %v3465 = vshrl.u32 %v3464, 7
        %v3466 = vsub.s32 0, %v3465
        %v3467 = vrot.slane %v3462, %v3466
        %v3468 = vlaneseq
        %v3469 = vshrl.u32 %v3468, 7
        %v3470 = vsub.s32 1, %v3469
        %v3471 = vrot.slane %v3462, %v3470
        %v3474 = vmul.f32 %v3453, %v3467
        %v3475 = vmul.f32 %v3454, %v3471
        %v3476 = vadd.f32 %v3446, %v3474
        %v3477 = vadd.f32 %v3447, %v3475
        %s3478 = scalar_lea.vmem %s1470, 83
        %v3479 = vld [vmem:[%s3478] ss:$8 sm:$0x3]
        %v3481 = vlaneseq
        %v3482 = vshrl.u32 %v3481, 7
        %v3483 = vsub.s32 0, %v3482
        %v3484 = vrot.slane %v3479, %v3483
        %v3485 = vlaneseq
        %v3486 = vshrl.u32 %v3485, 7
        %v3487 = vsub.s32 1, %v3486
        %v3488 = vrot.slane %v3479, %v3487
        %v3491 = vmul.f32 %v3459, %v3484
        %v3492 = vmul.f32 %v3460, %v3488
        %v3493 = vadd.f32 %v3476, %v3491
        %v3494 = vadd.f32 %v3477, %v3492
        %3495 = vrot.lane.b32.xlu0 %v1410, 81
        %v3496 = vpop.permute.xlu0 %3495
        %3497 = vrot.lane.b32.xlu0 %v1419, 81
        %v3498 = vpop.permute.xlu0 %3497
        %vm3499 = vcmp.lt.s32.totalorder %v333, 81
        %v3500 = vsel %vm3499, %v3496, %v3498
        %v3501 = vsel %vm3499, %v3498, %v3496
        %3502 = vrot.lane.b32.xlu0 %v1439, 81
        %v3503 = vpop.permute.xlu0 %3502
        %3504 = vrot.lane.b32.xlu0 %v1440, 81
        %v3505 = vpop.permute.xlu0 %3504
        %v3506 = vsel %vm3499, %v3503, %v3505
        %v3507 = vsel %vm3499, %v3505, %v3503
        %s3508 = scalar_lea.vmem %s5, 84
        %v3509 = vld [vmem:[%s3508] ss:$8 sm:$0x3]
        %v3511 = vlaneseq
        %v3512 = vshrl.u32 %v3511, 7
        %v3513 = vsub.s32 0, %v3512
        %v3514 = vrot.slane %v3509, %v3513
        %v3515 = vlaneseq
        %v3516 = vshrl.u32 %v3515, 7
        %v3517 = vsub.s32 1, %v3516
        %v3518 = vrot.slane %v3509, %v3517
        %v3521 = vmul.f32 %v3500, %v3514
        %v3522 = vmul.f32 %v3501, %v3518
        %v3523 = vadd.f32 %v3493, %v3521
        %v3524 = vadd.f32 %v3494, %v3522
        %s3525 = scalar_lea.vmem %s1470, 84
        %v3526 = vld [vmem:[%s3525] ss:$8 sm:$0x3]
        %v3528 = vlaneseq
        %v3529 = vshrl.u32 %v3528, 7
        %v3530 = vsub.s32 0, %v3529
        %v3531 = vrot.slane %v3526, %v3530
        %v3532 = vlaneseq
        %v3533 = vshrl.u32 %v3532, 7
        %v3534 = vsub.s32 1, %v3533
        %v3535 = vrot.slane %v3526, %v3534
        %v3538 = vmul.f32 %v3506, %v3531
        %v3539 = vmul.f32 %v3507, %v3535
        %v3540 = vadd.f32 %v3523, %v3538
        %v3541 = vadd.f32 %v3524, %v3539
        %3542 = vrot.lane.b32.xlu0 %v1410, 80
        %v3543 = vpop.permute.xlu0 %3542
        %3544 = vrot.lane.b32.xlu0 %v1419, 80
        %v3545 = vpop.permute.xlu0 %3544
        %vm3546 = vcmp.lt.s32.totalorder %v333, 80
        %v3547 = vsel %vm3546, %v3543, %v3545
        %v3548 = vsel %vm3546, %v3545, %v3543
        %3549 = vrot.lane.b32.xlu0 %v1439, 80
        %v3550 = vpop.permute.xlu0 %3549
        %3551 = vrot.lane.b32.xlu0 %v1440, 80
        %v3552 = vpop.permute.xlu0 %3551
        %v3553 = vsel %vm3546, %v3550, %v3552
        %v3554 = vsel %vm3546, %v3552, %v3550
        %s3555 = scalar_lea.vmem %s5, 85
        %v3556 = vld [vmem:[%s3555] ss:$8 sm:$0x3]
        %v3558 = vlaneseq
        %v3559 = vshrl.u32 %v3558, 7
        %v3560 = vsub.s32 0, %v3559
        %v3561 = vrot.slane %v3556, %v3560
        %v3562 = vlaneseq
        %v3563 = vshrl.u32 %v3562, 7
        %v3564 = vsub.s32 1, %v3563
        %v3565 = vrot.slane %v3556, %v3564
        %v3568 = vmul.f32 %v3547, %v3561
        %v3569 = vmul.f32 %v3548, %v3565
        %v3570 = vadd.f32 %v3540, %v3568
        %v3571 = vadd.f32 %v3541, %v3569
        %s3572 = scalar_lea.vmem %s1470, 85
        %v3573 = vld [vmem:[%s3572] ss:$8 sm:$0x3]
        %v3575 = vlaneseq
        %v3576 = vshrl.u32 %v3575, 7
        %v3577 = vsub.s32 0, %v3576
        %v3578 = vrot.slane %v3573, %v3577
        %v3579 = vlaneseq
        %v3580 = vshrl.u32 %v3579, 7
        %v3581 = vsub.s32 1, %v3580
        %v3582 = vrot.slane %v3573, %v3581
        %v3585 = vmul.f32 %v3553, %v3578
        %v3586 = vmul.f32 %v3554, %v3582
        %v3587 = vadd.f32 %v3570, %v3585
        %v3588 = vadd.f32 %v3571, %v3586
        %3589 = vrot.lane.b32.xlu0 %v1410, 79
        %v3590 = vpop.permute.xlu0 %3589
        %3591 = vrot.lane.b32.xlu0 %v1419, 79
        %v3592 = vpop.permute.xlu0 %3591
        %vm3593 = vcmp.lt.s32.totalorder %v333, 79
        %v3594 = vsel %vm3593, %v3590, %v3592
        %v3595 = vsel %vm3593, %v3592, %v3590
        %3596 = vrot.lane.b32.xlu0 %v1439, 79
        %v3597 = vpop.permute.xlu0 %3596
        %3598 = vrot.lane.b32.xlu0 %v1440, 79
        %v3599 = vpop.permute.xlu0 %3598
        %v3600 = vsel %vm3593, %v3597, %v3599
        %v3601 = vsel %vm3593, %v3599, %v3597
        %s3602 = scalar_lea.vmem %s5, 86
        %v3603 = vld [vmem:[%s3602] ss:$8 sm:$0x3]
        %v3605 = vlaneseq
        %v3606 = vshrl.u32 %v3605, 7
        %v3607 = vsub.s32 0, %v3606
        %v3608 = vrot.slane %v3603, %v3607
        %v3609 = vlaneseq
        %v3610 = vshrl.u32 %v3609, 7
        %v3611 = vsub.s32 1, %v3610
        %v3612 = vrot.slane %v3603, %v3611
        %v3615 = vmul.f32 %v3594, %v3608
        %v3616 = vmul.f32 %v3595, %v3612
        %v3617 = vadd.f32 %v3587, %v3615
        %v3618 = vadd.f32 %v3588, %v3616
        %s3619 = scalar_lea.vmem %s1470, 86
        %v3620 = vld [vmem:[%s3619] ss:$8 sm:$0x3]
        %v3622 = vlaneseq
        %v3623 = vshrl.u32 %v3622, 7
        %v3624 = vsub.s32 0, %v3623
        %v3625 = vrot.slane %v3620, %v3624
        %v3626 = vlaneseq
        %v3627 = vshrl.u32 %v3626, 7
        %v3628 = vsub.s32 1, %v3627
        %v3629 = vrot.slane %v3620, %v3628
        %v3632 = vmul.f32 %v3600, %v3625
        %v3633 = vmul.f32 %v3601, %v3629
        %v3634 = vadd.f32 %v3617, %v3632
        %v3635 = vadd.f32 %v3618, %v3633
        %3636 = vrot.lane.b32.xlu0 %v1410, 78
        %v3637 = vpop.permute.xlu0 %3636
        %3638 = vrot.lane.b32.xlu0 %v1419, 78
        %v3639 = vpop.permute.xlu0 %3638
        %vm3640 = vcmp.lt.s32.totalorder %v333, 78
        %v3641 = vsel %vm3640, %v3637, %v3639
        %v3642 = vsel %vm3640, %v3639, %v3637
        %3643 = vrot.lane.b32.xlu0 %v1439, 78
        %v3644 = vpop.permute.xlu0 %3643
        %3645 = vrot.lane.b32.xlu0 %v1440, 78
        %v3646 = vpop.permute.xlu0 %3645
        %v3647 = vsel %vm3640, %v3644, %v3646
        %v3648 = vsel %vm3640, %v3646, %v3644
        %s3649 = scalar_lea.vmem %s5, 87
        %v3650 = vld [vmem:[%s3649] ss:$8 sm:$0x3]
        %v3652 = vlaneseq
        %v3653 = vshrl.u32 %v3652, 7
        %v3654 = vsub.s32 0, %v3653
        %v3655 = vrot.slane %v3650, %v3654
        %v3656 = vlaneseq
        %v3657 = vshrl.u32 %v3656, 7
        %v3658 = vsub.s32 1, %v3657
        %v3659 = vrot.slane %v3650, %v3658
        %v3662 = vmul.f32 %v3641, %v3655
        %v3663 = vmul.f32 %v3642, %v3659
        %v3664 = vadd.f32 %v3634, %v3662
        %v3665 = vadd.f32 %v3635, %v3663
        %s3666 = scalar_lea.vmem %s1470, 87
        %v3667 = vld [vmem:[%s3666] ss:$8 sm:$0x3]
        %v3669 = vlaneseq
        %v3670 = vshrl.u32 %v3669, 7
        %v3671 = vsub.s32 0, %v3670
        %v3672 = vrot.slane %v3667, %v3671
        %v3673 = vlaneseq
        %v3674 = vshrl.u32 %v3673, 7
        %v3675 = vsub.s32 1, %v3674
        %v3676 = vrot.slane %v3667, %v3675
        %v3679 = vmul.f32 %v3647, %v3672
        %v3680 = vmul.f32 %v3648, %v3676
        %v3681 = vadd.f32 %v3664, %v3679
        %v3682 = vadd.f32 %v3665, %v3680
        %3683 = vrot.lane.b32.xlu0 %v1410, 77
        %v3684 = vpop.permute.xlu0 %3683
        %3685 = vrot.lane.b32.xlu0 %v1419, 77
        %v3686 = vpop.permute.xlu0 %3685
        %vm3687 = vcmp.lt.s32.totalorder %v333, 77
        %v3688 = vsel %vm3687, %v3684, %v3686
        %v3689 = vsel %vm3687, %v3686, %v3684
        %3690 = vrot.lane.b32.xlu0 %v1439, 77
        %v3691 = vpop.permute.xlu0 %3690
        %3692 = vrot.lane.b32.xlu0 %v1440, 77
        %v3693 = vpop.permute.xlu0 %3692
        %v3694 = vsel %vm3687, %v3691, %v3693
        %v3695 = vsel %vm3687, %v3693, %v3691
        %s3696 = scalar_lea.vmem %s5, 96
        %v3697 = vld [vmem:[%s3696] ss:$8 sm:$0x3]
        %v3699 = vlaneseq
        %v3700 = vshrl.u32 %v3699, 7
        %v3701 = vsub.s32 0, %v3700
        %v3702 = vrot.slane %v3697, %v3701
        %v3703 = vlaneseq
        %v3704 = vshrl.u32 %v3703, 7
        %v3705 = vsub.s32 1, %v3704
        %v3706 = vrot.slane %v3697, %v3705
        %v3709 = vmul.f32 %v3688, %v3702
        %v3710 = vmul.f32 %v3689, %v3706
        %v3711 = vadd.f32 %v3681, %v3709
        %v3712 = vadd.f32 %v3682, %v3710
        %s3713 = scalar_lea.vmem %s1470, 96
        %v3714 = vld [vmem:[%s3713] ss:$8 sm:$0x3]
        %v3716 = vlaneseq
        %v3717 = vshrl.u32 %v3716, 7
        %v3718 = vsub.s32 0, %v3717
        %v3719 = vrot.slane %v3714, %v3718
        %v3720 = vlaneseq
        %v3721 = vshrl.u32 %v3720, 7
        %v3722 = vsub.s32 1, %v3721
        %v3723 = vrot.slane %v3714, %v3722
        %v3726 = vmul.f32 %v3694, %v3719
        %v3727 = vmul.f32 %v3695, %v3723
        %v3728 = vadd.f32 %v3711, %v3726
        %v3729 = vadd.f32 %v3712, %v3727
        %s3730 = sld [smem:[#allocation3]]
        %v3731 = vstv %s3730
        %v3732 = vmul.f32 %v3728, %v3731
        %v3733 = vmul.f32 %v3729, %v3731
        %s3734 = sld [smem:[#allocation3 + $0x1]]
        %v3735 = vstv %s3734
        %v3736 = vadd.f32 %v3732, %v3735
        %v3737 = vadd.f32 %v3733, %v3735
        %v3738 = vsub.f32 0.0, %v3736
        %v3739 = vsub.f32 0.0, %v3737
        %v3740 = vmul.f32 %v3738, 1.442695
        %v3741 = vpow.pop %v3740
        %v3742 = vmul.f32 %v3739, 1.442695
        %v3743 = vpow.pop %v3742
        %v3744 = vadd.f32 %v3741, 1.0
        %v3745 = vadd.f32 %v3743, 1.0
        %v3746 = vrcp.pop %v3744
        %v3747 = vmul.f32 1.0, %v3746
        %v3748 = vrcp.pop %v3745
        %v3749 = vmul.f32 1.0, %v3748
        %v3750 = vlaneseq
        %v3751 = vshrl.u32 %v3750, 7
        %v3752 = vsub.s32 0, %v3751
        %v3753 = vrot.slane %v3747, %v3752
        %v3754 = vlaneseq
        %v3755 = vshrl.u32 %v3754, 7
        %v3756 = vsub.s32 0, %v3755
        %v3757 = vrot.slane %v3749, %v3756
        %v3758 = vmul.f32 %v1394, %v3753
        %v3759 = vmul.f32 %v1395, %v3757
        %v3760 = vmul.f32 %v1396, %v3753
        %v3761 = vmul.f32 %v1397, %v3757
        %v3762 = vmul.f32 %v1398, %v3753
        %v3763 = vmul.f32 %v1399, %v3757
        %v3764 = vmul.f32 %v1400, %v3753
        %v3765 = vmul.f32 %v1401, %v3757
        %3766 = vst [vmem:[%s285] sm:$0xff] %v3758
        %3767 = vst [vmem:[%s285 + $0x8] sm:$0xff] %v3759
        %3768 = vst [vmem:[%s285 + $0x10] sm:$0xff] %v3760
        %3769 = vst [vmem:[%s285 + $0x18] sm:$0xff] %v3761
        %3770 = vst [vmem:[%s285 + $0x20] sm:$0xff] %v3762
        %3771 = vst [vmem:[%s285 + $0x28] sm:$0xff] %v3763
        %3772 = vst [vmem:[%s285 + $0x30] sm:$0xff] %v3764
        %3773 = vst [vmem:[%s285 + $0x38] sm:$0xff] %v3765
        %s3774 = sand.u32 %s182, 1
        %s3775 = scalar_lea.sflag [#allocation4], %s3774
        %s3776 = sand.u32 %s182, 1
        %s3777 = smul.addr %s3776, 64
        %s3778 = scalar_lea.vmem [#allocation6], %s3777
        // Predicated region
        $region53: #{tpu_custom_call.1} parent=47 // pred_check
          %p3779 = pneg %p192
        $region54: #{tpu_custom_call.1} parent=47 // pred_check_branch
          %3781 = sbr.rel (%p3779) target = $region56
        $region55: #{tpu_custom_call.1} parent=47 // pred_region
          %s3783 = ssub.s32 1024, 1024
          %3784 = vsyncadd %s3775, %s3783
          %s3785 = smul.addr %s22, 8
          %s3786 = smul.addr %s3785, 128
          %s3787 = scalar_lea.hbm %s7, %s3786
          %s3788 = sshll.u32 %s3778, 4
          %s3789 = int_to_ptr.vmem [resolvable:$true] %s3788
          %3794 = dma.vmem_to_hbm [thread:$0]  %s3789, 1024, %s3787, %s3775, 256, 256, 16
        $region56: #{tpu_custom_call.1} parent=47 // pred_fallthru
          _
      $region48: #{tpu_custom_call.1} parent=5 // pred_fallthru
        _
      %p3795 = scmp.le.s32.totalorder 2, %s17
      // Predicated region
      $region57: #{tpu_custom_call.1} parent=5 // pred_check
        %p3796 = pneg %p3795
      $region58: #{tpu_custom_call.1} parent=5 // pred_check_branch
        %3798 = sbr.rel (%p3796) target = $region60
      $region59: #{tpu_custom_call.1} parent=5 // pred_region
        %s3799 = ssub.s32 %s17, 2
        // Predicated region
        $region61: #{tpu_custom_call.1} parent=59 // pred_check
          %p3800 = pneg %p198
        $region62: #{tpu_custom_call.1} parent=59 // pred_check_branch
          %3802 = sbr.rel (%p3800) target = $region64
        $region63: #{tpu_custom_call.1} parent=59 // pred_region
          %s3803 = sand.u32 %s183, 1
          %s3804 = scalar_lea.sflag [#allocation4], %s3803
          %s3805 = sand.u32 %s183, 1
          %s3806 = smul.addr %s3805, 64
          %s3807 = scalar_lea.vmem [#allocation6], %s3806
          %3808 = dma.done %s3804, 1024
        $region64: #{tpu_custom_call.1} parent=59 // pred_fallthru
          _
      $region60: #{tpu_custom_call.1} parent=5 // pred_fallthru
        _
    $region6: #{tpu_custom_call.1} parent=1 // loop_footer
      %s21 = sadd.s32 1, %s17
    $region7: #{tpu_custom_call.1} parent=1 // loop_footer_branch
      %16 = sbr.rel target = $region3
    $region8: #{tpu_custom_call.1} parent=1 // loop_exit
      _
    %3809 = vsyncpa [#allocation4], 1
    %s3810 = scalar_lea.sflag [#allocation4], 1
    %3811 = vsyncpa %s3810, 1
    %3812 = vsyncpa [#allocation5], 1
    %s3813 = scalar_lea.sflag [#allocation5], 1
    %3814 = vsyncpa %s3813, 1

</llo_original>
